<compile_context>
chip_gen: v6e
topology: v6e:2x2x1
jax: 0.10.0
libtpu: 0.0.40
codegen_flags: <defaults>
</compile_context>

<pallas_src>
import functools

import numpy as np
import jax
import jax.numpy as jnp
from jax.experimental import pallas as pl
from jax.experimental.pallas import tpu as pltpu

_NEG = float(np.finfo(np.float32).min)


def _phase_shift(parity, d):
    """Original-grid index 2u + parity + d  ->  (source parity, pooled-grid shift)."""
    tot = parity + d
    src = tot % 2
    return src, (tot - src) // 2


def _shift_flat(arr, off):
    """out[:, p] = arr[:, p + off] along the flat lane axis, zero fill at the ends."""
    if off == 0:
        return arr
    rows = arr.shape[0]
    pad = jnp.zeros((rows, abs(off)), arr.dtype)
    if off > 0:
        return jnp.concatenate([arr[:, off:], pad], axis=1)
    return jnp.concatenate([pad, arr[:, :off]], axis=1)


def _make_kernel(cin, cout, hp, wp, nb):
    mp = nb * hp * wp

    def kernel(xph_ref, wc_ref, wres_ref, b_ref, m_ref, o_ref):
        xph = xph_ref[...]                       # (4, cin, mp) f32 input parity planes
        b_all = b_ref[...]                       # (cout, 5)    f32 biases
        m_all = m_ref[...]                       # (9, mp)      f32 boundary masks
        # "(i+s, j+t) in range" masks on the pooled grid, (s, t) in {-1,0,1}^2.
        masks = [m_all[k:k + 1, :] > 0.0 for k in range(9)]

        def shifted(arr, s, t):
            """arr at pooled position (i+s, j+t); zero where the source is outside."""
            if s == 0 and t == 0:
                return arr
            v = _shift_flat(arr, s * wp + t)
            return jnp.where(masks[(s + 1) * 3 + (t + 1)], v, jnp.zeros_like(v))

        # ---- first conv (stride 1, pad 1), one output parity phase at a time ------
        def conv_first(pa, pb):
            acc = jnp.zeros((cout, mp), jnp.float32)
            for dy in (-1, 0, 1):
                a_src, s = _phase_shift(pa, dy)
                for dx in (-1, 0, 1):
                    b_src, t = _phase_shift(pb, dx)
                    tap = (dy + 1) * 3 + (dx + 1)
                    xt = shifted(xph[2 * a_src + b_src], s, t).astype(jnp.bfloat16)
                    wt = wc_ref[tap * cout:(tap + 1) * cout, :]       # (cout, cin) bf16
                    acc = acc + jnp.dot(wt, xt, preferred_element_type=jnp.float32)
            return acc + b_all[:, 0:1]

        y00 = conv_first(0, 0)
        y01 = conv_first(0, 1)
        y10 = conv_first(1, 0)
        y11 = conv_first(1, 1)

        # ---- MaxPool2d(kernel=3, stride=2, padding=1) -----------------------------
        # Pooled output (i, j) covers original rows {2i-1, 2i, 2i+1} x cols
        # {2j-1, 2j, 2j+1}: 4 unshifted parity-plane terms + 3 shifted ones.
        pool = jnp.maximum(jnp.maximum(y00, y01), jnp.maximum(y10, y11))
        c_left = jnp.where(masks[3], _shift_flat(jnp.maximum(y01, y11), -1), _NEG)
        c_up = jnp.where(masks[1], _shift_flat(jnp.maximum(y10, y11), -wp), _NEG)
        c_ul = jnp.where(masks[0], _shift_flat(y11, -(wp + 1)), _NEG)
        y = jnp.maximum(jnp.maximum(pool, c_left), jnp.maximum(c_up, c_ul))

        # ---- two Impala residual blocks:  y = y + conv_1(relu(conv_0(relu(y)))) ---
        def conv_res(xin, k):
            xr = jnp.maximum(xin, 0.0)                     # relu before the conv
            acc = jnp.zeros((cout, mp), jnp.float32)
            base = k * 9 * cout
            for dy in (-1, 0, 1):
                for dx in (-1, 0, 1):
                    tap = (dy + 1) * 3 + (dx + 1)
                    xt = shifted(xr, dy, dx).astype(jnp.bfloat16)
                    wt = wres_ref[base + tap * cout: base + (tap + 1) * cout, :]
                    acc = acc + jnp.dot(wt, xt, preferred_element_type=jnp.float32)
            return acc + b_all[:, k + 1:k + 2]

        y = y + conv_res(conv_res(y, 0), 1)
        y = y + conv_res(conv_res(y, 2), 3)
        o_ref[...] = y                                     # (cout, mp) lane-dense store

    return kernel


@functools.partial(jax.jit, static_argnames=("batch_per_step",))
def impala_cnn_block(x_nchw, params, *, batch_per_step=None):
    """ImpalaCNNBlock forward on an NCHW input (single fused Pallas kernel)."""
    N, Cin, H, W = x_nchw.shape
    assert H % 2 == 0 and W % 2 == 0, "even spatial dims expected"
    Hp, Wp = H // 2, W // 2

    wc, bc = params["conv"]            # HWIO weights (transpose OIHW torch weights first)
    Cout = wc.shape[-1]

    if batch_per_step is None:
        # >= 2 grid steps when possible so v7x's two TensorCores both get work;
        # on v5e/v6e the grid is a serial loop so fewer, fatter steps are fine too.
        batch_per_step = N // 2 if (N % 2 == 0 and N >= 4) else N
    Nb = batch_per_step
    assert N % Nb == 0
    G = N // Nb
    Mp = Nb * Hp * Wp

    # ---- parameters: tap-major row blocks of (Cout, Cin), bf16 operands -----------
    def prep_w(w_hwio):                # (3, 3, ci, co) -> (9*co, ci)
        co = w_hwio.shape[-1]
        return (jnp.transpose(w_hwio, (0, 1, 3, 2))
                .reshape(9 * co, w_hwio.shape[2]).astype(jnp.bfloat16))

    res = [params["residual_0"]["conv_0"], params["residual_0"]["conv_1"],
           params["residual_1"]["conv_0"], params["residual_1"]["conv_1"]]
    wc_flat = prep_w(wc)                                               # (9*Cout, Cin)
    wres_flat = jnp.concatenate([prep_w(w) for w, _ in res], axis=0)   # (36*Cout, Cout)
    b_all = jnp.stack([bc] + [b for _, b in res], axis=1).astype(jnp.float32)  # (Cout, 5)

    # ---- input: 4 spatial parity planes, channels on sublanes, (img, i, j) flat on
    #      lanes.  All layout plumbing stays on the XLA side of the boundary. --------
    x = x_nchw.astype(jnp.float32)
    planes = []
    for a in (0, 1):
        for b in (0, 1):
            planes.append(jnp.transpose(x[:, :, a::2, b::2], (1, 0, 2, 3))
                          .reshape(Cin, N * Hp * Wp))
    x_ph = jnp.stack(planes, axis=0)                                   # (4, Cin, N*Hp*Wp)

    # ---- boundary masks on the pooled grid (compile-time constants) ----------------
    ii = np.arange(Hp).reshape(Hp, 1)
    jj = np.arange(Wp).reshape(1, Wp)
    rows = []
    for s in (-1, 0, 1):
        for t in (-1, 0, 1):
            ok = (ii + s >= 0) & (ii + s < Hp) & (jj + t >= 0) & (jj + t < Wp)
            rows.append(np.tile(ok.reshape(-1), Nb))
    masks = jnp.asarray(np.stack(rows).astype(np.float32))             # (9, Mp)

    kernel = _make_kernel(Cin, Cout, Hp, Wp, Nb)

    def whole2(shape):
        return pl.BlockSpec(shape, lambda n: (0, 0))

    out = pl.pallas_call(
        kernel,
        out_shape=jax.ShapeDtypeStruct((Cout, N * Hp * Wp), jnp.float32),
        grid=(G,),
        in_specs=[
            pl.BlockSpec((4, Cin, Mp), lambda n: (0, 0, n)),
            whole2(wc_flat.shape),
            whole2(wres_flat.shape),
            whole2(b_all.shape),
            whole2(masks.shape),
        ],
        out_specs=pl.BlockSpec((Cout, Mp), lambda n: (0, n)),
        compiler_params=pltpu.CompilerParams(
            dimension_semantics=("parallel",),
            vmem_limit_bytes=16 * 1024 * 1024),
    )(x_ph, wc_flat, wres_flat, b_all, masks)

    return jnp.transpose(out.reshape(Cout, N, Hp, Wp), (1, 0, 2, 3))


def init_conv_params(key, cin, cout):
    # Mirrors PyTorch Conv2d default init: kaiming_uniform(a=sqrt(5)) on weights,
    # uniform(+/- 1/sqrt(fan_in)) on bias.  Weights are HWIO.
    kw, kb = jax.random.split(key)
    fan_in = cin * 9
    bound_w = (6.0 / ((1.0 + 5.0) * fan_in)) ** 0.5
    w = jax.random.uniform(kw, (3, 3, cin, cout), jnp.float32, -bound_w, bound_w)
    bound_b = 1.0 / (fan_in ** 0.5)
    b = jax.random.uniform(kb, (cout,), jnp.float32, -bound_b, bound_b)
    return w, b


if __name__ == "__main__":
    key = jax.random.PRNGKey(0)
    k_x, k0, k1, k2, k3, k4 = jax.random.split(key, 6)

    depth_in, depth_out = 4, 8
    N, H, W = 4, 16, 16
    x = jax.random.normal(k_x, (N, depth_in, H, W), jnp.float32)   # NCHW input

    params = {
        "conv": init_conv_params(k0, depth_in, depth_out),
        "residual_0": {
            "conv_0": init_conv_params(k1, depth_out, depth_out),
            "conv_1": init_conv_params(k2, depth_out, depth_out),
        },
        "residual_1": {
            "conv_0": init_conv_params(k3, depth_out, depth_out),
            "conv_1": init_conv_params(k4, depth_out, depth_out),
        },
    }

    out = impala_cnn_block(x, params)
    jax.block_until_ready(out)
    assert out.shape == (N, depth_out, H // 2, W // 2), out.shape
    assert out.dtype == jnp.float32
    print("KERNEL_OK")
</pallas_src>

<mosaic_0001>
module attributes {stable_mosaic.version = 11 : i64} {
  func.func @kernel(%arg0: i32, %arg1: memref<4x4x128xf32, #tpu.memory_space<vmem>>, %arg2: memref<72x4xbf16, #tpu.memory_space<vmem>>, %arg3: memref<288x8xbf16, #tpu.memory_space<vmem>>, %arg4: memref<8x5xf32, #tpu.memory_space<vmem>>, %arg5: memref<9x128xf32, #tpu.memory_space<vmem>>, %arg6: memref<8x128xf32, #tpu.memory_space<vmem>>) attributes {dimension_semantics = [#tpu.dimension_semantics<parallel>], iteration_bounds = array<i64: 2>, scalar_prefetch = 0 : i64, scratch_operands = 0 : i64, tpu.core_type = #tpu.core_type<tc>, window_params = [{transform_indices = @transform_0, window_bounds = array<i64: 4, 4, 128>}, {pipeline_mode = #tpu.pipeline_mode<synchronous>, transform_indices = @transform_1, window_bounds = array<i64: 72, 4>}, {pipeline_mode = #tpu.pipeline_mode<synchronous>, transform_indices = @transform_2, window_bounds = array<i64: 288, 8>}, {pipeline_mode = #tpu.pipeline_mode<synchronous>, transform_indices = @transform_3, window_bounds = array<i64: 8, 5>}, {pipeline_mode = #tpu.pipeline_mode<synchronous>, transform_indices = @transform_4, window_bounds = array<i64: 9, 128>}, {transform_indices = @transform_5, window_bounds = array<i64: 8, 128>}]} {
    %c0 = arith.constant 0 : index
    %c0_0 = arith.constant 0 : index
    %c0_1 = arith.constant 0 : index
    %0 = vector.load %arg1[%c0, %c0_0, %c0_1] : memref<4x4x128xf32, #tpu.memory_space<vmem>>, vector<4x4x128xf32>
    %c0_2 = arith.constant 0 : index
    %c0_3 = arith.constant 0 : index
    %1 = vector.load %arg4[%c0_2, %c0_3] : memref<8x5xf32, #tpu.memory_space<vmem>>, vector<8x5xf32>
    %c0_4 = arith.constant 0 : index
    %c0_5 = arith.constant 0 : index
    %2 = vector.load %arg5[%c0_4, %c0_5] : memref<9x128xf32, #tpu.memory_space<vmem>>, vector<9x128xf32>
    %3 = vector.extract_strided_slice %2 {offsets = [0, 0], sizes = [1, 128], strides = [1, 1]} : vector<9x128xf32> to vector<1x128xf32>
    %cst = arith.constant 0.000000e+00 : f32
    %4 = vector.broadcast %cst : f32 to vector<1x128xf32>
    %5 = arith.cmpf ogt, %3, %4 : vector<1x128xf32>
    %6 = vector.extract_strided_slice %2 {offsets = [1, 0], sizes = [1, 128], strides = [1, 1]} : vector<9x128xf32> to vector<1x128xf32>
    %cst_6 = arith.constant 0.000000e+00 : f32
    %7 = vector.broadcast %cst_6 : f32 to vector<1x128xf32>
    %8 = arith.cmpf ogt, %6, %7 : vector<1x128xf32>
    %9 = vector.extract_strided_slice %2 {offsets = [2, 0], sizes = [1, 128], strides = [1, 1]} : vector<9x128xf32> to vector<1x128xf32>
    %cst_7 = arith.constant 0.000000e+00 : f32
    %10 = vector.broadcast %cst_7 : f32 to vector<1x128xf32>
    %11 = arith.cmpf ogt, %9, %10 : vector<1x128xf32>
    %12 = vector.extract_strided_slice %2 {offsets = [3, 0], sizes = [1, 128], strides = [1, 1]} : vector<9x128xf32> to vector<1x128xf32>
    %cst_8 = arith.constant 0.000000e+00 : f32
    %13 = vector.broadcast %cst_8 : f32 to vector<1x128xf32>
    %14 = arith.cmpf ogt, %12, %13 : vector<1x128xf32>
    %15 = vector.extract_strided_slice %2 {offsets = [5, 0], sizes = [1, 128], strides = [1, 1]} : vector<9x128xf32> to vector<1x128xf32>
    %cst_9 = arith.constant 0.000000e+00 : f32
    %16 = vector.broadcast %cst_9 : f32 to vector<1x128xf32>
    %17 = arith.cmpf ogt, %15, %16 : vector<1x128xf32>
    %18 = vector.extract_strided_slice %2 {offsets = [6, 0], sizes = [1, 128], strides = [1, 1]} : vector<9x128xf32> to vector<1x128xf32>
    %cst_10 = arith.constant 0.000000e+00 : f32
    %19 = vector.broadcast %cst_10 : f32 to vector<1x128xf32>
    %20 = arith.cmpf ogt, %18, %19 : vector<1x128xf32>
    %21 = vector.extract_strided_slice %2 {offsets = [7, 0], sizes = [1, 128], strides = [1, 1]} : vector<9x128xf32> to vector<1x128xf32>
    %cst_11 = arith.constant 0.000000e+00 : f32
    %22 = vector.broadcast %cst_11 : f32 to vector<1x128xf32>
    %23 = arith.cmpf ogt, %21, %22 : vector<1x128xf32>
    %24 = vector.extract_strided_slice %2 {offsets = [8, 0], sizes = [1, 128], strides = [1, 1]} : vector<9x128xf32> to vector<1x128xf32>
    %cst_12 = arith.constant 0.000000e+00 : f32
    %25 = vector.broadcast %cst_12 : f32 to vector<1x128xf32>
    %26 = arith.cmpf ogt, %24, %25 : vector<1x128xf32>
    %cst_13 = arith.constant 0.000000e+00 : f32
    %27 = vector.broadcast %cst_13 : f32 to vector<8x128xf32>
    %28 = vector.extract_strided_slice %0 {offsets = [3, 0, 0], sizes = [1, 4, 128], strides = [1, 1, 1]} : vector<4x4x128xf32> to vector<1x4x128xf32>
    %29 = vector.shape_cast %28 : vector<1x4x128xf32> to vector<4x128xf32>
    %cst_14 = arith.constant 0.000000e+00 : f32
    %30 = vector.broadcast %cst_14 : f32 to vector<4x9xf32>
    %31 = vector.extract_strided_slice %29 {offsets = [0, 0], sizes = [4, 119], strides = [1, 1]} : vector<4x128xf32> to vector<4x119xf32>
    %32 = tpu.concatenate %30, %31 in 1 : vector<4x9xf32>, vector<4x119xf32> -> vector<4x128xf32>
    %cst_15 = arith.constant 0.000000e+00 : f32
    %33 = vector.broadcast %cst_15 : f32 to vector<4x128xf32>
    %34 = vector.shape_cast %5 : vector<1x128xi1> to vector<1x128xi1>
    %35 = vector.broadcast %34 : vector<1x128xi1> to vector<4x128xi1>
    %36 = arith.select %35, %32, %33 : vector<4x128xi1>, vector<4x128xf32>
    %37 = arith.truncf %36 : vector<4x128xf32> to vector<4x128xbf16>
    %c0_16 = arith.constant 0 : index
    %c0_17 = arith.constant 0 : index
    %38 = vector.load %arg2[%c0_16, %c0_17] : memref<72x4xbf16, #tpu.memory_space<vmem>>, vector<8x4xbf16>
    %cst_18 = arith.constant dense<0.000000e+00> : vector<8x128xf32>
    %39 = tpu.matmul %38, %37, %cst_18 {dimension_numbers = #tpu.dot_dimension_numbers<[1], [0], [0], [1], [0, 0, 1, 1], [], []>} : vector<8x4xbf16>, vector<4x128xbf16>, vector<8x128xf32> -> vector<8x128xf32>
    %40 = arith.addf %27, %39 : vector<8x128xf32>
    %41 = vector.extract_strided_slice %0 {offsets = [2, 0, 0], sizes = [1, 4, 128], strides = [1, 1, 1]} : vector<4x4x128xf32> to vector<1x4x128xf32>
    %42 = vector.shape_cast %41 : vector<1x4x128xf32> to vector<4x128xf32>
    %cst_19 = arith.constant 0.000000e+00 : f32
    %43 = vector.broadcast %cst_19 : f32 to vector<4x8xf32>
    %44 = vector.extract_strided_slice %42 {offsets = [0, 0], sizes = [4, 120], strides = [1, 1]} : vector<4x128xf32> to vector<4x120xf32>
    %45 = tpu.concatenate %43, %44 in 1 : vector<4x8xf32>, vector<4x120xf32> -> vector<4x128xf32>
    %cst_20 = arith.constant 0.000000e+00 : f32
    %46 = vector.broadcast %cst_20 : f32 to vector<4x128xf32>
    %47 = vector.shape_cast %8 : vector<1x128xi1> to vector<1x128xi1>
    %48 = vector.broadcast %47 : vector<1x128xi1> to vector<4x128xi1>
    %49 = arith.select %48, %45, %46 : vector<4x128xi1>, vector<4x128xf32>
    %50 = arith.truncf %49 : vector<4x128xf32> to vector<4x128xbf16>
    %c8 = arith.constant 8 : index
    %c0_21 = arith.constant 0 : index
    %51 = vector.load %arg2[%c8, %c0_21] : memref<72x4xbf16, #tpu.memory_space<vmem>>, vector<8x4xbf16>
    %cst_22 = arith.constant dense<0.000000e+00> : vector<8x128xf32>
    %52 = tpu.matmul %51, %50, %cst_22 {dimension_numbers = #tpu.dot_dimension_numbers<[1], [0], [0], [1], [0, 0, 1, 1], [], []>} : vector<8x4xbf16>, vector<4x128xbf16>, vector<8x128xf32> -> vector<8x128xf32>
    %53 = arith.addf %40, %52 : vector<8x128xf32>
    %54 = vector.extract_strided_slice %0 {offsets = [3, 0, 0], sizes = [1, 4, 128], strides = [1, 1, 1]} : vector<4x4x128xf32> to vector<1x4x128xf32>
    %55 = vector.shape_cast %54 : vector<1x4x128xf32> to vector<4x128xf32>
    %cst_23 = arith.constant 0.000000e+00 : f32
    %56 = vector.broadcast %cst_23 : f32 to vector<4x8xf32>
    %57 = vector.extract_strided_slice %55 {offsets = [0, 0], sizes = [4, 120], strides = [1, 1]} : vector<4x128xf32> to vector<4x120xf32>
    %58 = tpu.concatenate %56, %57 in 1 : vector<4x8xf32>, vector<4x120xf32> -> vector<4x128xf32>
    %cst_24 = arith.constant 0.000000e+00 : f32
    %59 = vector.broadcast %cst_24 : f32 to vector<4x128xf32>
    %60 = vector.shape_cast %8 : vector<1x128xi1> to vector<1x128xi1>
    %61 = vector.broadcast %60 : vector<1x128xi1> to vector<4x128xi1>
    %62 = arith.select %61, %58, %59 : vector<4x128xi1>, vector<4x128xf32>
    %63 = arith.truncf %62 : vector<4x128xf32> to vector<4x128xbf16>
    %c16 = arith.constant 16 : index
    %c0_25 = arith.constant 0 : index
    %64 = vector.load %arg2[%c16, %c0_25] : memref<72x4xbf16, #tpu.memory_space<vmem>>, vector<8x4xbf16>
    %cst_26 = arith.constant dense<0.000000e+00> : vector<8x128xf32>
    %65 = tpu.matmul %64, %63, %cst_26 {dimension_numbers = #tpu.dot_dimension_numbers<[1], [0], [0], [1], [0, 0, 1, 1], [], []>} : vector<8x4xbf16>, vector<4x128xbf16>, vector<8x128xf32> -> vector<8x128xf32>
    %66 = arith.addf %53, %65 : vector<8x128xf32>
    %67 = vector.extract_strided_slice %0 {offsets = [1, 0, 0], sizes = [1, 4, 128], strides = [1, 1, 1]} : vector<4x4x128xf32> to vector<1x4x128xf32>
    %68 = vector.shape_cast %67 : vector<1x4x128xf32> to vector<4x128xf32>
    %cst_27 = arith.constant 0.000000e+00 : f32
    %69 = vector.broadcast %cst_27 : f32 to vector<4x1xf32>
    %70 = vector.extract_strided_slice %68 {offsets = [0, 0], sizes = [4, 127], strides = [1, 1]} : vector<4x128xf32> to vector<4x127xf32>
    %71 = tpu.concatenate %69, %70 in 1 : vector<4x1xf32>, vector<4x127xf32> -> vector<4x128xf32>
    %cst_28 = arith.constant 0.000000e+00 : f32
    %72 = vector.broadcast %cst_28 : f32 to vector<4x128xf32>
    %73 = vector.shape_cast %14 : vector<1x128xi1> to vector<1x128xi1>
    %74 = vector.broadcast %73 : vector<1x128xi1> to vector<4x128xi1>
    %75 = arith.select %74, %71, %72 : vector<4x128xi1>, vector<4x128xf32>
    %76 = arith.truncf %75 : vector<4x128xf32> to vector<4x128xbf16>
    %c24 = arith.constant 24 : index
    %c0_29 = arith.constant 0 : index
    %77 = vector.load %arg2[%c24, %c0_29] : memref<72x4xbf16, #tpu.memory_space<vmem>>, vector<8x4xbf16>
    %cst_30 = arith.constant dense<0.000000e+00> : vector<8x128xf32>
    %78 = tpu.matmul %77, %76, %cst_30 {dimension_numbers = #tpu.dot_dimension_numbers<[1], [0], [0], [1], [0, 0, 1, 1], [], []>} : vector<8x4xbf16>, vector<4x128xbf16>, vector<8x128xf32> -> vector<8x128xf32>
    %79 = arith.addf %66, %78 : vector<8x128xf32>
    %80 = vector.extract_strided_slice %0 {offsets = [0, 0, 0], sizes = [1, 4, 128], strides = [1, 1, 1]} : vector<4x4x128xf32> to vector<1x4x128xf32>
    %81 = vector.shape_cast %80 : vector<1x4x128xf32> to vector<4x128xf32>
    %82 = arith.truncf %81 : vector<4x128xf32> to vector<4x128xbf16>
    %c32 = arith.constant 32 : index
    %c0_31 = arith.constant 0 : index
    %83 = vector.load %arg2[%c32, %c0_31] : memref<72x4xbf16, #tpu.memory_space<vmem>>, vector<8x4xbf16>
    %cst_32 = arith.constant dense<0.000000e+00> : vector<8x128xf32>
    %84 = tpu.matmul %83, %82, %cst_32 {dimension_numbers = #tpu.dot_dimension_numbers<[1], [0], [0], [1], [0, 0, 1, 1], [], []>} : vector<8x4xbf16>, vector<4x128xbf16>, vector<8x128xf32> -> vector<8x128xf32>
    %85 = arith.addf %79, %84 : vector<8x128xf32>
    %86 = vector.extract_strided_slice %0 {offsets = [1, 0, 0], sizes = [1, 4, 128], strides = [1, 1, 1]} : vector<4x4x128xf32> to vector<1x4x128xf32>
    %87 = vector.shape_cast %86 : vector<1x4x128xf32> to vector<4x128xf32>
    %88 = arith.truncf %87 : vector<4x128xf32> to vector<4x128xbf16>
    %c40 = arith.constant 40 : index
    %c0_33 = arith.constant 0 : index
    %89 = vector.load %arg2[%c40, %c0_33] : memref<72x4xbf16, #tpu.memory_space<vmem>>, vector<8x4xbf16>
    %cst_34 = arith.constant dense<0.000000e+00> : vector<8x128xf32>
    %90 = tpu.matmul %89, %88, %cst_34 {dimension_numbers = #tpu.dot_dimension_numbers<[1], [0], [0], [1], [0, 0, 1, 1], [], []>} : vector<8x4xbf16>, vector<4x128xbf16>, vector<8x128xf32> -> vector<8x128xf32>
    %91 = arith.addf %85, %90 : vector<8x128xf32>
    %92 = vector.extract_strided_slice %0 {offsets = [3, 0, 0], sizes = [1, 4, 128], strides = [1, 1, 1]} : vector<4x4x128xf32> to vector<1x4x128xf32>
    %93 = vector.shape_cast %92 : vector<1x4x128xf32> to vector<4x128xf32>
    %cst_35 = arith.constant 0.000000e+00 : f32
    %94 = vector.broadcast %cst_35 : f32 to vector<4x1xf32>
    %95 = vector.extract_strided_slice %93 {offsets = [0, 0], sizes = [4, 127], strides = [1, 1]} : vector<4x128xf32> to vector<4x127xf32>
    %96 = tpu.concatenate %94, %95 in 1 : vector<4x1xf32>, vector<4x127xf32> -> vector<4x128xf32>
    %cst_36 = arith.constant 0.000000e+00 : f32
    %97 = vector.broadcast %cst_36 : f32 to vector<4x128xf32>
    %98 = vector.shape_cast %14 : vector<1x128xi1> to vector<1x128xi1>
    %99 = vector.broadcast %98 : vector<1x128xi1> to vector<4x128xi1>
    %100 = arith.select %99, %96, %97 : vector<4x128xi1>, vector<4x128xf32>
    %101 = arith.truncf %100 : vector<4x128xf32> to vector<4x128xbf16>
    %c48 = arith.constant 48 : index
    %c0_37 = arith.constant 0 : index
    %102 = vector.load %arg2[%c48, %c0_37] : memref<72x4xbf16, #tpu.memory_space<vmem>>, vector<8x4xbf16>
    %cst_38 = arith.constant dense<0.000000e+00> : vector<8x128xf32>
    %103 = tpu.matmul %102, %101, %cst_38 {dimension_numbers = #tpu.dot_dimension_numbers<[1], [0], [0], [1], [0, 0, 1, 1], [], []>} : vector<8x4xbf16>, vector<4x128xbf16>, vector<8x128xf32> -> vector<8x128xf32>
    %104 = arith.addf %91, %103 : vector<8x128xf32>
    %105 = vector.extract_strided_slice %0 {offsets = [2, 0, 0], sizes = [1, 4, 128], strides = [1, 1, 1]} : vector<4x4x128xf32> to vector<1x4x128xf32>
    %106 = vector.shape_cast %105 : vector<1x4x128xf32> to vector<4x128xf32>
    %107 = arith.truncf %106 : vector<4x128xf32> to vector<4x128xbf16>
    %c56 = arith.constant 56 : index
    %c0_39 = arith.constant 0 : index
    %108 = vector.load %arg2[%c56, %c0_39] : memref<72x4xbf16, #tpu.memory_space<vmem>>, vector<8x4xbf16>
    %cst_40 = arith.constant dense<0.000000e+00> : vector<8x128xf32>
    %109 = tpu.matmul %108, %107, %cst_40 {dimension_numbers = #tpu.dot_dimension_numbers<[1], [0], [0], [1], [0, 0, 1, 1], [], []>} : vector<8x4xbf16>, vector<4x128xbf16>, vector<8x128xf32> -> vector<8x128xf32>
    %110 = arith.addf %104, %109 : vector<8x128xf32>
    %111 = vector.extract_strided_slice %0 {offsets = [3, 0, 0], sizes = [1, 4, 128], strides = [1, 1, 1]} : vector<4x4x128xf32> to vector<1x4x128xf32>
    %112 = vector.shape_cast %111 : vector<1x4x128xf32> to vector<4x128xf32>
    %113 = arith.truncf %112 : vector<4x128xf32> to vector<4x128xbf16>
    %c64 = arith.constant 64 : index
    %c0_41 = arith.constant 0 : index
    %114 = vector.load %arg2[%c64, %c0_41] : memref<72x4xbf16, #tpu.memory_space<vmem>>, vector<8x4xbf16>
    %cst_42 = arith.constant dense<0.000000e+00> : vector<8x128xf32>
    %115 = tpu.matmul %114, %113, %cst_42 {dimension_numbers = #tpu.dot_dimension_numbers<[1], [0], [0], [1], [0, 0, 1, 1], [], []>} : vector<8x4xbf16>, vector<4x128xbf16>, vector<8x128xf32> -> vector<8x128xf32>
    %116 = arith.addf %110, %115 : vector<8x128xf32>
    %117 = vector.extract_strided_slice %1 {offsets = [0, 0], sizes = [8, 1], strides = [1, 1]} : vector<8x5xf32> to vector<8x1xf32>
    %118 = vector.broadcast %117 : vector<8x1xf32> to vector<8x128xf32>
    %119 = arith.addf %116, %118 : vector<8x128xf32>
    %cst_43 = arith.constant 0.000000e+00 : f32
    %120 = vector.broadcast %cst_43 : f32 to vector<8x128xf32>
    %121 = vector.extract_strided_slice %0 {offsets = [2, 0, 0], sizes = [1, 4, 128], strides = [1, 1, 1]} : vector<4x4x128xf32> to vector<1x4x128xf32>
    %122 = vector.shape_cast %121 : vector<1x4x128xf32> to vector<4x128xf32>
    %cst_44 = arith.constant 0.000000e+00 : f32
    %123 = vector.broadcast %cst_44 : f32 to vector<4x8xf32>
    %124 = vector.extract_strided_slice %122 {offsets = [0, 0], sizes = [4, 120], strides = [1, 1]} : vector<4x128xf32> to vector<4x120xf32>
    %125 = tpu.concatenate %123, %124 in 1 : vector<4x8xf32>, vector<4x120xf32> -> vector<4x128xf32>
    %cst_45 = arith.constant 0.000000e+00 : f32
    %126 = vector.broadcast %cst_45 : f32 to vector<4x128xf32>
    %127 = vector.shape_cast %8 : vector<1x128xi1> to vector<1x128xi1>
    %128 = vector.broadcast %127 : vector<1x128xi1> to vector<4x128xi1>
    %129 = arith.select %128, %125, %126 : vector<4x128xi1>, vector<4x128xf32>
    %130 = arith.truncf %129 : vector<4x128xf32> to vector<4x128xbf16>
    %c0_46 = arith.constant 0 : index
    %c0_47 = arith.constant 0 : index
    %131 = vector.load %arg2[%c0_46, %c0_47] : memref<72x4xbf16, #tpu.memory_space<vmem>>, vector<8x4xbf16>
    %cst_48 = arith.constant dense<0.000000e+00> : vector<8x128xf32>
    %132 = tpu.matmul %131, %130, %cst_48 {dimension_numbers = #tpu.dot_dimension_numbers<[1], [0], [0], [1], [0, 0, 1, 1], [], []>} : vector<8x4xbf16>, vector<4x128xbf16>, vector<8x128xf32> -> vector<8x128xf32>
    %133 = arith.addf %120, %132 : vector<8x128xf32>
    %134 = vector.extract_strided_slice %0 {offsets = [3, 0, 0], sizes = [1, 4, 128], strides = [1, 1, 1]} : vector<4x4x128xf32> to vector<1x4x128xf32>
    %135 = vector.shape_cast %134 : vector<1x4x128xf32> to vector<4x128xf32>
    %cst_49 = arith.constant 0.000000e+00 : f32
    %136 = vector.broadcast %cst_49 : f32 to vector<4x8xf32>
    %137 = vector.extract_strided_slice %135 {offsets = [0, 0], sizes = [4, 120], strides = [1, 1]} : vector<4x128xf32> to vector<4x120xf32>
    %138 = tpu.concatenate %136, %137 in 1 : vector<4x8xf32>, vector<4x120xf32> -> vector<4x128xf32>
    %cst_50 = arith.constant 0.000000e+00 : f32
    %139 = vector.broadcast %cst_50 : f32 to vector<4x128xf32>
    %140 = vector.shape_cast %8 : vector<1x128xi1> to vector<1x128xi1>
    %141 = vector.broadcast %140 : vector<1x128xi1> to vector<4x128xi1>
    %142 = arith.select %141, %138, %139 : vector<4x128xi1>, vector<4x128xf32>
    %143 = arith.truncf %142 : vector<4x128xf32> to vector<4x128xbf16>
    %c8_51 = arith.constant 8 : index
    %c0_52 = arith.constant 0 : index
    %144 = vector.load %arg2[%c8_51, %c0_52] : memref<72x4xbf16, #tpu.memory_space<vmem>>, vector<8x4xbf16>
    %cst_53 = arith.constant dense<0.000000e+00> : vector<8x128xf32>
    %145 = tpu.matmul %144, %143, %cst_53 {dimension_numbers = #tpu.dot_dimension_numbers<[1], [0], [0], [1], [0, 0, 1, 1], [], []>} : vector<8x4xbf16>, vector<4x128xbf16>, vector<8x128xf32> -> vector<8x128xf32>
    %146 = arith.addf %133, %145 : vector<8x128xf32>
    %147 = vector.extract_strided_slice %0 {offsets = [2, 0, 0], sizes = [1, 4, 128], strides = [1, 1, 1]} : vector<4x4x128xf32> to vector<1x4x128xf32>
    %148 = vector.shape_cast %147 : vector<1x4x128xf32> to vector<4x128xf32>
    %cst_54 = arith.constant 0.000000e+00 : f32
    %149 = vector.broadcast %cst_54 : f32 to vector<4x7xf32>
    %150 = vector.extract_strided_slice %148 {offsets = [0, 0], sizes = [4, 121], strides = [1, 1]} : vector<4x128xf32> to vector<4x121xf32>
    %151 = tpu.concatenate %149, %150 in 1 : vector<4x7xf32>, vector<4x121xf32> -> vector<4x128xf32>
    %cst_55 = arith.constant 0.000000e+00 : f32
    %152 = vector.broadcast %cst_55 : f32 to vector<4x128xf32>
    %153 = vector.shape_cast %11 : vector<1x128xi1> to vector<1x128xi1>
    %154 = vector.broadcast %153 : vector<1x128xi1> to vector<4x128xi1>
    %155 = arith.select %154, %151, %152 : vector<4x128xi1>, vector<4x128xf32>
    %156 = arith.truncf %155 : vector<4x128xf32> to vector<4x128xbf16>
    %c16_56 = arith.constant 16 : index
    %c0_57 = arith.constant 0 : index
    %157 = vector.load %arg2[%c16_56, %c0_57] : memref<72x4xbf16, #tpu.memory_space<vmem>>, vector<8x4xbf16>
    %cst_58 = arith.constant dense<0.000000e+00> : vector<8x128xf32>
    %158 = tpu.matmul %157, %156, %cst_58 {dimension_numbers = #tpu.dot_dimension_numbers<[1], [0], [0], [1], [0, 0, 1, 1], [], []>} : vector<8x4xbf16>, vector<4x128xbf16>, vector<8x128xf32> -> vector<8x128xf32>
    %159 = arith.addf %146, %158 : vector<8x128xf32>
    %160 = vector.extract_strided_slice %0 {offsets = [0, 0, 0], sizes = [1, 4, 128], strides = [1, 1, 1]} : vector<4x4x128xf32> to vector<1x4x128xf32>
    %161 = vector.shape_cast %160 : vector<1x4x128xf32> to vector<4x128xf32>
    %162 = arith.truncf %161 : vector<4x128xf32> to vector<4x128xbf16>
    %c24_59 = arith.constant 24 : index
    %c0_60 = arith.constant 0 : index
    %163 = vector.load %arg2[%c24_59, %c0_60] : memref<72x4xbf16, #tpu.memory_space<vmem>>, vector<8x4xbf16>
    %cst_61 = arith.constant dense<0.000000e+00> : vector<8x128xf32>
    %164 = tpu.matmul %163, %162, %cst_61 {dimension_numbers = #tpu.dot_dimension_numbers<[1], [0], [0], [1], [0, 0, 1, 1], [], []>} : vector<8x4xbf16>, vector<4x128xbf16>, vector<8x128xf32> -> vector<8x128xf32>
    %165 = arith.addf %159, %164 : vector<8x128xf32>
    %166 = vector.extract_strided_slice %0 {offsets = [1, 0, 0], sizes = [1, 4, 128], strides = [1, 1, 1]} : vector<4x4x128xf32> to vector<1x4x128xf32>
    %167 = vector.shape_cast %166 : vector<1x4x128xf32> to vector<4x128xf32>
    %168 = arith.truncf %167 : vector<4x128xf32> to vector<4x128xbf16>
    %c32_62 = arith.constant 32 : index
    %c0_63 = arith.constant 0 : index
    %169 = vector.load %arg2[%c32_62, %c0_63] : memref<72x4xbf16, #tpu.memory_space<vmem>>, vector<8x4xbf16>
    %cst_64 = arith.constant dense<0.000000e+00> : vector<8x128xf32>
    %170 = tpu.matmul %169, %168, %cst_64 {dimension_numbers = #tpu.dot_dimension_numbers<[1], [0], [0], [1], [0, 0, 1, 1], [], []>} : vector<8x4xbf16>, vector<4x128xbf16>, vector<8x128xf32> -> vector<8x128xf32>
    %171 = arith.addf %165, %170 : vector<8x128xf32>
    %172 = vector.extract_strided_slice %0 {offsets = [0, 0, 0], sizes = [1, 4, 128], strides = [1, 1, 1]} : vector<4x4x128xf32> to vector<1x4x128xf32>
    %173 = vector.shape_cast %172 : vector<1x4x128xf32> to vector<4x128xf32>
    %cst_65 = arith.constant 0.000000e+00 : f32
    %174 = vector.broadcast %cst_65 : f32 to vector<4x1xf32>
    %175 = vector.extract_strided_slice %173 {offsets = [0, 1], sizes = [4, 127], strides = [1, 1]} : vector<4x128xf32> to vector<4x127xf32>
    %176 = tpu.concatenate %175, %174 in 1 : vector<4x127xf32>, vector<4x1xf32> -> vector<4x128xf32>
    %cst_66 = arith.constant 0.000000e+00 : f32
    %177 = vector.broadcast %cst_66 : f32 to vector<4x128xf32>
    %178 = vector.shape_cast %17 : vector<1x128xi1> to vector<1x128xi1>
    %179 = vector.broadcast %178 : vector<1x128xi1> to vector<4x128xi1>
    %180 = arith.select %179, %176, %177 : vector<4x128xi1>, vector<4x128xf32>
    %181 = arith.truncf %180 : vector<4x128xf32> to vector<4x128xbf16>
    %c40_67 = arith.constant 40 : index
    %c0_68 = arith.constant 0 : index
    %182 = vector.load %arg2[%c40_67, %c0_68] : memref<72x4xbf16, #tpu.memory_space<vmem>>, vector<8x4xbf16>
    %cst_69 = arith.constant dense<0.000000e+00> : vector<8x128xf32>
    %183 = tpu.matmul %182, %181, %cst_69 {dimension_numbers = #tpu.dot_dimension_numbers<[1], [0], [0], [1], [0, 0, 1, 1], [], []>} : vector<8x4xbf16>, vector<4x128xbf16>, vector<8x128xf32> -> vector<8x128xf32>
    %184 = arith.addf %171, %183 : vector<8x128xf32>
    %185 = vector.extract_strided_slice %0 {offsets = [2, 0, 0], sizes = [1, 4, 128], strides = [1, 1, 1]} : vector<4x4x128xf32> to vector<1x4x128xf32>
    %186 = vector.shape_cast %185 : vector<1x4x128xf32> to vector<4x128xf32>
    %187 = arith.truncf %186 : vector<4x128xf32> to vector<4x128xbf16>
    %c48_70 = arith.constant 48 : index
    %c0_71 = arith.constant 0 : index
    %188 = vector.load %arg2[%c48_70, %c0_71] : memref<72x4xbf16, #tpu.memory_space<vmem>>, vector<8x4xbf16>
    %cst_72 = arith.constant dense<0.000000e+00> : vector<8x128xf32>
    %189 = tpu.matmul %188, %187, %cst_72 {dimension_numbers = #tpu.dot_dimension_numbers<[1], [0], [0], [1], [0, 0, 1, 1], [], []>} : vector<8x4xbf16>, vector<4x128xbf16>, vector<8x128xf32> -> vector<8x128xf32>
    %190 = arith.addf %184, %189 : vector<8x128xf32>
    %191 = vector.extract_strided_slice %0 {offsets = [3, 0, 0], sizes = [1, 4, 128], strides = [1, 1, 1]} : vector<4x4x128xf32> to vector<1x4x128xf32>
    %192 = vector.shape_cast %191 : vector<1x4x128xf32> to vector<4x128xf32>
    %193 = arith.truncf %192 : vector<4x128xf32> to vector<4x128xbf16>
    %c56_73 = arith.constant 56 : index
    %c0_74 = arith.constant 0 : index
    %194 = vector.load %arg2[%c56_73, %c0_74] : memref<72x4xbf16, #tpu.memory_space<vmem>>, vector<8x4xbf16>
    %cst_75 = arith.constant dense<0.000000e+00> : vector<8x128xf32>
    %195 = tpu.matmul %194, %193, %cst_75 {dimension_numbers = #tpu.dot_dimension_numbers<[1], [0], [0], [1], [0, 0, 1, 1], [], []>} : vector<8x4xbf16>, vector<4x128xbf16>, vector<8x128xf32> -> vector<8x128xf32>
    %196 = arith.addf %190, %195 : vector<8x128xf32>
    %197 = vector.extract_strided_slice %0 {offsets = [2, 0, 0], sizes = [1, 4, 128], strides = [1, 1, 1]} : vector<4x4x128xf32> to vector<1x4x128xf32>
    %198 = vector.shape_cast %197 : vector<1x4x128xf32> to vector<4x128xf32>
    %cst_76 = arith.constant 0.000000e+00 : f32
    %199 = vector.broadcast %cst_76 : f32 to vector<4x1xf32>
    %200 = vector.extract_strided_slice %198 {offsets = [0, 1], sizes = [4, 127], strides = [1, 1]} : vector<4x128xf32> to vector<4x127xf32>
    %201 = tpu.concatenate %200, %199 in 1 : vector<4x127xf32>, vector<4x1xf32> -> vector<4x128xf32>
    %cst_77 = arith.constant 0.000000e+00 : f32
    %202 = vector.broadcast %cst_77 : f32 to vector<4x128xf32>
    %203 = vector.shape_cast %17 : vector<1x128xi1> to vector<1x128xi1>
    %204 = vector.broadcast %203 : vector<1x128xi1> to vector<4x128xi1>
    %205 = arith.select %204, %201, %202 : vector<4x128xi1>, vector<4x128xf32>
    %206 = arith.truncf %205 : vector<4x128xf32> to vector<4x128xbf16>
    %c64_78 = arith.constant 64 : index
    %c0_79 = arith.constant 0 : index
    %207 = vector.load %arg2[%c64_78, %c0_79] : memref<72x4xbf16, #tpu.memory_space<vmem>>, vector<8x4xbf16>
    %cst_80 = arith.constant dense<0.000000e+00> : vector<8x128xf32>
    %208 = tpu.matmul %207, %206, %cst_80 {dimension_numbers = #tpu.dot_dimension_numbers<[1], [0], [0], [1], [0, 0, 1, 1], [], []>} : vector<8x4xbf16>, vector<4x128xbf16>, vector<8x128xf32> -> vector<8x128xf32>
    %209 = arith.addf %196, %208 : vector<8x128xf32>
    %210 = vector.extract_strided_slice %1 {offsets = [0, 0], sizes = [8, 1], strides = [1, 1]} : vector<8x5xf32> to vector<8x1xf32>
    %211 = vector.broadcast %210 : vector<8x1xf32> to vector<8x128xf32>
    %212 = arith.addf %209, %211 : vector<8x128xf32>
    %cst_81 = arith.constant 0.000000e+00 : f32
    %213 = vector.broadcast %cst_81 : f32 to vector<8x128xf32>
    %214 = vector.extract_strided_slice %0 {offsets = [1, 0, 0], sizes = [1, 4, 128], strides = [1, 1, 1]} : vector<4x4x128xf32> to vector<1x4x128xf32>
    %215 = vector.shape_cast %214 : vector<1x4x128xf32> to vector<4x128xf32>
    %cst_82 = arith.constant 0.000000e+00 : f32
    %216 = vector.broadcast %cst_82 : f32 to vector<4x1xf32>
    %217 = vector.extract_strided_slice %215 {offsets = [0, 0], sizes = [4, 127], strides = [1, 1]} : vector<4x128xf32> to vector<4x127xf32>
    %218 = tpu.concatenate %216, %217 in 1 : vector<4x1xf32>, vector<4x127xf32> -> vector<4x128xf32>
    %cst_83 = arith.constant 0.000000e+00 : f32
    %219 = vector.broadcast %cst_83 : f32 to vector<4x128xf32>
    %220 = vector.shape_cast %14 : vector<1x128xi1> to vector<1x128xi1>
    %221 = vector.broadcast %220 : vector<1x128xi1> to vector<4x128xi1>
    %222 = arith.select %221, %218, %219 : vector<4x128xi1>, vector<4x128xf32>
    %223 = arith.truncf %222 : vector<4x128xf32> to vector<4x128xbf16>
    %c0_84 = arith.constant 0 : index
    %c0_85 = arith.constant 0 : index
    %224 = vector.load %arg2[%c0_84, %c0_85] : memref<72x4xbf16, #tpu.memory_space<vmem>>, vector<8x4xbf16>
    %cst_86 = arith.constant dense<0.000000e+00> : vector<8x128xf32>
    %225 = tpu.matmul %224, %223, %cst_86 {dimension_numbers = #tpu.dot_dimension_numbers<[1], [0], [0], [1], [0, 0, 1, 1], [], []>} : vector<8x4xbf16>, vector<4x128xbf16>, vector<8x128xf32> -> vector<8x128xf32>
    %226 = arith.addf %213, %225 : vector<8x128xf32>
    %227 = vector.extract_strided_slice %0 {offsets = [0, 0, 0], sizes = [1, 4, 128], strides = [1, 1, 1]} : vector<4x4x128xf32> to vector<1x4x128xf32>
    %228 = vector.shape_cast %227 : vector<1x4x128xf32> to vector<4x128xf32>
    %229 = arith.truncf %228 : vector<4x128xf32> to vector<4x128xbf16>
    %c8_87 = arith.constant 8 : index
    %c0_88 = arith.constant 0 : index
    %230 = vector.load %arg2[%c8_87, %c0_88] : memref<72x4xbf16, #tpu.memory_space<vmem>>, vector<8x4xbf16>
    %cst_89 = arith.constant dense<0.000000e+00> : vector<8x128xf32>
    %231 = tpu.matmul %230, %229, %cst_89 {dimension_numbers = #tpu.dot_dimension_numbers<[1], [0], [0], [1], [0, 0, 1, 1], [], []>} : vector<8x4xbf16>, vector<4x128xbf16>, vector<8x128xf32> -> vector<8x128xf32>
    %232 = arith.addf %226, %231 : vector<8x128xf32>
    %233 = vector.extract_strided_slice %0 {offsets = [1, 0, 0], sizes = [1, 4, 128], strides = [1, 1, 1]} : vector<4x4x128xf32> to vector<1x4x128xf32>
    %234 = vector.shape_cast %233 : vector<1x4x128xf32> to vector<4x128xf32>
    %235 = arith.truncf %234 : vector<4x128xf32> to vector<4x128xbf16>
    %c16_90 = arith.constant 16 : index
    %c0_91 = arith.constant 0 : index
    %236 = vector.load %arg2[%c16_90, %c0_91] : memref<72x4xbf16, #tpu.memory_space<vmem>>, vector<8x4xbf16>
    %cst_92 = arith.constant dense<0.000000e+00> : vector<8x128xf32>
    %237 = tpu.matmul %236, %235, %cst_92 {dimension_numbers = #tpu.dot_dimension_numbers<[1], [0], [0], [1], [0, 0, 1, 1], [], []>} : vector<8x4xbf16>, vector<4x128xbf16>, vector<8x128xf32> -> vector<8x128xf32>
    %238 = arith.addf %232, %237 : vector<8x128xf32>
    %239 = vector.extract_strided_slice %0 {offsets = [3, 0, 0], sizes = [1, 4, 128], strides = [1, 1, 1]} : vector<4x4x128xf32> to vector<1x4x128xf32>
    %240 = vector.shape_cast %239 : vector<1x4x128xf32> to vector<4x128xf32>
    %cst_93 = arith.constant 0.000000e+00 : f32
    %241 = vector.broadcast %cst_93 : f32 to vector<4x1xf32>
    %242 = vector.extract_strided_slice %240 {offsets = [0, 0], sizes = [4, 127], strides = [1, 1]} : vector<4x128xf32> to vector<4x127xf32>
    %243 = tpu.concatenate %241, %242 in 1 : vector<4x1xf32>, vector<4x127xf32> -> vector<4x128xf32>
    %cst_94 = arith.constant 0.000000e+00 : f32
    %244 = vector.broadcast %cst_94 : f32 to vector<4x128xf32>
    %245 = vector.shape_cast %14 : vector<1x128xi1> to vector<1x128xi1>
    %246 = vector.broadcast %245 : vector<1x128xi1> to vector<4x128xi1>
    %247 = arith.select %246, %243, %244 : vector<4x128xi1>, vector<4x128xf32>
    %248 = arith.truncf %247 : vector<4x128xf32> to vector<4x128xbf16>
    %c24_95 = arith.constant 24 : index
    %c0_96 = arith.constant 0 : index
    %249 = vector.load %arg2[%c24_95, %c0_96] : memref<72x4xbf16, #tpu.memory_space<vmem>>, vector<8x4xbf16>
    %cst_97 = arith.constant dense<0.000000e+00> : vector<8x128xf32>
    %250 = tpu.matmul %249, %248, %cst_97 {dimension_numbers = #tpu.dot_dimension_numbers<[1], [0], [0], [1], [0, 0, 1, 1], [], []>} : vector<8x4xbf16>, vector<4x128xbf16>, vector<8x128xf32> -> vector<8x128xf32>
    %251 = arith.addf %238, %250 : vector<8x128xf32>
    %252 = vector.extract_strided_slice %0 {offsets = [2, 0, 0], sizes = [1, 4, 128], strides = [1, 1, 1]} : vector<4x4x128xf32> to vector<1x4x128xf32>
    %253 = vector.shape_cast %252 : vector<1x4x128xf32> to vector<4x128xf32>
    %254 = arith.truncf %253 : vector<4x128xf32> to vector<4x128xbf16>
    %c32_98 = arith.constant 32 : index
    %c0_99 = arith.constant 0 : index
    %255 = vector.load %arg2[%c32_98, %c0_99] : memref<72x4xbf16, #tpu.memory_space<vmem>>, vector<8x4xbf16>
    %cst_100 = arith.constant dense<0.000000e+00> : vector<8x128xf32>
    %256 = tpu.matmul %255, %254, %cst_100 {dimension_numbers = #tpu.dot_dimension_numbers<[1], [0], [0], [1], [0, 0, 1, 1], [], []>} : vector<8x4xbf16>, vector<4x128xbf16>, vector<8x128xf32> -> vector<8x128xf32>
    %257 = arith.addf %251, %256 : vector<8x128xf32>
    %258 = vector.extract_strided_slice %0 {offsets = [3, 0, 0], sizes = [1, 4, 128], strides = [1, 1, 1]} : vector<4x4x128xf32> to vector<1x4x128xf32>
    %259 = vector.shape_cast %258 : vector<1x4x128xf32> to vector<4x128xf32>
    %260 = arith.truncf %259 : vector<4x128xf32> to vector<4x128xbf16>
    %c40_101 = arith.constant 40 : index
    %c0_102 = arith.constant 0 : index
    %261 = vector.load %arg2[%c40_101, %c0_102] : memref<72x4xbf16, #tpu.memory_space<vmem>>, vector<8x4xbf16>
    %cst_103 = arith.constant dense<0.000000e+00> : vector<8x128xf32>
    %262 = tpu.matmul %261, %260, %cst_103 {dimension_numbers = #tpu.dot_dimension_numbers<[1], [0], [0], [1], [0, 0, 1, 1], [], []>} : vector<8x4xbf16>, vector<4x128xbf16>, vector<8x128xf32> -> vector<8x128xf32>
    %263 = arith.addf %257, %262 : vector<8x128xf32>
    %264 = vector.extract_strided_slice %0 {offsets = [1, 0, 0], sizes = [1, 4, 128], strides = [1, 1, 1]} : vector<4x4x128xf32> to vector<1x4x128xf32>
    %265 = vector.shape_cast %264 : vector<1x4x128xf32> to vector<4x128xf32>
    %cst_104 = arith.constant 0.000000e+00 : f32
    %266 = vector.broadcast %cst_104 : f32 to vector<4x7xf32>
    %267 = vector.extract_strided_slice %265 {offsets = [0, 7], sizes = [4, 121], strides = [1, 1]} : vector<4x128xf32> to vector<4x121xf32>
    %268 = tpu.concatenate %267, %266 in 1 : vector<4x121xf32>, vector<4x7xf32> -> vector<4x128xf32>
    %cst_105 = arith.constant 0.000000e+00 : f32
    %269 = vector.broadcast %cst_105 : f32 to vector<4x128xf32>
    %270 = vector.shape_cast %20 : vector<1x128xi1> to vector<1x128xi1>
    %271 = vector.broadcast %270 : vector<1x128xi1> to vector<4x128xi1>
    %272 = arith.select %271, %268, %269 : vector<4x128xi1>, vector<4x128xf32>
    %273 = arith.truncf %272 : vector<4x128xf32> to vector<4x128xbf16>
    %c48_106 = arith.constant 48 : index
    %c0_107 = arith.constant 0 : index
    %274 = vector.load %arg2[%c48_106, %c0_107] : memref<72x4xbf16, #tpu.memory_space<vmem>>, vector<8x4xbf16>
    %cst_108 = arith.constant dense<0.000000e+00> : vector<8x128xf32>
    %275 = tpu.matmul %274, %273, %cst_108 {dimension_numbers = #tpu.dot_dimension_numbers<[1], [0], [0], [1], [0, 0, 1, 1], [], []>} : vector<8x4xbf16>, vector<4x128xbf16>, vector<8x128xf32> -> vector<8x128xf32>
    %276 = arith.addf %263, %275 : vector<8x128xf32>
    %277 = vector.extract_strided_slice %0 {offsets = [0, 0, 0], sizes = [1, 4, 128], strides = [1, 1, 1]} : vector<4x4x128xf32> to vector<1x4x128xf32>
    %278 = vector.shape_cast %277 : vector<1x4x128xf32> to vector<4x128xf32>
    %cst_109 = arith.constant 0.000000e+00 : f32
    %279 = vector.broadcast %cst_109 : f32 to vector<4x8xf32>
    %280 = vector.extract_strided_slice %278 {offsets = [0, 8], sizes = [4, 120], strides = [1, 1]} : vector<4x128xf32> to vector<4x120xf32>
    %281 = tpu.concatenate %280, %279 in 1 : vector<4x120xf32>, vector<4x8xf32> -> vector<4x128xf32>
    %cst_110 = arith.constant 0.000000e+00 : f32
    %282 = vector.broadcast %cst_110 : f32 to vector<4x128xf32>
    %283 = vector.shape_cast %23 : vector<1x128xi1> to vector<1x128xi1>
    %284 = vector.broadcast %283 : vector<1x128xi1> to vector<4x128xi1>
    %285 = arith.select %284, %281, %282 : vector<4x128xi1>, vector<4x128xf32>
    %286 = arith.truncf %285 : vector<4x128xf32> to vector<4x128xbf16>
    %c56_111 = arith.constant 56 : index
    %c0_112 = arith.constant 0 : index
    %287 = vector.load %arg2[%c56_111, %c0_112] : memref<72x4xbf16, #tpu.memory_space<vmem>>, vector<8x4xbf16>
    %cst_113 = arith.constant dense<0.000000e+00> : vector<8x128xf32>
    %288 = tpu.matmul %287, %286, %cst_113 {dimension_numbers = #tpu.dot_dimension_numbers<[1], [0], [0], [1], [0, 0, 1, 1], [], []>} : vector<8x4xbf16>, vector<4x128xbf16>, vector<8x128xf32> -> vector<8x128xf32>
    %289 = arith.addf %276, %288 : vector<8x128xf32>
    %290 = vector.extract_strided_slice %0 {offsets = [1, 0, 0], sizes = [1, 4, 128], strides = [1, 1, 1]} : vector<4x4x128xf32> to vector<1x4x128xf32>
    %291 = vector.shape_cast %290 : vector<1x4x128xf32> to vector<4x128xf32>
    %cst_114 = arith.constant 0.000000e+00 : f32
    %292 = vector.broadcast %cst_114 : f32 to vector<4x8xf32>
    %293 = vector.extract_strided_slice %291 {offsets = [0, 8], sizes = [4, 120], strides = [1, 1]} : vector<4x128xf32> to vector<4x120xf32>
    %294 = tpu.concatenate %293, %292 in 1 : vector<4x120xf32>, vector<4x8xf32> -> vector<4x128xf32>
    %cst_115 = arith.constant 0.000000e+00 : f32
    %295 = vector.broadcast %cst_115 : f32 to vector<4x128xf32>
    %296 = vector.shape_cast %23 : vector<1x128xi1> to vector<1x128xi1>
    %297 = vector.broadcast %296 : vector<1x128xi1> to vector<4x128xi1>
    %298 = arith.select %297, %294, %295 : vector<4x128xi1>, vector<4x128xf32>
    %299 = arith.truncf %298 : vector<4x128xf32> to vector<4x128xbf16>
    %c64_116 = arith.constant 64 : index
    %c0_117 = arith.constant 0 : index
    %300 = vector.load %arg2[%c64_116, %c0_117] : memref<72x4xbf16, #tpu.memory_space<vmem>>, vector<8x4xbf16>
    %cst_118 = arith.constant dense<0.000000e+00> : vector<8x128xf32>
    %301 = tpu.matmul %300, %299, %cst_118 {dimension_numbers = #tpu.dot_dimension_numbers<[1], [0], [0], [1], [0, 0, 1, 1], [], []>} : vector<8x4xbf16>, vector<4x128xbf16>, vector<8x128xf32> -> vector<8x128xf32>
    %302 = arith.addf %289, %301 : vector<8x128xf32>
    %303 = vector.extract_strided_slice %1 {offsets = [0, 0], sizes = [8, 1], strides = [1, 1]} : vector<8x5xf32> to vector<8x1xf32>
    %304 = vector.broadcast %303 : vector<8x1xf32> to vector<8x128xf32>
    %305 = arith.addf %302, %304 : vector<8x128xf32>
    %cst_119 = arith.constant 0.000000e+00 : f32
    %306 = vector.broadcast %cst_119 : f32 to vector<8x128xf32>
    %307 = vector.extract_strided_slice %0 {offsets = [0, 0, 0], sizes = [1, 4, 128], strides = [1, 1, 1]} : vector<4x4x128xf32> to vector<1x4x128xf32>
    %308 = vector.shape_cast %307 : vector<1x4x128xf32> to vector<4x128xf32>
    %309 = arith.truncf %308 : vector<4x128xf32> to vector<4x128xbf16>
    %c0_120 = arith.constant 0 : index
    %c0_121 = arith.constant 0 : index
    %310 = vector.load %arg2[%c0_120, %c0_121] : memref<72x4xbf16, #tpu.memory_space<vmem>>, vector<8x4xbf16>
    %cst_122 = arith.constant dense<0.000000e+00> : vector<8x128xf32>
    %311 = tpu.matmul %310, %309, %cst_122 {dimension_numbers = #tpu.dot_dimension_numbers<[1], [0], [0], [1], [0, 0, 1, 1], [], []>} : vector<8x4xbf16>, vector<4x128xbf16>, vector<8x128xf32> -> vector<8x128xf32>
    %312 = arith.addf %306, %311 : vector<8x128xf32>
    %313 = vector.extract_strided_slice %0 {offsets = [1, 0, 0], sizes = [1, 4, 128], strides = [1, 1, 1]} : vector<4x4x128xf32> to vector<1x4x128xf32>
    %314 = vector.shape_cast %313 : vector<1x4x128xf32> to vector<4x128xf32>
    %315 = arith.truncf %314 : vector<4x128xf32> to vector<4x128xbf16>
    %c8_123 = arith.constant 8 : index
    %c0_124 = arith.constant 0 : index
    %316 = vector.load %arg2[%c8_123, %c0_124] : memref<72x4xbf16, #tpu.memory_space<vmem>>, vector<8x4xbf16>
    %cst_125 = arith.constant dense<0.000000e+00> : vector<8x128xf32>
    %317 = tpu.matmul %316, %315, %cst_125 {dimension_numbers = #tpu.dot_dimension_numbers<[1], [0], [0], [1], [0, 0, 1, 1], [], []>} : vector<8x4xbf16>, vector<4x128xbf16>, vector<8x128xf32> -> vector<8x128xf32>
    %318 = arith.addf %312, %317 : vector<8x128xf32>
    %319 = vector.extract_strided_slice %0 {offsets = [0, 0, 0], sizes = [1, 4, 128], strides = [1, 1, 1]} : vector<4x4x128xf32> to vector<1x4x128xf32>
    %320 = vector.shape_cast %319 : vector<1x4x128xf32> to vector<4x128xf32>
    %cst_126 = arith.constant 0.000000e+00 : f32
    %321 = vector.broadcast %cst_126 : f32 to vector<4x1xf32>
    %322 = vector.extract_strided_slice %320 {offsets = [0, 1], sizes = [4, 127], strides = [1, 1]} : vector<4x128xf32> to vector<4x127xf32>
    %323 = tpu.concatenate %322, %321 in 1 : vector<4x127xf32>, vector<4x1xf32> -> vector<4x128xf32>
    %cst_127 = arith.constant 0.000000e+00 : f32
    %324 = vector.broadcast %cst_127 : f32 to vector<4x128xf32>
    %325 = vector.shape_cast %17 : vector<1x128xi1> to vector<1x128xi1>
    %326 = vector.broadcast %325 : vector<1x128xi1> to vector<4x128xi1>
    %327 = arith.select %326, %323, %324 : vector<4x128xi1>, vector<4x128xf32>
    %328 = arith.truncf %327 : vector<4x128xf32> to vector<4x128xbf16>
    %c16_128 = arith.constant 16 : index
    %c0_129 = arith.constant 0 : index
    %329 = vector.load %arg2[%c16_128, %c0_129] : memref<72x4xbf16, #tpu.memory_space<vmem>>, vector<8x4xbf16>
    %cst_130 = arith.constant dense<0.000000e+00> : vector<8x128xf32>
    %330 = tpu.matmul %329, %328, %cst_130 {dimension_numbers = #tpu.dot_dimension_numbers<[1], [0], [0], [1], [0, 0, 1, 1], [], []>} : vector<8x4xbf16>, vector<4x128xbf16>, vector<8x128xf32> -> vector<8x128xf32>
    %331 = arith.addf %318, %330 : vector<8x128xf32>
    %332 = vector.extract_strided_slice %0 {offsets = [2, 0, 0], sizes = [1, 4, 128], strides = [1, 1, 1]} : vector<4x4x128xf32> to vector<1x4x128xf32>
    %333 = vector.shape_cast %332 : vector<1x4x128xf32> to vector<4x128xf32>
    %334 = arith.truncf %333 : vector<4x128xf32> to vector<4x128xbf16>
    %c24_131 = arith.constant 24 : index
    %c0_132 = arith.constant 0 : index
    %335 = vector.load %arg2[%c24_131, %c0_132] : memref<72x4xbf16, #tpu.memory_space<vmem>>, vector<8x4xbf16>
    %cst_133 = arith.constant dense<0.000000e+00> : vector<8x128xf32>
    %336 = tpu.matmul %335, %334, %cst_133 {dimension_numbers = #tpu.dot_dimension_numbers<[1], [0], [0], [1], [0, 0, 1, 1], [], []>} : vector<8x4xbf16>, vector<4x128xbf16>, vector<8x128xf32> -> vector<8x128xf32>
    %337 = arith.addf %331, %336 : vector<8x128xf32>
    %338 = vector.extract_strided_slice %0 {offsets = [3, 0, 0], sizes = [1, 4, 128], strides = [1, 1, 1]} : vector<4x4x128xf32> to vector<1x4x128xf32>
    %339 = vector.shape_cast %338 : vector<1x4x128xf32> to vector<4x128xf32>
    %340 = arith.truncf %339 : vector<4x128xf32> to vector<4x128xbf16>
    %c32_134 = arith.constant 32 : index
    %c0_135 = arith.constant 0 : index
    %341 = vector.load %arg2[%c32_134, %c0_135] : memref<72x4xbf16, #tpu.memory_space<vmem>>, vector<8x4xbf16>
    %cst_136 = arith.constant dense<0.000000e+00> : vector<8x128xf32>
    %342 = tpu.matmul %341, %340, %cst_136 {dimension_numbers = #tpu.dot_dimension_numbers<[1], [0], [0], [1], [0, 0, 1, 1], [], []>} : vector<8x4xbf16>, vector<4x128xbf16>, vector<8x128xf32> -> vector<8x128xf32>
    %343 = arith.addf %337, %342 : vector<8x128xf32>
    %344 = vector.extract_strided_slice %0 {offsets = [2, 0, 0], sizes = [1, 4, 128], strides = [1, 1, 1]} : vector<4x4x128xf32> to vector<1x4x128xf32>
    %345 = vector.shape_cast %344 : vector<1x4x128xf32> to vector<4x128xf32>
    %cst_137 = arith.constant 0.000000e+00 : f32
    %346 = vector.broadcast %cst_137 : f32 to vector<4x1xf32>
    %347 = vector.extract_strided_slice %345 {offsets = [0, 1], sizes = [4, 127], strides = [1, 1]} : vector<4x128xf32> to vector<4x127xf32>
    %348 = tpu.concatenate %347, %346 in 1 : vector<4x127xf32>, vector<4x1xf32> -> vector<4x128xf32>
    %cst_138 = arith.constant 0.000000e+00 : f32
    %349 = vector.broadcast %cst_138 : f32 to vector<4x128xf32>
    %350 = vector.shape_cast %17 : vector<1x128xi1> to vector<1x128xi1>
    %351 = vector.broadcast %350 : vector<1x128xi1> to vector<4x128xi1>
    %352 = arith.select %351, %348, %349 : vector<4x128xi1>, vector<4x128xf32>
    %353 = arith.truncf %352 : vector<4x128xf32> to vector<4x128xbf16>
    %c40_139 = arith.constant 40 : index
    %c0_140 = arith.constant 0 : index
    %354 = vector.load %arg2[%c40_139, %c0_140] : memref<72x4xbf16, #tpu.memory_space<vmem>>, vector<8x4xbf16>
    %cst_141 = arith.constant dense<0.000000e+00> : vector<8x128xf32>
    %355 = tpu.matmul %354, %353, %cst_141 {dimension_numbers = #tpu.dot_dimension_numbers<[1], [0], [0], [1], [0, 0, 1, 1], [], []>} : vector<8x4xbf16>, vector<4x128xbf16>, vector<8x128xf32> -> vector<8x128xf32>
    %356 = arith.addf %343, %355 : vector<8x128xf32>
    %357 = vector.extract_strided_slice %0 {offsets = [0, 0, 0], sizes = [1, 4, 128], strides = [1, 1, 1]} : vector<4x4x128xf32> to vector<1x4x128xf32>
    %358 = vector.shape_cast %357 : vector<1x4x128xf32> to vector<4x128xf32>
    %cst_142 = arith.constant 0.000000e+00 : f32
    %359 = vector.broadcast %cst_142 : f32 to vector<4x8xf32>
    %360 = vector.extract_strided_slice %358 {offsets = [0, 8], sizes = [4, 120], strides = [1, 1]} : vector<4x128xf32> to vector<4x120xf32>
    %361 = tpu.concatenate %360, %359 in 1 : vector<4x120xf32>, vector<4x8xf32> -> vector<4x128xf32>
    %cst_143 = arith.constant 0.000000e+00 : f32
    %362 = vector.broadcast %cst_143 : f32 to vector<4x128xf32>
    %363 = vector.shape_cast %23 : vector<1x128xi1> to vector<1x128xi1>
    %364 = vector.broadcast %363 : vector<1x128xi1> to vector<4x128xi1>
    %365 = arith.select %364, %361, %362 : vector<4x128xi1>, vector<4x128xf32>
    %366 = arith.truncf %365 : vector<4x128xf32> to vector<4x128xbf16>
    %c48_144 = arith.constant 48 : index
    %c0_145 = arith.constant 0 : index
    %367 = vector.load %arg2[%c48_144, %c0_145] : memref<72x4xbf16, #tpu.memory_space<vmem>>, vector<8x4xbf16>
    %cst_146 = arith.constant dense<0.000000e+00> : vector<8x128xf32>
    %368 = tpu.matmul %367, %366, %cst_146 {dimension_numbers = #tpu.dot_dimension_numbers<[1], [0], [0], [1], [0, 0, 1, 1], [], []>} : vector<8x4xbf16>, vector<4x128xbf16>, vector<8x128xf32> -> vector<8x128xf32>
    %369 = arith.addf %356, %368 : vector<8x128xf32>
    %370 = vector.extract_strided_slice %0 {offsets = [1, 0, 0], sizes = [1, 4, 128], strides = [1, 1, 1]} : vector<4x4x128xf32> to vector<1x4x128xf32>
    %371 = vector.shape_cast %370 : vector<1x4x128xf32> to vector<4x128xf32>
    %cst_147 = arith.constant 0.000000e+00 : f32
    %372 = vector.broadcast %cst_147 : f32 to vector<4x8xf32>
    %373 = vector.extract_strided_slice %371 {offsets = [0, 8], sizes = [4, 120], strides = [1, 1]} : vector<4x128xf32> to vector<4x120xf32>
    %374 = tpu.concatenate %373, %372 in 1 : vector<4x120xf32>, vector<4x8xf32> -> vector<4x128xf32>
    %cst_148 = arith.constant 0.000000e+00 : f32
    %375 = vector.broadcast %cst_148 : f32 to vector<4x128xf32>
    %376 = vector.shape_cast %23 : vector<1x128xi1> to vector<1x128xi1>
    %377 = vector.broadcast %376 : vector<1x128xi1> to vector<4x128xi1>
    %378 = arith.select %377, %374, %375 : vector<4x128xi1>, vector<4x128xf32>
    %379 = arith.truncf %378 : vector<4x128xf32> to vector<4x128xbf16>
    %c56_149 = arith.constant 56 : index
    %c0_150 = arith.constant 0 : index
    %380 = vector.load %arg2[%c56_149, %c0_150] : memref<72x4xbf16, #tpu.memory_space<vmem>>, vector<8x4xbf16>
    %cst_151 = arith.constant dense<0.000000e+00> : vector<8x128xf32>
    %381 = tpu.matmul %380, %379, %cst_151 {dimension_numbers = #tpu.dot_dimension_numbers<[1], [0], [0], [1], [0, 0, 1, 1], [], []>} : vector<8x4xbf16>, vector<4x128xbf16>, vector<8x128xf32> -> vector<8x128xf32>
    %382 = arith.addf %369, %381 : vector<8x128xf32>
    %383 = vector.extract_strided_slice %0 {offsets = [0, 0, 0], sizes = [1, 4, 128], strides = [1, 1, 1]} : vector<4x4x128xf32> to vector<1x4x128xf32>
    %384 = vector.shape_cast %383 : vector<1x4x128xf32> to vector<4x128xf32>
    %cst_152 = arith.constant 0.000000e+00 : f32
    %385 = vector.broadcast %cst_152 : f32 to vector<4x9xf32>
    %386 = vector.extract_strided_slice %384 {offsets = [0, 9], sizes = [4, 119], strides = [1, 1]} : vector<4x128xf32> to vector<4x119xf32>
    %387 = tpu.concatenate %386, %385 in 1 : vector<4x119xf32>, vector<4x9xf32> -> vector<4x128xf32>
    %cst_153 = arith.constant 0.000000e+00 : f32
    %388 = vector.broadcast %cst_153 : f32 to vector<4x128xf32>
    %389 = vector.shape_cast %26 : vector<1x128xi1> to vector<1x128xi1>
    %390 = vector.broadcast %389 : vector<1x128xi1> to vector<4x128xi1>
    %391 = arith.select %390, %387, %388 : vector<4x128xi1>, vector<4x128xf32>
    %392 = arith.truncf %391 : vector<4x128xf32> to vector<4x128xbf16>
    %c64_154 = arith.constant 64 : index
    %c0_155 = arith.constant 0 : index
    %393 = vector.load %arg2[%c64_154, %c0_155] : memref<72x4xbf16, #tpu.memory_space<vmem>>, vector<8x4xbf16>
    %cst_156 = arith.constant dense<0.000000e+00> : vector<8x128xf32>
    %394 = tpu.matmul %393, %392, %cst_156 {dimension_numbers = #tpu.dot_dimension_numbers<[1], [0], [0], [1], [0, 0, 1, 1], [], []>} : vector<8x4xbf16>, vector<4x128xbf16>, vector<8x128xf32> -> vector<8x128xf32>
    %395 = arith.addf %382, %394 : vector<8x128xf32>
    %396 = vector.extract_strided_slice %1 {offsets = [0, 0], sizes = [8, 1], strides = [1, 1]} : vector<8x5xf32> to vector<8x1xf32>
    %397 = vector.broadcast %396 : vector<8x1xf32> to vector<8x128xf32>
    %398 = arith.addf %395, %397 : vector<8x128xf32>
    %399 = arith.maximumf %119, %212 : vector<8x128xf32>
    %400 = arith.maximumf %305, %398 : vector<8x128xf32>
    %401 = arith.maximumf %399, %400 : vector<8x128xf32>
    %402 = arith.maximumf %212, %398 : vector<8x128xf32>
    %cst_157 = arith.constant 0.000000e+00 : f32
    %403 = vector.broadcast %cst_157 : f32 to vector<8x1xf32>
    %404 = vector.extract_strided_slice %402 {offsets = [0, 0], sizes = [8, 127], strides = [1, 1]} : vector<8x128xf32> to vector<8x127xf32>
    %405 = tpu.concatenate %403, %404 in 1 : vector<8x1xf32>, vector<8x127xf32> -> vector<8x128xf32>
    %cst_158 = arith.constant -3.40282347E+38 : f32
    %406 = vector.shape_cast %14 : vector<1x128xi1> to vector<1x128xi1>
    %407 = vector.broadcast %406 : vector<1x128xi1> to vector<8x128xi1>
    %408 = vector.broadcast %cst_158 : f32 to vector<8x128xf32>
    %409 = arith.select %407, %405, %408 : vector<8x128xi1>, vector<8x128xf32>
    %410 = arith.maximumf %305, %398 : vector<8x128xf32>
    %cst_159 = arith.constant 0.000000e+00 : f32
    %411 = vector.broadcast %cst_159 : f32 to vector<8x8xf32>
    %412 = vector.extract_strided_slice %410 {offsets = [0, 0], sizes = [8, 120], strides = [1, 1]} : vector<8x128xf32> to vector<8x120xf32>
    %413 = tpu.concatenate %411, %412 in 1 : vector<8x8xf32>, vector<8x120xf32> -> vector<8x128xf32>
    %cst_160 = arith.constant -3.40282347E+38 : f32
    %414 = vector.shape_cast %8 : vector<1x128xi1> to vector<1x128xi1>
    %415 = vector.broadcast %414 : vector<1x128xi1> to vector<8x128xi1>
    %416 = vector.broadcast %cst_160 : f32 to vector<8x128xf32>
    %417 = arith.select %415, %413, %416 : vector<8x128xi1>, vector<8x128xf32>
    %cst_161 = arith.constant 0.000000e+00 : f32
    %418 = vector.broadcast %cst_161 : f32 to vector<8x9xf32>
    %419 = vector.extract_strided_slice %398 {offsets = [0, 0], sizes = [8, 119], strides = [1, 1]} : vector<8x128xf32> to vector<8x119xf32>
    %420 = tpu.concatenate %418, %419 in 1 : vector<8x9xf32>, vector<8x119xf32> -> vector<8x128xf32>
    %cst_162 = arith.constant -3.40282347E+38 : f32
    %421 = vector.shape_cast %5 : vector<1x128xi1> to vector<1x128xi1>
    %422 = vector.broadcast %421 : vector<1x128xi1> to vector<8x128xi1>
    %423 = vector.broadcast %cst_162 : f32 to vector<8x128xf32>
    %424 = arith.select %422, %420, %423 : vector<8x128xi1>, vector<8x128xf32>
    %425 = arith.maximumf %401, %409 : vector<8x128xf32>
    %426 = arith.maximumf %417, %424 : vector<8x128xf32>
    %427 = arith.maximumf %425, %426 : vector<8x128xf32>
    %cst_163 = arith.constant 0.000000e+00 : f32
    %428 = vector.broadcast %cst_163 : f32 to vector<8x128xf32>
    %429 = arith.maximumf %427, %428 : vector<8x128xf32>
    %cst_164 = arith.constant 0.000000e+00 : f32
    %430 = vector.broadcast %cst_164 : f32 to vector<8x128xf32>
    %cst_165 = arith.constant 0.000000e+00 : f32
    %431 = vector.broadcast %cst_165 : f32 to vector<8x9xf32>
    %432 = vector.extract_strided_slice %429 {offsets = [0, 0], sizes = [8, 119], strides = [1, 1]} : vector<8x128xf32> to vector<8x119xf32>
    %433 = tpu.concatenate %431, %432 in 1 : vector<8x9xf32>, vector<8x119xf32> -> vector<8x128xf32>
    %cst_166 = arith.constant 0.000000e+00 : f32
    %434 = vector.broadcast %cst_166 : f32 to vector<8x128xf32>
    %435 = vector.shape_cast %5 : vector<1x128xi1> to vector<1x128xi1>
    %436 = vector.broadcast %435 : vector<1x128xi1> to vector<8x128xi1>
    %437 = arith.select %436, %433, %434 : vector<8x128xi1>, vector<8x128xf32>
    %438 = arith.truncf %437 : vector<8x128xf32> to vector<8x128xbf16>
    %c0_167 = arith.constant 0 : index
    %c0_168 = arith.constant 0 : index
    %439 = vector.load %arg3[%c0_167, %c0_168] : memref<288x8xbf16, #tpu.memory_space<vmem>>, vector<8x8xbf16>
    %cst_169 = arith.constant dense<0.000000e+00> : vector<8x128xf32>
    %440 = tpu.matmul %439, %438, %cst_169 {dimension_numbers = #tpu.dot_dimension_numbers<[1], [0], [0], [1], [0, 0, 1, 1], [], []>} : vector<8x8xbf16>, vector<8x128xbf16>, vector<8x128xf32> -> vector<8x128xf32>
    %441 = arith.addf %430, %440 : vector<8x128xf32>
    %cst_170 = arith.constant 0.000000e+00 : f32
    %442 = vector.broadcast %cst_170 : f32 to vector<8x8xf32>
    %443 = vector.extract_strided_slice %429 {offsets = [0, 0], sizes = [8, 120], strides = [1, 1]} : vector<8x128xf32> to vector<8x120xf32>
    %444 = tpu.concatenate %442, %443 in 1 : vector<8x8xf32>, vector<8x120xf32> -> vector<8x128xf32>
    %cst_171 = arith.constant 0.000000e+00 : f32
    %445 = vector.broadcast %cst_171 : f32 to vector<8x128xf32>
    %446 = vector.shape_cast %8 : vector<1x128xi1> to vector<1x128xi1>
    %447 = vector.broadcast %446 : vector<1x128xi1> to vector<8x128xi1>
    %448 = arith.select %447, %444, %445 : vector<8x128xi1>, vector<8x128xf32>
    %449 = arith.truncf %448 : vector<8x128xf32> to vector<8x128xbf16>
    %c8_172 = arith.constant 8 : index
    %c0_173 = arith.constant 0 : index
    %450 = vector.load %arg3[%c8_172, %c0_173] : memref<288x8xbf16, #tpu.memory_space<vmem>>, vector<8x8xbf16>
    %cst_174 = arith.constant dense<0.000000e+00> : vector<8x128xf32>
    %451 = tpu.matmul %450, %449, %cst_174 {dimension_numbers = #tpu.dot_dimension_numbers<[1], [0], [0], [1], [0, 0, 1, 1], [], []>} : vector<8x8xbf16>, vector<8x128xbf16>, vector<8x128xf32> -> vector<8x128xf32>
    %452 = arith.addf %441, %451 : vector<8x128xf32>
    %cst_175 = arith.constant 0.000000e+00 : f32
    %453 = vector.broadcast %cst_175 : f32 to vector<8x7xf32>
    %454 = vector.extract_strided_slice %429 {offsets = [0, 0], sizes = [8, 121], strides = [1, 1]} : vector<8x128xf32> to vector<8x121xf32>
    %455 = tpu.concatenate %453, %454 in 1 : vector<8x7xf32>, vector<8x121xf32> -> vector<8x128xf32>
    %cst_176 = arith.constant 0.000000e+00 : f32
    %456 = vector.broadcast %cst_176 : f32 to vector<8x128xf32>
    %457 = vector.shape_cast %11 : vector<1x128xi1> to vector<1x128xi1>
    %458 = vector.broadcast %457 : vector<1x128xi1> to vector<8x128xi1>
    %459 = arith.select %458, %455, %456 : vector<8x128xi1>, vector<8x128xf32>
    %460 = arith.truncf %459 : vector<8x128xf32> to vector<8x128xbf16>
    %c16_177 = arith.constant 16 : index
    %c0_178 = arith.constant 0 : index
    %461 = vector.load %arg3[%c16_177, %c0_178] : memref<288x8xbf16, #tpu.memory_space<vmem>>, vector<8x8xbf16>
    %cst_179 = arith.constant dense<0.000000e+00> : vector<8x128xf32>
    %462 = tpu.matmul %461, %460, %cst_179 {dimension_numbers = #tpu.dot_dimension_numbers<[1], [0], [0], [1], [0, 0, 1, 1], [], []>} : vector<8x8xbf16>, vector<8x128xbf16>, vector<8x128xf32> -> vector<8x128xf32>
    %463 = arith.addf %452, %462 : vector<8x128xf32>
    %cst_180 = arith.constant 0.000000e+00 : f32
    %464 = vector.broadcast %cst_180 : f32 to vector<8x1xf32>
    %465 = vector.extract_strided_slice %429 {offsets = [0, 0], sizes = [8, 127], strides = [1, 1]} : vector<8x128xf32> to vector<8x127xf32>
    %466 = tpu.concatenate %464, %465 in 1 : vector<8x1xf32>, vector<8x127xf32> -> vector<8x128xf32>
    %cst_181 = arith.constant 0.000000e+00 : f32
    %467 = vector.broadcast %cst_181 : f32 to vector<8x128xf32>
    %468 = vector.shape_cast %14 : vector<1x128xi1> to vector<1x128xi1>
    %469 = vector.broadcast %468 : vector<1x128xi1> to vector<8x128xi1>
    %470 = arith.select %469, %466, %467 : vector<8x128xi1>, vector<8x128xf32>
    %471 = arith.truncf %470 : vector<8x128xf32> to vector<8x128xbf16>
    %c24_182 = arith.constant 24 : index
    %c0_183 = arith.constant 0 : index
    %472 = vector.load %arg3[%c24_182, %c0_183] : memref<288x8xbf16, #tpu.memory_space<vmem>>, vector<8x8xbf16>
    %cst_184 = arith.constant dense<0.000000e+00> : vector<8x128xf32>
    %473 = tpu.matmul %472, %471, %cst_184 {dimension_numbers = #tpu.dot_dimension_numbers<[1], [0], [0], [1], [0, 0, 1, 1], [], []>} : vector<8x8xbf16>, vector<8x128xbf16>, vector<8x128xf32> -> vector<8x128xf32>
    %474 = arith.addf %463, %473 : vector<8x128xf32>
    %475 = arith.truncf %429 : vector<8x128xf32> to vector<8x128xbf16>
    %c32_185 = arith.constant 32 : index
    %c0_186 = arith.constant 0 : index
    %476 = vector.load %arg3[%c32_185, %c0_186] : memref<288x8xbf16, #tpu.memory_space<vmem>>, vector<8x8xbf16>
    %cst_187 = arith.constant dense<0.000000e+00> : vector<8x128xf32>
    %477 = tpu.matmul %476, %475, %cst_187 {dimension_numbers = #tpu.dot_dimension_numbers<[1], [0], [0], [1], [0, 0, 1, 1], [], []>} : vector<8x8xbf16>, vector<8x128xbf16>, vector<8x128xf32> -> vector<8x128xf32>
    %478 = arith.addf %474, %477 : vector<8x128xf32>
    %cst_188 = arith.constant 0.000000e+00 : f32
    %479 = vector.broadcast %cst_188 : f32 to vector<8x1xf32>
    %480 = vector.extract_strided_slice %429 {offsets = [0, 1], sizes = [8, 127], strides = [1, 1]} : vector<8x128xf32> to vector<8x127xf32>
    %481 = tpu.concatenate %480, %479 in 1 : vector<8x127xf32>, vector<8x1xf32> -> vector<8x128xf32>
    %cst_189 = arith.constant 0.000000e+00 : f32
    %482 = vector.broadcast %cst_189 : f32 to vector<8x128xf32>
    %483 = vector.shape_cast %17 : vector<1x128xi1> to vector<1x128xi1>
    %484 = vector.broadcast %483 : vector<1x128xi1> to vector<8x128xi1>
    %485 = arith.select %484, %481, %482 : vector<8x128xi1>, vector<8x128xf32>
    %486 = arith.truncf %485 : vector<8x128xf32> to vector<8x128xbf16>
    %c40_190 = arith.constant 40 : index
    %c0_191 = arith.constant 0 : index
    %487 = vector.load %arg3[%c40_190, %c0_191] : memref<288x8xbf16, #tpu.memory_space<vmem>>, vector<8x8xbf16>
    %cst_192 = arith.constant dense<0.000000e+00> : vector<8x128xf32>
    %488 = tpu.matmul %487, %486, %cst_192 {dimension_numbers = #tpu.dot_dimension_numbers<[1], [0], [0], [1], [0, 0, 1, 1], [], []>} : vector<8x8xbf16>, vector<8x128xbf16>, vector<8x128xf32> -> vector<8x128xf32>
    %489 = arith.addf %478, %488 : vector<8x128xf32>
    %cst_193 = arith.constant 0.000000e+00 : f32
    %490 = vector.broadcast %cst_193 : f32 to vector<8x7xf32>
    %491 = vector.extract_strided_slice %429 {offsets = [0, 7], sizes = [8, 121], strides = [1, 1]} : vector<8x128xf32> to vector<8x121xf32>
    %492 = tpu.concatenate %491, %490 in 1 : vector<8x121xf32>, vector<8x7xf32> -> vector<8x128xf32>
    %cst_194 = arith.constant 0.000000e+00 : f32
    %493 = vector.broadcast %cst_194 : f32 to vector<8x128xf32>
    %494 = vector.shape_cast %20 : vector<1x128xi1> to vector<1x128xi1>
    %495 = vector.broadcast %494 : vector<1x128xi1> to vector<8x128xi1>
    %496 = arith.select %495, %492, %493 : vector<8x128xi1>, vector<8x128xf32>
    %497 = arith.truncf %496 : vector<8x128xf32> to vector<8x128xbf16>
    %c48_195 = arith.constant 48 : index
    %c0_196 = arith.constant 0 : index
    %498 = vector.load %arg3[%c48_195, %c0_196] : memref<288x8xbf16, #tpu.memory_space<vmem>>, vector<8x8xbf16>
    %cst_197 = arith.constant dense<0.000000e+00> : vector<8x128xf32>
    %499 = tpu.matmul %498, %497, %cst_197 {dimension_numbers = #tpu.dot_dimension_numbers<[1], [0], [0], [1], [0, 0, 1, 1], [], []>} : vector<8x8xbf16>, vector<8x128xbf16>, vector<8x128xf32> -> vector<8x128xf32>
    %500 = arith.addf %489, %499 : vector<8x128xf32>
    %cst_198 = arith.constant 0.000000e+00 : f32
    %501 = vector.broadcast %cst_198 : f32 to vector<8x8xf32>
    %502 = vector.extract_strided_slice %429 {offsets = [0, 8], sizes = [8, 120], strides = [1, 1]} : vector<8x128xf32> to vector<8x120xf32>
    %503 = tpu.concatenate %502, %501 in 1 : vector<8x120xf32>, vector<8x8xf32> -> vector<8x128xf32>
    %cst_199 = arith.constant 0.000000e+00 : f32
    %504 = vector.broadcast %cst_199 : f32 to vector<8x128xf32>
    %505 = vector.shape_cast %23 : vector<1x128xi1> to vector<1x128xi1>
    %506 = vector.broadcast %505 : vector<1x128xi1> to vector<8x128xi1>
    %507 = arith.select %506, %503, %504 : vector<8x128xi1>, vector<8x128xf32>
    %508 = arith.truncf %507 : vector<8x128xf32> to vector<8x128xbf16>
    %c56_200 = arith.constant 56 : index
    %c0_201 = arith.constant 0 : index
    %509 = vector.load %arg3[%c56_200, %c0_201] : memref<288x8xbf16, #tpu.memory_space<vmem>>, vector<8x8xbf16>
    %cst_202 = arith.constant dense<0.000000e+00> : vector<8x128xf32>
    %510 = tpu.matmul %509, %508, %cst_202 {dimension_numbers = #tpu.dot_dimension_numbers<[1], [0], [0], [1], [0, 0, 1, 1], [], []>} : vector<8x8xbf16>, vector<8x128xbf16>, vector<8x128xf32> -> vector<8x128xf32>
    %511 = arith.addf %500, %510 : vector<8x128xf32>
    %cst_203 = arith.constant 0.000000e+00 : f32
    %512 = vector.broadcast %cst_203 : f32 to vector<8x9xf32>
    %513 = vector.extract_strided_slice %429 {offsets = [0, 9], sizes = [8, 119], strides = [1, 1]} : vector<8x128xf32> to vector<8x119xf32>
    %514 = tpu.concatenate %513, %512 in 1 : vector<8x119xf32>, vector<8x9xf32> -> vector<8x128xf32>
    %cst_204 = arith.constant 0.000000e+00 : f32
    %515 = vector.broadcast %cst_204 : f32 to vector<8x128xf32>
    %516 = vector.shape_cast %26 : vector<1x128xi1> to vector<1x128xi1>
    %517 = vector.broadcast %516 : vector<1x128xi1> to vector<8x128xi1>
    %518 = arith.select %517, %514, %515 : vector<8x128xi1>, vector<8x128xf32>
    %519 = arith.truncf %518 : vector<8x128xf32> to vector<8x128xbf16>
    %c64_205 = arith.constant 64 : index
    %c0_206 = arith.constant 0 : index
    %520 = vector.load %arg3[%c64_205, %c0_206] : memref<288x8xbf16, #tpu.memory_space<vmem>>, vector<8x8xbf16>
    %cst_207 = arith.constant dense<0.000000e+00> : vector<8x128xf32>
    %521 = tpu.matmul %520, %519, %cst_207 {dimension_numbers = #tpu.dot_dimension_numbers<[1], [0], [0], [1], [0, 0, 1, 1], [], []>} : vector<8x8xbf16>, vector<8x128xbf16>, vector<8x128xf32> -> vector<8x128xf32>
    %522 = arith.addf %511, %521 : vector<8x128xf32>
    %523 = vector.extract_strided_slice %1 {offsets = [0, 1], sizes = [8, 1], strides = [1, 1]} : vector<8x5xf32> to vector<8x1xf32>
    %524 = vector.broadcast %523 : vector<8x1xf32> to vector<8x128xf32>
    %525 = arith.addf %522, %524 : vector<8x128xf32>
    %cst_208 = arith.constant 0.000000e+00 : f32
    %526 = vector.broadcast %cst_208 : f32 to vector<8x128xf32>
    %527 = arith.maximumf %525, %526 : vector<8x128xf32>
    %cst_209 = arith.constant 0.000000e+00 : f32
    %528 = vector.broadcast %cst_209 : f32 to vector<8x128xf32>
    %cst_210 = arith.constant 0.000000e+00 : f32
    %529 = vector.broadcast %cst_210 : f32 to vector<8x9xf32>
    %530 = vector.extract_strided_slice %527 {offsets = [0, 0], sizes = [8, 119], strides = [1, 1]} : vector<8x128xf32> to vector<8x119xf32>
    %531 = tpu.concatenate %529, %530 in 1 : vector<8x9xf32>, vector<8x119xf32> -> vector<8x128xf32>
    %cst_211 = arith.constant 0.000000e+00 : f32
    %532 = vector.broadcast %cst_211 : f32 to vector<8x128xf32>
    %533 = vector.shape_cast %5 : vector<1x128xi1> to vector<1x128xi1>
    %534 = vector.broadcast %533 : vector<1x128xi1> to vector<8x128xi1>
    %535 = arith.select %534, %531, %532 : vector<8x128xi1>, vector<8x128xf32>
    %536 = arith.truncf %535 : vector<8x128xf32> to vector<8x128xbf16>
    %c72 = arith.constant 72 : index
    %c0_212 = arith.constant 0 : index
    %537 = vector.load %arg3[%c72, %c0_212] : memref<288x8xbf16, #tpu.memory_space<vmem>>, vector<8x8xbf16>
    %cst_213 = arith.constant dense<0.000000e+00> : vector<8x128xf32>
    %538 = tpu.matmul %537, %536, %cst_213 {dimension_numbers = #tpu.dot_dimension_numbers<[1], [0], [0], [1], [0, 0, 1, 1], [], []>} : vector<8x8xbf16>, vector<8x128xbf16>, vector<8x128xf32> -> vector<8x128xf32>
    %539 = arith.addf %528, %538 : vector<8x128xf32>
    %cst_214 = arith.constant 0.000000e+00 : f32
    %540 = vector.broadcast %cst_214 : f32 to vector<8x8xf32>
    %541 = vector.extract_strided_slice %527 {offsets = [0, 0], sizes = [8, 120], strides = [1, 1]} : vector<8x128xf32> to vector<8x120xf32>
    %542 = tpu.concatenate %540, %541 in 1 : vector<8x8xf32>, vector<8x120xf32> -> vector<8x128xf32>
    %cst_215 = arith.constant 0.000000e+00 : f32
    %543 = vector.broadcast %cst_215 : f32 to vector<8x128xf32>
    %544 = vector.shape_cast %8 : vector<1x128xi1> to vector<1x128xi1>
    %545 = vector.broadcast %544 : vector<1x128xi1> to vector<8x128xi1>
    %546 = arith.select %545, %542, %543 : vector<8x128xi1>, vector<8x128xf32>
    %547 = arith.truncf %546 : vector<8x128xf32> to vector<8x128xbf16>
    %c80 = arith.constant 80 : index
    %c0_216 = arith.constant 0 : index
    %548 = vector.load %arg3[%c80, %c0_216] : memref<288x8xbf16, #tpu.memory_space<vmem>>, vector<8x8xbf16>
    %cst_217 = arith.constant dense<0.000000e+00> : vector<8x128xf32>
    %549 = tpu.matmul %548, %547, %cst_217 {dimension_numbers = #tpu.dot_dimension_numbers<[1], [0], [0], [1], [0, 0, 1, 1], [], []>} : vector<8x8xbf16>, vector<8x128xbf16>, vector<8x128xf32> -> vector<8x128xf32>
    %550 = arith.addf %539, %549 : vector<8x128xf32>
    %cst_218 = arith.constant 0.000000e+00 : f32
    %551 = vector.broadcast %cst_218 : f32 to vector<8x7xf32>
    %552 = vector.extract_strided_slice %527 {offsets = [0, 0], sizes = [8, 121], strides = [1, 1]} : vector<8x128xf32> to vector<8x121xf32>
    %553 = tpu.concatenate %551, %552 in 1 : vector<8x7xf32>, vector<8x121xf32> -> vector<8x128xf32>
    %cst_219 = arith.constant 0.000000e+00 : f32
    %554 = vector.broadcast %cst_219 : f32 to vector<8x128xf32>
    %555 = vector.shape_cast %11 : vector<1x128xi1> to vector<1x128xi1>
    %556 = vector.broadcast %555 : vector<1x128xi1> to vector<8x128xi1>
    %557 = arith.select %556, %553, %554 : vector<8x128xi1>, vector<8x128xf32>
    %558 = arith.truncf %557 : vector<8x128xf32> to vector<8x128xbf16>
    %c88 = arith.constant 88 : index
    %c0_220 = arith.constant 0 : index
    %559 = vector.load %arg3[%c88, %c0_220] : memref<288x8xbf16, #tpu.memory_space<vmem>>, vector<8x8xbf16>
    %cst_221 = arith.constant dense<0.000000e+00> : vector<8x128xf32>
    %560 = tpu.matmul %559, %558, %cst_221 {dimension_numbers = #tpu.dot_dimension_numbers<[1], [0], [0], [1], [0, 0, 1, 1], [], []>} : vector<8x8xbf16>, vector<8x128xbf16>, vector<8x128xf32> -> vector<8x128xf32>
    %561 = arith.addf %550, %560 : vector<8x128xf32>
    %cst_222 = arith.constant 0.000000e+00 : f32
    %562 = vector.broadcast %cst_222 : f32 to vector<8x1xf32>
    %563 = vector.extract_strided_slice %527 {offsets = [0, 0], sizes = [8, 127], strides = [1, 1]} : vector<8x128xf32> to vector<8x127xf32>
    %564 = tpu.concatenate %562, %563 in 1 : vector<8x1xf32>, vector<8x127xf32> -> vector<8x128xf32>
    %cst_223 = arith.constant 0.000000e+00 : f32
    %565 = vector.broadcast %cst_223 : f32 to vector<8x128xf32>
    %566 = vector.shape_cast %14 : vector<1x128xi1> to vector<1x128xi1>
    %567 = vector.broadcast %566 : vector<1x128xi1> to vector<8x128xi1>
    %568 = arith.select %567, %564, %565 : vector<8x128xi1>, vector<8x128xf32>
    %569 = arith.truncf %568 : vector<8x128xf32> to vector<8x128xbf16>
    %c96 = arith.constant 96 : index
    %c0_224 = arith.constant 0 : index
    %570 = vector.load %arg3[%c96, %c0_224] : memref<288x8xbf16, #tpu.memory_space<vmem>>, vector<8x8xbf16>
    %cst_225 = arith.constant dense<0.000000e+00> : vector<8x128xf32>
    %571 = tpu.matmul %570, %569, %cst_225 {dimension_numbers = #tpu.dot_dimension_numbers<[1], [0], [0], [1], [0, 0, 1, 1], [], []>} : vector<8x8xbf16>, vector<8x128xbf16>, vector<8x128xf32> -> vector<8x128xf32>
    %572 = arith.addf %561, %571 : vector<8x128xf32>
    %573 = arith.truncf %527 : vector<8x128xf32> to vector<8x128xbf16>
    %c104 = arith.constant 104 : index
    %c0_226 = arith.constant 0 : index
    %574 = vector.load %arg3[%c104, %c0_226] : memref<288x8xbf16, #tpu.memory_space<vmem>>, vector<8x8xbf16>
    %cst_227 = arith.constant dense<0.000000e+00> : vector<8x128xf32>
    %575 = tpu.matmul %574, %573, %cst_227 {dimension_numbers = #tpu.dot_dimension_numbers<[1], [0], [0], [1], [0, 0, 1, 1], [], []>} : vector<8x8xbf16>, vector<8x128xbf16>, vector<8x128xf32> -> vector<8x128xf32>
    %576 = arith.addf %572, %575 : vector<8x128xf32>
    %cst_228 = arith.constant 0.000000e+00 : f32
    %577 = vector.broadcast %cst_228 : f32 to vector<8x1xf32>
    %578 = vector.extract_strided_slice %527 {offsets = [0, 1], sizes = [8, 127], strides = [1, 1]} : vector<8x128xf32> to vector<8x127xf32>
    %579 = tpu.concatenate %578, %577 in 1 : vector<8x127xf32>, vector<8x1xf32> -> vector<8x128xf32>
    %cst_229 = arith.constant 0.000000e+00 : f32
    %580 = vector.broadcast %cst_229 : f32 to vector<8x128xf32>
    %581 = vector.shape_cast %17 : vector<1x128xi1> to vector<1x128xi1>
    %582 = vector.broadcast %581 : vector<1x128xi1> to vector<8x128xi1>
    %583 = arith.select %582, %579, %580 : vector<8x128xi1>, vector<8x128xf32>
    %584 = arith.truncf %583 : vector<8x128xf32> to vector<8x128xbf16>
    %c112 = arith.constant 112 : index
    %c0_230 = arith.constant 0 : index
    %585 = vector.load %arg3[%c112, %c0_230] : memref<288x8xbf16, #tpu.memory_space<vmem>>, vector<8x8xbf16>
    %cst_231 = arith.constant dense<0.000000e+00> : vector<8x128xf32>
    %586 = tpu.matmul %585, %584, %cst_231 {dimension_numbers = #tpu.dot_dimension_numbers<[1], [0], [0], [1], [0, 0, 1, 1], [], []>} : vector<8x8xbf16>, vector<8x128xbf16>, vector<8x128xf32> -> vector<8x128xf32>
    %587 = arith.addf %576, %586 : vector<8x128xf32>
    %cst_232 = arith.constant 0.000000e+00 : f32
    %588 = vector.broadcast %cst_232 : f32 to vector<8x7xf32>
    %589 = vector.extract_strided_slice %527 {offsets = [0, 7], sizes = [8, 121], strides = [1, 1]} : vector<8x128xf32> to vector<8x121xf32>
    %590 = tpu.concatenate %589, %588 in 1 : vector<8x121xf32>, vector<8x7xf32> -> vector<8x128xf32>
    %cst_233 = arith.constant 0.000000e+00 : f32
    %591 = vector.broadcast %cst_233 : f32 to vector<8x128xf32>
    %592 = vector.shape_cast %20 : vector<1x128xi1> to vector<1x128xi1>
    %593 = vector.broadcast %592 : vector<1x128xi1> to vector<8x128xi1>
    %594 = arith.select %593, %590, %591 : vector<8x128xi1>, vector<8x128xf32>
    %595 = arith.truncf %594 : vector<8x128xf32> to vector<8x128xbf16>
    %c120 = arith.constant 120 : index
    %c0_234 = arith.constant 0 : index
    %596 = vector.load %arg3[%c120, %c0_234] : memref<288x8xbf16, #tpu.memory_space<vmem>>, vector<8x8xbf16>
    %cst_235 = arith.constant dense<0.000000e+00> : vector<8x128xf32>
    %597 = tpu.matmul %596, %595, %cst_235 {dimension_numbers = #tpu.dot_dimension_numbers<[1], [0], [0], [1], [0, 0, 1, 1], [], []>} : vector<8x8xbf16>, vector<8x128xbf16>, vector<8x128xf32> -> vector<8x128xf32>
    %598 = arith.addf %587, %597 : vector<8x128xf32>
    %cst_236 = arith.constant 0.000000e+00 : f32
    %599 = vector.broadcast %cst_236 : f32 to vector<8x8xf32>
    %600 = vector.extract_strided_slice %527 {offsets = [0, 8], sizes = [8, 120], strides = [1, 1]} : vector<8x128xf32> to vector<8x120xf32>
    %601 = tpu.concatenate %600, %599 in 1 : vector<8x120xf32>, vector<8x8xf32> -> vector<8x128xf32>
    %cst_237 = arith.constant 0.000000e+00 : f32
    %602 = vector.broadcast %cst_237 : f32 to vector<8x128xf32>
    %603 = vector.shape_cast %23 : vector<1x128xi1> to vector<1x128xi1>
    %604 = vector.broadcast %603 : vector<1x128xi1> to vector<8x128xi1>
    %605 = arith.select %604, %601, %602 : vector<8x128xi1>, vector<8x128xf32>
    %606 = arith.truncf %605 : vector<8x128xf32> to vector<8x128xbf16>
    %c128 = arith.constant 128 : index
    %c0_238 = arith.constant 0 : index
    %607 = vector.load %arg3[%c128, %c0_238] : memref<288x8xbf16, #tpu.memory_space<vmem>>, vector<8x8xbf16>
    %cst_239 = arith.constant dense<0.000000e+00> : vector<8x128xf32>
    %608 = tpu.matmul %607, %606, %cst_239 {dimension_numbers = #tpu.dot_dimension_numbers<[1], [0], [0], [1], [0, 0, 1, 1], [], []>} : vector<8x8xbf16>, vector<8x128xbf16>, vector<8x128xf32> -> vector<8x128xf32>
    %609 = arith.addf %598, %608 : vector<8x128xf32>
    %cst_240 = arith.constant 0.000000e+00 : f32
    %610 = vector.broadcast %cst_240 : f32 to vector<8x9xf32>
    %611 = vector.extract_strided_slice %527 {offsets = [0, 9], sizes = [8, 119], strides = [1, 1]} : vector<8x128xf32> to vector<8x119xf32>
    %612 = tpu.concatenate %611, %610 in 1 : vector<8x119xf32>, vector<8x9xf32> -> vector<8x128xf32>
    %cst_241 = arith.constant 0.000000e+00 : f32
    %613 = vector.broadcast %cst_241 : f32 to vector<8x128xf32>
    %614 = vector.shape_cast %26 : vector<1x128xi1> to vector<1x128xi1>
    %615 = vector.broadcast %614 : vector<1x128xi1> to vector<8x128xi1>
    %616 = arith.select %615, %612, %613 : vector<8x128xi1>, vector<8x128xf32>
    %617 = arith.truncf %616 : vector<8x128xf32> to vector<8x128xbf16>
    %c136 = arith.constant 136 : index
    %c0_242 = arith.constant 0 : index
    %618 = vector.load %arg3[%c136, %c0_242] : memref<288x8xbf16, #tpu.memory_space<vmem>>, vector<8x8xbf16>
    %cst_243 = arith.constant dense<0.000000e+00> : vector<8x128xf32>
    %619 = tpu.matmul %618, %617, %cst_243 {dimension_numbers = #tpu.dot_dimension_numbers<[1], [0], [0], [1], [0, 0, 1, 1], [], []>} : vector<8x8xbf16>, vector<8x128xbf16>, vector<8x128xf32> -> vector<8x128xf32>
    %620 = arith.addf %609, %619 : vector<8x128xf32>
    %621 = vector.extract_strided_slice %1 {offsets = [0, 2], sizes = [8, 1], strides = [1, 1]} : vector<8x5xf32> to vector<8x1xf32>
    %622 = vector.broadcast %621 : vector<8x1xf32> to vector<8x128xf32>
    %623 = arith.addf %620, %622 : vector<8x128xf32>
    %624 = arith.addf %427, %623 : vector<8x128xf32>
    %cst_244 = arith.constant 0.000000e+00 : f32
    %625 = vector.broadcast %cst_244 : f32 to vector<8x128xf32>
    %626 = arith.maximumf %624, %625 : vector<8x128xf32>
    %cst_245 = arith.constant 0.000000e+00 : f32
    %627 = vector.broadcast %cst_245 : f32 to vector<8x128xf32>
    %cst_246 = arith.constant 0.000000e+00 : f32
    %628 = vector.broadcast %cst_246 : f32 to vector<8x9xf32>
    %629 = vector.extract_strided_slice %626 {offsets = [0, 0], sizes = [8, 119], strides = [1, 1]} : vector<8x128xf32> to vector<8x119xf32>
    %630 = tpu.concatenate %628, %629 in 1 : vector<8x9xf32>, vector<8x119xf32> -> vector<8x128xf32>
    %cst_247 = arith.constant 0.000000e+00 : f32
    %631 = vector.broadcast %cst_247 : f32 to vector<8x128xf32>
    %632 = vector.shape_cast %5 : vector<1x128xi1> to vector<1x128xi1>
    %633 = vector.broadcast %632 : vector<1x128xi1> to vector<8x128xi1>
    %634 = arith.select %633, %630, %631 : vector<8x128xi1>, vector<8x128xf32>
    %635 = arith.truncf %634 : vector<8x128xf32> to vector<8x128xbf16>
    %c144 = arith.constant 144 : index
    %c0_248 = arith.constant 0 : index
    %636 = vector.load %arg3[%c144, %c0_248] : memref<288x8xbf16, #tpu.memory_space<vmem>>, vector<8x8xbf16>
    %cst_249 = arith.constant dense<0.000000e+00> : vector<8x128xf32>
    %637 = tpu.matmul %636, %635, %cst_249 {dimension_numbers = #tpu.dot_dimension_numbers<[1], [0], [0], [1], [0, 0, 1, 1], [], []>} : vector<8x8xbf16>, vector<8x128xbf16>, vector<8x128xf32> -> vector<8x128xf32>
    %638 = arith.addf %627, %637 : vector<8x128xf32>
    %cst_250 = arith.constant 0.000000e+00 : f32
    %639 = vector.broadcast %cst_250 : f32 to vector<8x8xf32>
    %640 = vector.extract_strided_slice %626 {offsets = [0, 0], sizes = [8, 120], strides = [1, 1]} : vector<8x128xf32> to vector<8x120xf32>
    %641 = tpu.concatenate %639, %640 in 1 : vector<8x8xf32>, vector<8x120xf32> -> vector<8x128xf32>
    %cst_251 = arith.constant 0.000000e+00 : f32
    %642 = vector.broadcast %cst_251 : f32 to vector<8x128xf32>
    %643 = vector.shape_cast %8 : vector<1x128xi1> to vector<1x128xi1>
    %644 = vector.broadcast %643 : vector<1x128xi1> to vector<8x128xi1>
    %645 = arith.select %644, %641, %642 : vector<8x128xi1>, vector<8x128xf32>
    %646 = arith.truncf %645 : vector<8x128xf32> to vector<8x128xbf16>
    %c152 = arith.constant 152 : index
    %c0_252 = arith.constant 0 : index
    %647 = vector.load %arg3[%c152, %c0_252] : memref<288x8xbf16, #tpu.memory_space<vmem>>, vector<8x8xbf16>
    %cst_253 = arith.constant dense<0.000000e+00> : vector<8x128xf32>
    %648 = tpu.matmul %647, %646, %cst_253 {dimension_numbers = #tpu.dot_dimension_numbers<[1], [0], [0], [1], [0, 0, 1, 1], [], []>} : vector<8x8xbf16>, vector<8x128xbf16>, vector<8x128xf32> -> vector<8x128xf32>
    %649 = arith.addf %638, %648 : vector<8x128xf32>
    %cst_254 = arith.constant 0.000000e+00 : f32
    %650 = vector.broadcast %cst_254 : f32 to vector<8x7xf32>
    %651 = vector.extract_strided_slice %626 {offsets = [0, 0], sizes = [8, 121], strides = [1, 1]} : vector<8x128xf32> to vector<8x121xf32>
    %652 = tpu.concatenate %650, %651 in 1 : vector<8x7xf32>, vector<8x121xf32> -> vector<8x128xf32>
    %cst_255 = arith.constant 0.000000e+00 : f32
    %653 = vector.broadcast %cst_255 : f32 to vector<8x128xf32>
    %654 = vector.shape_cast %11 : vector<1x128xi1> to vector<1x128xi1>
    %655 = vector.broadcast %654 : vector<1x128xi1> to vector<8x128xi1>
    %656 = arith.select %655, %652, %653 : vector<8x128xi1>, vector<8x128xf32>
    %657 = arith.truncf %656 : vector<8x128xf32> to vector<8x128xbf16>
    %c160 = arith.constant 160 : index
    %c0_256 = arith.constant 0 : index
    %658 = vector.load %arg3[%c160, %c0_256] : memref<288x8xbf16, #tpu.memory_space<vmem>>, vector<8x8xbf16>
    %cst_257 = arith.constant dense<0.000000e+00> : vector<8x128xf32>
    %659 = tpu.matmul %658, %657, %cst_257 {dimension_numbers = #tpu.dot_dimension_numbers<[1], [0], [0], [1], [0, 0, 1, 1], [], []>} : vector<8x8xbf16>, vector<8x128xbf16>, vector<8x128xf32> -> vector<8x128xf32>
    %660 = arith.addf %649, %659 : vector<8x128xf32>
    %cst_258 = arith.constant 0.000000e+00 : f32
    %661 = vector.broadcast %cst_258 : f32 to vector<8x1xf32>
    %662 = vector.extract_strided_slice %626 {offsets = [0, 0], sizes = [8, 127], strides = [1, 1]} : vector<8x128xf32> to vector<8x127xf32>
    %663 = tpu.concatenate %661, %662 in 1 : vector<8x1xf32>, vector<8x127xf32> -> vector<8x128xf32>
    %cst_259 = arith.constant 0.000000e+00 : f32
    %664 = vector.broadcast %cst_259 : f32 to vector<8x128xf32>
    %665 = vector.shape_cast %14 : vector<1x128xi1> to vector<1x128xi1>
    %666 = vector.broadcast %665 : vector<1x128xi1> to vector<8x128xi1>
    %667 = arith.select %666, %663, %664 : vector<8x128xi1>, vector<8x128xf32>
    %668 = arith.truncf %667 : vector<8x128xf32> to vector<8x128xbf16>
    %c168 = arith.constant 168 : index
    %c0_260 = arith.constant 0 : index
    %669 = vector.load %arg3[%c168, %c0_260] : memref<288x8xbf16, #tpu.memory_space<vmem>>, vector<8x8xbf16>
    %cst_261 = arith.constant dense<0.000000e+00> : vector<8x128xf32>
    %670 = tpu.matmul %669, %668, %cst_261 {dimension_numbers = #tpu.dot_dimension_numbers<[1], [0], [0], [1], [0, 0, 1, 1], [], []>} : vector<8x8xbf16>, vector<8x128xbf16>, vector<8x128xf32> -> vector<8x128xf32>
    %671 = arith.addf %660, %670 : vector<8x128xf32>
    %672 = arith.truncf %626 : vector<8x128xf32> to vector<8x128xbf16>
    %c176 = arith.constant 176 : index
    %c0_262 = arith.constant 0 : index
    %673 = vector.load %arg3[%c176, %c0_262] : memref<288x8xbf16, #tpu.memory_space<vmem>>, vector<8x8xbf16>
    %cst_263 = arith.constant dense<0.000000e+00> : vector<8x128xf32>
    %674 = tpu.matmul %673, %672, %cst_263 {dimension_numbers = #tpu.dot_dimension_numbers<[1], [0], [0], [1], [0, 0, 1, 1], [], []>} : vector<8x8xbf16>, vector<8x128xbf16>, vector<8x128xf32> -> vector<8x128xf32>
    %675 = arith.addf %671, %674 : vector<8x128xf32>
    %cst_264 = arith.constant 0.000000e+00 : f32
    %676 = vector.broadcast %cst_264 : f32 to vector<8x1xf32>
    %677 = vector.extract_strided_slice %626 {offsets = [0, 1], sizes = [8, 127], strides = [1, 1]} : vector<8x128xf32> to vector<8x127xf32>
    %678 = tpu.concatenate %677, %676 in 1 : vector<8x127xf32>, vector<8x1xf32> -> vector<8x128xf32>
    %cst_265 = arith.constant 0.000000e+00 : f32
    %679 = vector.broadcast %cst_265 : f32 to vector<8x128xf32>
    %680 = vector.shape_cast %17 : vector<1x128xi1> to vector<1x128xi1>
    %681 = vector.broadcast %680 : vector<1x128xi1> to vector<8x128xi1>
    %682 = arith.select %681, %678, %679 : vector<8x128xi1>, vector<8x128xf32>
    %683 = arith.truncf %682 : vector<8x128xf32> to vector<8x128xbf16>
    %c184 = arith.constant 184 : index
    %c0_266 = arith.constant 0 : index
    %684 = vector.load %arg3[%c184, %c0_266] : memref<288x8xbf16, #tpu.memory_space<vmem>>, vector<8x8xbf16>
    %cst_267 = arith.constant dense<0.000000e+00> : vector<8x128xf32>
    %685 = tpu.matmul %684, %683, %cst_267 {dimension_numbers = #tpu.dot_dimension_numbers<[1], [0], [0], [1], [0, 0, 1, 1], [], []>} : vector<8x8xbf16>, vector<8x128xbf16>, vector<8x128xf32> -> vector<8x128xf32>
    %686 = arith.addf %675, %685 : vector<8x128xf32>
    %cst_268 = arith.constant 0.000000e+00 : f32
    %687 = vector.broadcast %cst_268 : f32 to vector<8x7xf32>
    %688 = vector.extract_strided_slice %626 {offsets = [0, 7], sizes = [8, 121], strides = [1, 1]} : vector<8x128xf32> to vector<8x121xf32>
    %689 = tpu.concatenate %688, %687 in 1 : vector<8x121xf32>, vector<8x7xf32> -> vector<8x128xf32>
    %cst_269 = arith.constant 0.000000e+00 : f32
    %690 = vector.broadcast %cst_269 : f32 to vector<8x128xf32>
    %691 = vector.shape_cast %20 : vector<1x128xi1> to vector<1x128xi1>
    %692 = vector.broadcast %691 : vector<1x128xi1> to vector<8x128xi1>
    %693 = arith.select %692, %689, %690 : vector<8x128xi1>, vector<8x128xf32>
    %694 = arith.truncf %693 : vector<8x128xf32> to vector<8x128xbf16>
    %c192 = arith.constant 192 : index
    %c0_270 = arith.constant 0 : index
    %695 = vector.load %arg3[%c192, %c0_270] : memref<288x8xbf16, #tpu.memory_space<vmem>>, vector<8x8xbf16>
    %cst_271 = arith.constant dense<0.000000e+00> : vector<8x128xf32>
    %696 = tpu.matmul %695, %694, %cst_271 {dimension_numbers = #tpu.dot_dimension_numbers<[1], [0], [0], [1], [0, 0, 1, 1], [], []>} : vector<8x8xbf16>, vector<8x128xbf16>, vector<8x128xf32> -> vector<8x128xf32>
    %697 = arith.addf %686, %696 : vector<8x128xf32>
    %cst_272 = arith.constant 0.000000e+00 : f32
    %698 = vector.broadcast %cst_272 : f32 to vector<8x8xf32>
    %699 = vector.extract_strided_slice %626 {offsets = [0, 8], sizes = [8, 120], strides = [1, 1]} : vector<8x128xf32> to vector<8x120xf32>
    %700 = tpu.concatenate %699, %698 in 1 : vector<8x120xf32>, vector<8x8xf32> -> vector<8x128xf32>
    %cst_273 = arith.constant 0.000000e+00 : f32
    %701 = vector.broadcast %cst_273 : f32 to vector<8x128xf32>
    %702 = vector.shape_cast %23 : vector<1x128xi1> to vector<1x128xi1>
    %703 = vector.broadcast %702 : vector<1x128xi1> to vector<8x128xi1>
    %704 = arith.select %703, %700, %701 : vector<8x128xi1>, vector<8x128xf32>
    %705 = arith.truncf %704 : vector<8x128xf32> to vector<8x128xbf16>
    %c200 = arith.constant 200 : index
    %c0_274 = arith.constant 0 : index
    %706 = vector.load %arg3[%c200, %c0_274] : memref<288x8xbf16, #tpu.memory_space<vmem>>, vector<8x8xbf16>
    %cst_275 = arith.constant dense<0.000000e+00> : vector<8x128xf32>
    %707 = tpu.matmul %706, %705, %cst_275 {dimension_numbers = #tpu.dot_dimension_numbers<[1], [0], [0], [1], [0, 0, 1, 1], [], []>} : vector<8x8xbf16>, vector<8x128xbf16>, vector<8x128xf32> -> vector<8x128xf32>
    %708 = arith.addf %697, %707 : vector<8x128xf32>
    %cst_276 = arith.constant 0.000000e+00 : f32
    %709 = vector.broadcast %cst_276 : f32 to vector<8x9xf32>
    %710 = vector.extract_strided_slice %626 {offsets = [0, 9], sizes = [8, 119], strides = [1, 1]} : vector<8x128xf32> to vector<8x119xf32>
    %711 = tpu.concatenate %710, %709 in 1 : vector<8x119xf32>, vector<8x9xf32> -> vector<8x128xf32>
    %cst_277 = arith.constant 0.000000e+00 : f32
    %712 = vector.broadcast %cst_277 : f32 to vector<8x128xf32>
    %713 = vector.shape_cast %26 : vector<1x128xi1> to vector<1x128xi1>
    %714 = vector.broadcast %713 : vector<1x128xi1> to vector<8x128xi1>
    %715 = arith.select %714, %711, %712 : vector<8x128xi1>, vector<8x128xf32>
    %716 = arith.truncf %715 : vector<8x128xf32> to vector<8x128xbf16>
    %c208 = arith.constant 208 : index
    %c0_278 = arith.constant 0 : index
    %717 = vector.load %arg3[%c208, %c0_278] : memref<288x8xbf16, #tpu.memory_space<vmem>>, vector<8x8xbf16>
    %cst_279 = arith.constant dense<0.000000e+00> : vector<8x128xf32>
    %718 = tpu.matmul %717, %716, %cst_279 {dimension_numbers = #tpu.dot_dimension_numbers<[1], [0], [0], [1], [0, 0, 1, 1], [], []>} : vector<8x8xbf16>, vector<8x128xbf16>, vector<8x128xf32> -> vector<8x128xf32>
    %719 = arith.addf %708, %718 : vector<8x128xf32>
    %720 = vector.extract_strided_slice %1 {offsets = [0, 3], sizes = [8, 1], strides = [1, 1]} : vector<8x5xf32> to vector<8x1xf32>
    %721 = vector.broadcast %720 : vector<8x1xf32> to vector<8x128xf32>
    %722 = arith.addf %719, %721 : vector<8x128xf32>
    %cst_280 = arith.constant 0.000000e+00 : f32
    %723 = vector.broadcast %cst_280 : f32 to vector<8x128xf32>
    %724 = arith.maximumf %722, %723 : vector<8x128xf32>
    %cst_281 = arith.constant 0.000000e+00 : f32
    %725 = vector.broadcast %cst_281 : f32 to vector<8x128xf32>
    %cst_282 = arith.constant 0.000000e+00 : f32
    %726 = vector.broadcast %cst_282 : f32 to vector<8x9xf32>
    %727 = vector.extract_strided_slice %724 {offsets = [0, 0], sizes = [8, 119], strides = [1, 1]} : vector<8x128xf32> to vector<8x119xf32>
    %728 = tpu.concatenate %726, %727 in 1 : vector<8x9xf32>, vector<8x119xf32> -> vector<8x128xf32>
    %cst_283 = arith.constant 0.000000e+00 : f32
    %729 = vector.broadcast %cst_283 : f32 to vector<8x128xf32>
    %730 = vector.shape_cast %5 : vector<1x128xi1> to vector<1x128xi1>
    %731 = vector.broadcast %730 : vector<1x128xi1> to vector<8x128xi1>
    %732 = arith.select %731, %728, %729 : vector<8x128xi1>, vector<8x128xf32>
    %733 = arith.truncf %732 : vector<8x128xf32> to vector<8x128xbf16>
    %c216 = arith.constant 216 : index
    %c0_284 = arith.constant 0 : index
    %734 = vector.load %arg3[%c216, %c0_284] : memref<288x8xbf16, #tpu.memory_space<vmem>>, vector<8x8xbf16>
    %cst_285 = arith.constant dense<0.000000e+00> : vector<8x128xf32>
    %735 = tpu.matmul %734, %733, %cst_285 {dimension_numbers = #tpu.dot_dimension_numbers<[1], [0], [0], [1], [0, 0, 1, 1], [], []>} : vector<8x8xbf16>, vector<8x128xbf16>, vector<8x128xf32> -> vector<8x128xf32>
    %736 = arith.addf %725, %735 : vector<8x128xf32>
    %cst_286 = arith.constant 0.000000e+00 : f32
    %737 = vector.broadcast %cst_286 : f32 to vector<8x8xf32>
    %738 = vector.extract_strided_slice %724 {offsets = [0, 0], sizes = [8, 120], strides = [1, 1]} : vector<8x128xf32> to vector<8x120xf32>
    %739 = tpu.concatenate %737, %738 in 1 : vector<8x8xf32>, vector<8x120xf32> -> vector<8x128xf32>
    %cst_287 = arith.constant 0.000000e+00 : f32
    %740 = vector.broadcast %cst_287 : f32 to vector<8x128xf32>
    %741 = vector.shape_cast %8 : vector<1x128xi1> to vector<1x128xi1>
    %742 = vector.broadcast %741 : vector<1x128xi1> to vector<8x128xi1>
    %743 = arith.select %742, %739, %740 : vector<8x128xi1>, vector<8x128xf32>
    %744 = arith.truncf %743 : vector<8x128xf32> to vector<8x128xbf16>
    %c224 = arith.constant 224 : index
    %c0_288 = arith.constant 0 : index
    %745 = vector.load %arg3[%c224, %c0_288] : memref<288x8xbf16, #tpu.memory_space<vmem>>, vector<8x8xbf16>
    %cst_289 = arith.constant dense<0.000000e+00> : vector<8x128xf32>
    %746 = tpu.matmul %745, %744, %cst_289 {dimension_numbers = #tpu.dot_dimension_numbers<[1], [0], [0], [1], [0, 0, 1, 1], [], []>} : vector<8x8xbf16>, vector<8x128xbf16>, vector<8x128xf32> -> vector<8x128xf32>
    %747 = arith.addf %736, %746 : vector<8x128xf32>
    %cst_290 = arith.constant 0.000000e+00 : f32
    %748 = vector.broadcast %cst_290 : f32 to vector<8x7xf32>
    %749 = vector.extract_strided_slice %724 {offsets = [0, 0], sizes = [8, 121], strides = [1, 1]} : vector<8x128xf32> to vector<8x121xf32>
    %750 = tpu.concatenate %748, %749 in 1 : vector<8x7xf32>, vector<8x121xf32> -> vector<8x128xf32>
    %cst_291 = arith.constant 0.000000e+00 : f32
    %751 = vector.broadcast %cst_291 : f32 to vector<8x128xf32>
    %752 = vector.shape_cast %11 : vector<1x128xi1> to vector<1x128xi1>
    %753 = vector.broadcast %752 : vector<1x128xi1> to vector<8x128xi1>
    %754 = arith.select %753, %750, %751 : vector<8x128xi1>, vector<8x128xf32>
    %755 = arith.truncf %754 : vector<8x128xf32> to vector<8x128xbf16>
    %c232 = arith.constant 232 : index
    %c0_292 = arith.constant 0 : index
    %756 = vector.load %arg3[%c232, %c0_292] : memref<288x8xbf16, #tpu.memory_space<vmem>>, vector<8x8xbf16>
    %cst_293 = arith.constant dense<0.000000e+00> : vector<8x128xf32>
    %757 = tpu.matmul %756, %755, %cst_293 {dimension_numbers = #tpu.dot_dimension_numbers<[1], [0], [0], [1], [0, 0, 1, 1], [], []>} : vector<8x8xbf16>, vector<8x128xbf16>, vector<8x128xf32> -> vector<8x128xf32>
    %758 = arith.addf %747, %757 : vector<8x128xf32>
    %cst_294 = arith.constant 0.000000e+00 : f32
    %759 = vector.broadcast %cst_294 : f32 to vector<8x1xf32>
    %760 = vector.extract_strided_slice %724 {offsets = [0, 0], sizes = [8, 127], strides = [1, 1]} : vector<8x128xf32> to vector<8x127xf32>
    %761 = tpu.concatenate %759, %760 in 1 : vector<8x1xf32>, vector<8x127xf32> -> vector<8x128xf32>
    %cst_295 = arith.constant 0.000000e+00 : f32
    %762 = vector.broadcast %cst_295 : f32 to vector<8x128xf32>
    %763 = vector.shape_cast %14 : vector<1x128xi1> to vector<1x128xi1>
    %764 = vector.broadcast %763 : vector<1x128xi1> to vector<8x128xi1>
    %765 = arith.select %764, %761, %762 : vector<8x128xi1>, vector<8x128xf32>
    %766 = arith.truncf %765 : vector<8x128xf32> to vector<8x128xbf16>
    %c240 = arith.constant 240 : index
    %c0_296 = arith.constant 0 : index
    %767 = vector.load %arg3[%c240, %c0_296] : memref<288x8xbf16, #tpu.memory_space<vmem>>, vector<8x8xbf16>
    %cst_297 = arith.constant dense<0.000000e+00> : vector<8x128xf32>
    %768 = tpu.matmul %767, %766, %cst_297 {dimension_numbers = #tpu.dot_dimension_numbers<[1], [0], [0], [1], [0, 0, 1, 1], [], []>} : vector<8x8xbf16>, vector<8x128xbf16>, vector<8x128xf32> -> vector<8x128xf32>
    %769 = arith.addf %758, %768 : vector<8x128xf32>
    %770 = arith.truncf %724 : vector<8x128xf32> to vector<8x128xbf16>
    %c248 = arith.constant 248 : index
    %c0_298 = arith.constant 0 : index
    %771 = vector.load %arg3[%c248, %c0_298] : memref<288x8xbf16, #tpu.memory_space<vmem>>, vector<8x8xbf16>
    %cst_299 = arith.constant dense<0.000000e+00> : vector<8x128xf32>
    %772 = tpu.matmul %771, %770, %cst_299 {dimension_numbers = #tpu.dot_dimension_numbers<[1], [0], [0], [1], [0, 0, 1, 1], [], []>} : vector<8x8xbf16>, vector<8x128xbf16>, vector<8x128xf32> -> vector<8x128xf32>
    %773 = arith.addf %769, %772 : vector<8x128xf32>
    %cst_300 = arith.constant 0.000000e+00 : f32
    %774 = vector.broadcast %cst_300 : f32 to vector<8x1xf32>
    %775 = vector.extract_strided_slice %724 {offsets = [0, 1], sizes = [8, 127], strides = [1, 1]} : vector<8x128xf32> to vector<8x127xf32>
    %776 = tpu.concatenate %775, %774 in 1 : vector<8x127xf32>, vector<8x1xf32> -> vector<8x128xf32>
    %cst_301 = arith.constant 0.000000e+00 : f32
    %777 = vector.broadcast %cst_301 : f32 to vector<8x128xf32>
    %778 = vector.shape_cast %17 : vector<1x128xi1> to vector<1x128xi1>
    %779 = vector.broadcast %778 : vector<1x128xi1> to vector<8x128xi1>
    %780 = arith.select %779, %776, %777 : vector<8x128xi1>, vector<8x128xf32>
    %781 = arith.truncf %780 : vector<8x128xf32> to vector<8x128xbf16>
    %c256 = arith.constant 256 : index
    %c0_302 = arith.constant 0 : index
    %782 = vector.load %arg3[%c256, %c0_302] : memref<288x8xbf16, #tpu.memory_space<vmem>>, vector<8x8xbf16>
    %cst_303 = arith.constant dense<0.000000e+00> : vector<8x128xf32>
    %783 = tpu.matmul %782, %781, %cst_303 {dimension_numbers = #tpu.dot_dimension_numbers<[1], [0], [0], [1], [0, 0, 1, 1], [], []>} : vector<8x8xbf16>, vector<8x128xbf16>, vector<8x128xf32> -> vector<8x128xf32>
    %784 = arith.addf %773, %783 : vector<8x128xf32>
    %cst_304 = arith.constant 0.000000e+00 : f32
    %785 = vector.broadcast %cst_304 : f32 to vector<8x7xf32>
    %786 = vector.extract_strided_slice %724 {offsets = [0, 7], sizes = [8, 121], strides = [1, 1]} : vector<8x128xf32> to vector<8x121xf32>
    %787 = tpu.concatenate %786, %785 in 1 : vector<8x121xf32>, vector<8x7xf32> -> vector<8x128xf32>
    %cst_305 = arith.constant 0.000000e+00 : f32
    %788 = vector.broadcast %cst_305 : f32 to vector<8x128xf32>
    %789 = vector.shape_cast %20 : vector<1x128xi1> to vector<1x128xi1>
    %790 = vector.broadcast %789 : vector<1x128xi1> to vector<8x128xi1>
    %791 = arith.select %790, %787, %788 : vector<8x128xi1>, vector<8x128xf32>
    %792 = arith.truncf %791 : vector<8x128xf32> to vector<8x128xbf16>
    %c264 = arith.constant 264 : index
    %c0_306 = arith.constant 0 : index
    %793 = vector.load %arg3[%c264, %c0_306] : memref<288x8xbf16, #tpu.memory_space<vmem>>, vector<8x8xbf16>
    %cst_307 = arith.constant dense<0.000000e+00> : vector<8x128xf32>
    %794 = tpu.matmul %793, %792, %cst_307 {dimension_numbers = #tpu.dot_dimension_numbers<[1], [0], [0], [1], [0, 0, 1, 1], [], []>} : vector<8x8xbf16>, vector<8x128xbf16>, vector<8x128xf32> -> vector<8x128xf32>
    %795 = arith.addf %784, %794 : vector<8x128xf32>
    %cst_308 = arith.constant 0.000000e+00 : f32
    %796 = vector.broadcast %cst_308 : f32 to vector<8x8xf32>
    %797 = vector.extract_strided_slice %724 {offsets = [0, 8], sizes = [8, 120], strides = [1, 1]} : vector<8x128xf32> to vector<8x120xf32>
    %798 = tpu.concatenate %797, %796 in 1 : vector<8x120xf32>, vector<8x8xf32> -> vector<8x128xf32>
    %cst_309 = arith.constant 0.000000e+00 : f32
    %799 = vector.broadcast %cst_309 : f32 to vector<8x128xf32>
    %800 = vector.shape_cast %23 : vector<1x128xi1> to vector<1x128xi1>
    %801 = vector.broadcast %800 : vector<1x128xi1> to vector<8x128xi1>
    %802 = arith.select %801, %798, %799 : vector<8x128xi1>, vector<8x128xf32>
    %803 = arith.truncf %802 : vector<8x128xf32> to vector<8x128xbf16>
    %c272 = arith.constant 272 : index
    %c0_310 = arith.constant 0 : index
    %804 = vector.load %arg3[%c272, %c0_310] : memref<288x8xbf16, #tpu.memory_space<vmem>>, vector<8x8xbf16>
    %cst_311 = arith.constant dense<0.000000e+00> : vector<8x128xf32>
    %805 = tpu.matmul %804, %803, %cst_311 {dimension_numbers = #tpu.dot_dimension_numbers<[1], [0], [0], [1], [0, 0, 1, 1], [], []>} : vector<8x8xbf16>, vector<8x128xbf16>, vector<8x128xf32> -> vector<8x128xf32>
    %806 = arith.addf %795, %805 : vector<8x128xf32>
    %cst_312 = arith.constant 0.000000e+00 : f32
    %807 = vector.broadcast %cst_312 : f32 to vector<8x9xf32>
    %808 = vector.extract_strided_slice %724 {offsets = [0, 9], sizes = [8, 119], strides = [1, 1]} : vector<8x128xf32> to vector<8x119xf32>
    %809 = tpu.concatenate %808, %807 in 1 : vector<8x119xf32>, vector<8x9xf32> -> vector<8x128xf32>
    %cst_313 = arith.constant 0.000000e+00 : f32
    %810 = vector.broadcast %cst_313 : f32 to vector<8x128xf32>
    %811 = vector.shape_cast %26 : vector<1x128xi1> to vector<1x128xi1>
    %812 = vector.broadcast %811 : vector<1x128xi1> to vector<8x128xi1>
    %813 = arith.select %812, %809, %810 : vector<8x128xi1>, vector<8x128xf32>
    %814 = arith.truncf %813 : vector<8x128xf32> to vector<8x128xbf16>
    %c280 = arith.constant 280 : index
    %c0_314 = arith.constant 0 : index
    %815 = vector.load %arg3[%c280, %c0_314] : memref<288x8xbf16, #tpu.memory_space<vmem>>, vector<8x8xbf16>
    %cst_315 = arith.constant dense<0.000000e+00> : vector<8x128xf32>
    %816 = tpu.matmul %815, %814, %cst_315 {dimension_numbers = #tpu.dot_dimension_numbers<[1], [0], [0], [1], [0, 0, 1, 1], [], []>} : vector<8x8xbf16>, vector<8x128xbf16>, vector<8x128xf32> -> vector<8x128xf32>
    %817 = arith.addf %806, %816 : vector<8x128xf32>
    %818 = vector.extract_strided_slice %1 {offsets = [0, 4], sizes = [8, 1], strides = [1, 1]} : vector<8x5xf32> to vector<8x1xf32>
    %819 = vector.broadcast %818 : vector<8x1xf32> to vector<8x128xf32>
    %820 = arith.addf %817, %819 : vector<8x128xf32>
    %821 = arith.addf %624, %820 : vector<8x128xf32>
    %c0_316 = arith.constant 0 : index
    %c0_317 = arith.constant 0 : index
    %822 = vector.load %arg6[%c0_316, %c0_317] : memref<8x128xf32, #tpu.memory_space<vmem>>, vector<8x128xf32>
    tpu.vector_store %arg6[%c0_316, %c0_317], %821 {strides = array<i32>} : memref<8x128xf32, #tpu.memory_space<vmem>>, vector<8x128xf32>,
    return
  }
  func.func @transform_0(%arg0: i32) -> (i32, i32, i32) {
    %c0_i32 = arith.constant 0 : i32
    %c0_i32_0 = arith.constant 0 : i32
    %c0_i32_1 = arith.constant 0 : i32
    return %c0_i32, %c0_i32_0, %arg0 : i32, i32, i32
  }
  func.func @transform_1(%arg0: i32) -> (i32, i32) {
    %c0_i32 = arith.constant 0 : i32
    %c0_i32_0 = arith.constant 0 : i32
    %c0_i32_1 = arith.constant 0 : i32
    return %c0_i32, %c0_i32_0 : i32, i32
  }
  func.func @transform_2(%arg0: i32) -> (i32, i32) {
    %c0_i32 = arith.constant 0 : i32
    %c0_i32_0 = arith.constant 0 : i32
    %c0_i32_1 = arith.constant 0 : i32
    return %c0_i32, %c0_i32_0 : i32, i32
  }
  func.func @transform_3(%arg0: i32) -> (i32, i32) {
    %c0_i32 = arith.constant 0 : i32
    %c0_i32_0 = arith.constant 0 : i32
    %c0_i32_1 = arith.constant 0 : i32
    return %c0_i32, %c0_i32_0 : i32, i32
  }
  func.func @transform_4(%arg0: i32) -> (i32, i32) {
    %c0_i32 = arith.constant 0 : i32
    %c0_i32_0 = arith.constant 0 : i32
    %c0_i32_1 = arith.constant 0 : i32
    return %c0_i32, %c0_i32_0 : i32, i32
  }
  func.func @transform_5(%arg0: i32) -> (i32, i32) {
    %c0_i32 = arith.constant 0 : i32
    %c0_i32_0 = arith.constant 0 : i32
    return %c0_i32, %arg0 : i32, i32
  }
}

</mosaic_0001>

<llo_original>
// kernel: impala_cnn_block.1
$region0: #{impala_cnn_block.1}
  #allocation0 [shape = 'u32[]', space=smem, size = 0x4, offset = 0x4, fixed_abs, tag = 'smem constant byte address 0x4 - core index']
  #allocation1 [shape = 'u32[144,128]{1,0:T(1,128)}', space=vmem, size = 0x12000, scoped, tag = 'internal scratch']
  %s0 = inlined_call_operand.vmem [shape: f32[4,4,256], index: 0, kind: input, shape index: {}]
  %s1 = inlined_call_operand.vmem [shape: bf16[72,4], index: 1, kind: input, shape index: {}]
  %s2 = inlined_call_operand.vmem [shape: bf16[288,8], index: 2, kind: input, shape index: {}]
  %s3 = inlined_call_operand.vmem [shape: f32[8,5], index: 3, kind: input, shape index: {}]
  %s4 = inlined_call_operand.vmem [shape: f32[9,128], index: 4, kind: input, shape index: {}]
  %s5 = inlined_call_operand.vmem [shape: f32[8,256], index: 5, kind: output, shape index: {}]
  %s6 = sld [smem:[#allocation0]]
  $region94: #{impala_cnn_block.1} parent=0
    _
  %s8 = ssub.s32 1, %s6
  %s9 = scalar_select 0, %s8, %s6
  $region1: #{impala_cnn_block.1} parent=0
    #allocation2 [shape = 'u8[16384]{0}', space=vmem, size = 0x4000, scoped, tag = 'input window, operand 0']
    loop: start=0, step=1, limit=4
    $region2: #{impala_cnn_block.1} parent=1 // loop_pre_header
      _
    $region3: #{impala_cnn_block.1} parent=1 // loop_header
      %s11 = sphi 0, %s15
      %p12 = scmp.ge.s32.totalorder %s11, 4
      %s21 = sphi 0, %s23
      %s24 = sphi 0, %s21
      %s25 = sphi 0, %s24
      %s41 = sphi 0, %s25
      %s45 = sphi 0, %s45
      %s47 = sphi 0, %s45
      %s48 = sphi 0, %s47
      %s62 = sphi 0, %s48
      %s66 = sphi 0, %s66
      %s68 = sphi 0, %s66
      %s69 = sphi 0, %s68
      %s83 = sphi 0, %s69
      %s87 = sphi 0, %s87
      %s89 = sphi 0, %s87
      %s90 = sphi 0, %s89
      %s104 = sphi 0, %s90
      %s108 = sphi 0, %s108
      %s110 = sphi 0, %s108
      %s111 = sphi 0, %s110
      %s125 = sphi 0, %s111
      %s131 = sphi 0, %s133
      %s134 = sphi 0, %s131
      %s135 = sphi 0, %s134
      %s151 = sphi 0, %s135
    $region4: #{impala_cnn_block.1} parent=1 // loop_header_branch
      %14 = sbr.rel (%p12) target = $region8
    $region5: #{impala_cnn_block.1} parent=1 // loop_body
      %s16 = ssub.s32 %s11, 1
      %s17 = ssub.s32 %s11, 2
      %s18 = sadd.s32 %s11, 1
      %s19 = ssub.s32 %s11, %s18
      %p20 = scmp.eq.s32.totalorder %s19, 0
      %s22 = sadd.s32 %s21, 1
      %s23 = scalar_select %p20, %s21, %s22
      %p26 = pneg %p20
      %p27 = scmp.eq.s32.totalorder %s11, 1
      %p28 = por %p26, %p27
      %p29 = scmp.ne.s32.totalorder %s21, %s24
      %p30 = scmp.eq.s32.totalorder %s11, 0
      %p31 = por %p29, %p30
      %p32 = scmp.ne.s32.totalorder %s21, %s24
      %p33 = scmp.eq.s32.totalorder %s16, 1
      %p34 = por %p32, %p33
      %p35 = scmp.ne.s32.totalorder %s24, %s25
      %p36 = scmp.eq.s32.totalorder %s16, 0
      %p37 = por %p35, %p36
      %p38 = scmp.ne.s32.totalorder %s24, %s25
      %p39 = scmp.eq.s32.totalorder %s17, 1
      %p40 = por %p38, %p39
      %p42 = scmp.ne.s32.totalorder %s25, %s41
      %p43 = scmp.eq.s32.totalorder %s17, 0
      %p44 = por %p42, %p43
      %s46 = sadd.s32 %s45, 1
      %p49 = scmp.eq.s32.totalorder %s11, 1
      %p50 = scmp.ne.s32.totalorder %s45, %s47
      %p51 = scmp.eq.s32.totalorder %s11, 0
      %p52 = por %p50, %p51
      %p53 = scmp.ne.s32.totalorder %s45, %s47
      %p54 = scmp.eq.s32.totalorder %s16, 1
      %p55 = por %p53, %p54
      %p56 = scmp.ne.s32.totalorder %s47, %s48
      %p57 = scmp.eq.s32.totalorder %s16, 0
      %p58 = por %p56, %p57
      %p59 = scmp.ne.s32.totalorder %s47, %s48
      %p60 = scmp.eq.s32.totalorder %s17, 1
      %p61 = por %p59, %p60
      %p63 = scmp.ne.s32.totalorder %s48, %s62
      %p64 = scmp.eq.s32.totalorder %s17, 0
      %p65 = por %p63, %p64
      %s67 = sadd.s32 %s66, 1
      %p70 = scmp.eq.s32.totalorder %s11, 1
      %p71 = scmp.ne.s32.totalorder %s66, %s68
      %p72 = scmp.eq.s32.totalorder %s11, 0
      %p73 = por %p71, %p72
      %p74 = scmp.ne.s32.totalorder %s66, %s68
      %p75 = scmp.eq.s32.totalorder %s16, 1
      %p76 = por %p74, %p75
      %p77 = scmp.ne.s32.totalorder %s68, %s69
      %p78 = scmp.eq.s32.totalorder %s16, 0
      %p79 = por %p77, %p78
      %p80 = scmp.ne.s32.totalorder %s68, %s69
      %p81 = scmp.eq.s32.totalorder %s17, 1
      %p82 = por %p80, %p81
      %p84 = scmp.ne.s32.totalorder %s69, %s83
      %p85 = scmp.eq.s32.totalorder %s17, 0
      %p86 = por %p84, %p85
      %s88 = sadd.s32 %s87, 1
      %p91 = scmp.eq.s32.totalorder %s11, 1
      %p92 = scmp.ne.s32.totalorder %s87, %s89
      %p93 = scmp.eq.s32.totalorder %s11, 0
      %p94 = por %p92, %p93
      %p95 = scmp.ne.s32.totalorder %s87, %s89
      %p96 = scmp.eq.s32.totalorder %s16, 1
      %p97 = por %p95, %p96
      %p98 = scmp.ne.s32.totalorder %s89, %s90
      %p99 = scmp.eq.s32.totalorder %s16, 0
      %p100 = por %p98, %p99
      %p101 = scmp.ne.s32.totalorder %s89, %s90
      %p102 = scmp.eq.s32.totalorder %s17, 1
      %p103 = por %p101, %p102
      %p105 = scmp.ne.s32.totalorder %s90, %s104
      %p106 = scmp.eq.s32.totalorder %s17, 0
      %p107 = por %p105, %p106
      %s109 = sadd.s32 %s108, 1
      %p112 = scmp.eq.s32.totalorder %s11, 1
      %p113 = scmp.ne.s32.totalorder %s108, %s110
      %p114 = scmp.eq.s32.totalorder %s11, 0
      %p115 = por %p113, %p114
      %p116 = scmp.ne.s32.totalorder %s108, %s110
      %p117 = scmp.eq.s32.totalorder %s16, 1
      %p118 = por %p116, %p117
      %p119 = scmp.ne.s32.totalorder %s110, %s111
      %p120 = scmp.eq.s32.totalorder %s16, 0
      %p121 = por %p119, %p120
      %p122 = scmp.ne.s32.totalorder %s110, %s111
      %p123 = scmp.eq.s32.totalorder %s17, 1
      %p124 = por %p122, %p123
      %p126 = scmp.ne.s32.totalorder %s111, %s125
      %p127 = scmp.eq.s32.totalorder %s17, 0
      %p128 = por %p126, %p127
      %s129 = ssub.s32 %s11, %s18
      %p130 = scmp.eq.s32.totalorder %s129, 0
      %s132 = sadd.s32 %s131, 1
      %s133 = scalar_select %p130, %s131, %s132
      %p136 = pneg %p130
      %p137 = scmp.eq.s32.totalorder %s11, 1
      %p138 = por %p136, %p137
      %p139 = scmp.ne.s32.totalorder %s131, %s134
      %p140 = scmp.eq.s32.totalorder %s11, 0
      %p141 = por %p139, %p140
      %p142 = scmp.ne.s32.totalorder %s131, %s134
      %p143 = scmp.eq.s32.totalorder %s16, 1
      %p144 = por %p142, %p143
      %p145 = scmp.ne.s32.totalorder %s134, %s135
      %p146 = scmp.eq.s32.totalorder %s16, 0
      %p147 = por %p145, %p146
      %p148 = scmp.ne.s32.totalorder %s134, %s135
      %p149 = scmp.eq.s32.totalorder %s17, 1
      %p150 = por %p148, %p149
      %p152 = scmp.ne.s32.totalorder %s135, %s151
      %p153 = scmp.eq.s32.totalorder %s17, 0
      %p154 = por %p152, %p153
      %p155 = scmp.le.s32.totalorder 1, %s11
      %p156 = scmp.lt.s32.totalorder %s11, 3
      %p157 = pnand %p155, %p156
      %p158 = pneg %p157
      // Predicated region
      $region9: #{impala_cnn_block.1} parent=5 // pred_check
        _
      $region10: #{impala_cnn_block.1} parent=5 // pred_check_branch
        %160 = sbr.rel (%p157) target = $region12
      $region11: #{impala_cnn_block.1} parent=5 // pred_region
        %s161 = ssub.s32 %s11, 1
        // Predicated region
        $region13: #{impala_cnn_block.1} parent=11 // pred_check
          %p162 = pneg %p58
        $region14: #{impala_cnn_block.1} parent=11 // pred_check_branch
          %164 = sbr.rel (%p162) target = $region16
        $region15: #{impala_cnn_block.1} parent=11 // pred_region
          _
        $region16: #{impala_cnn_block.1} parent=11 // pred_fallthru
          _
        // Predicated region
        $region17: #{impala_cnn_block.1} parent=11 // pred_check
          %p165 = pneg %p79
        $region18: #{impala_cnn_block.1} parent=11 // pred_check_branch
          %167 = sbr.rel (%p165) target = $region20
        $region19: #{impala_cnn_block.1} parent=11 // pred_region
          _
        $region20: #{impala_cnn_block.1} parent=11 // pred_fallthru
          _
        // Predicated region
        $region21: #{impala_cnn_block.1} parent=11 // pred_check
          %p168 = pneg %p100
        $region22: #{impala_cnn_block.1} parent=11 // pred_check_branch
          %170 = sbr.rel (%p168) target = $region24
        $region23: #{impala_cnn_block.1} parent=11 // pred_region
          _
        $region24: #{impala_cnn_block.1} parent=11 // pred_fallthru
          _
        // Predicated region
        $region25: #{impala_cnn_block.1} parent=11 // pred_check
          %p171 = pneg %p121
        $region26: #{impala_cnn_block.1} parent=11 // pred_check_branch
          %173 = sbr.rel (%p171) target = $region28
        $region27: #{impala_cnn_block.1} parent=11 // pred_region
          _
        $region28: #{impala_cnn_block.1} parent=11 // pred_fallthru
          _
      $region12: #{impala_cnn_block.1} parent=5 // pred_fallthru
        _
      %p174 = scmp.lt.s32.totalorder %s11, 2
      // Predicated region
      $region29: #{impala_cnn_block.1} parent=5 // pred_check
        %p175 = pneg %p174
      $region30: #{impala_cnn_block.1} parent=5 // pred_check_branch
        %177 = sbr.rel (%p175) target = $region32
      $region31: #{impala_cnn_block.1} parent=5 // pred_region
        // Predicated region
        $region33: #{impala_cnn_block.1} parent=31 // pred_check
          %p178 = pneg %p31
        $region34: #{impala_cnn_block.1} parent=31 // pred_check_branch
          %180 = sbr.rel (%p178) target = $region36
        $region35: #{impala_cnn_block.1} parent=31 // pred_region
          %s181 = sand.u32 %s21, 1
          %s182 = sand.u32 %s21, 1
          %s183 = smul.addr %s182, 16
          %s184 = scalar_lea.vmem [#allocation2], %s183
          %s185 = smul.addr %s11, 4
          %s186 = scalar_lea.vmem %s0, %s185
          // Predicated region
          $region37: #{impala_cnn_block.1} parent=35 // pred_check
            _
          $region38: #{impala_cnn_block.1} parent=35 // pred_check_branch
            %188 = sbr.rel (0) target = $region40
          $region39: #{impala_cnn_block.1} parent=35 // pred_region
            // Predicated region
            $region41: #{impala_cnn_block.1} parent=39 // pred_check
              _
            $region42: #{impala_cnn_block.1} parent=39 // pred_check_branch
              %190 = sbr.rel target = $region44
            $region43: #{impala_cnn_block.1} parent=39 // pred_region
              // Predicated region
              $region56: #{impala_cnn_block.1} parent=43 // pred_check
                _
              $region57: #{impala_cnn_block.1} parent=43 // pred_check_branch
                %212 = sbr.rel (0) target = $region59
              $region58: #{impala_cnn_block.1} parent=43 // pred_region
                loop: start=0, step=1, limit=1
                $region60: #{impala_cnn_block.1} parent=58 // loop_pre_header
                  _
                $region61: #{impala_cnn_block.1} parent=58 // loop_header
                  %s214 = sphi 0, %s218
                  %p215 = scmp.ge.s32.totalorder %s214, 1
                  %s219 = sphi %s186, %s186
                  %s220 = sphi %s184, %s184
                $region62: #{impala_cnn_block.1} parent=58 // loop_header_branch
                  %217 = sbr.rel (%p215) target = $region66
                $region63: #{impala_cnn_block.1} parent=58 // loop_body
                  _
                $region64: #{impala_cnn_block.1} parent=58 // loop_footer
                  %s218 = sadd.s32 1, %s214
                $region65: #{impala_cnn_block.1} parent=58 // loop_footer_branch
                  %213 = sbr.rel target = $region61
                $region66: #{impala_cnn_block.1} parent=58 // loop_exit
                  _
                %s222 = ssub.s32 16, 1
                loop: start=0, step=1, limit=1
                $region67: #{impala_cnn_block.1} parent=58 // loop_pre_header
                  _
                $region68: #{impala_cnn_block.1} parent=58 // loop_header
                  %s224 = sphi 0, %s228
                  %p225 = scmp.ge.s32.totalorder %s224, 1
                  %s229 = sphi %s186, %s186
                  %s230 = sphi %s184, %s184
                $region69: #{impala_cnn_block.1} parent=58 // loop_header_branch
                  %227 = sbr.rel (%p225) target = $region73
                $region70: #{impala_cnn_block.1} parent=58 // loop_body
                  %v231 = vld [vmem:[%s229] sm:%s222]
                  %232 = vst [vmem:[%s230] sm:%s222] %v231
                  %v233 = vld [vmem:[%s229 + $0x8] sm:%s222]
                  %234 = vst [vmem:[%s230 + $0x4] sm:%s222] %v233
                  %v235 = vld [vmem:[%s229 + $0x10] sm:%s222]
                  %236 = vst [vmem:[%s230 + $0x8] sm:%s222] %v235
                  %v237 = vld [vmem:[%s229 + $0x18] sm:%s222]
                  %238 = vst [vmem:[%s230 + $0xc] sm:%s222] %v237
                $region71: #{impala_cnn_block.1} parent=58 // loop_footer
                  %s228 = sadd.s32 1, %s224
                $region72: #{impala_cnn_block.1} parent=58 // loop_footer_branch
                  %223 = sbr.rel target = $region68
                $region73: #{impala_cnn_block.1} parent=58 // loop_exit
                  _
              $region59: #{impala_cnn_block.1} parent=43 // pred_fallthru
                _
            $region44: #{impala_cnn_block.1} parent=39 // pred_fallthru
              _
            // Predicated region
            $region45: #{impala_cnn_block.1} parent=39 // pred_check
              _
            $region46: #{impala_cnn_block.1} parent=39 // pred_check_branch
              %192 = sbr.rel (0) target = $region48
            $region47: #{impala_cnn_block.1} parent=39 // pred_region
              %s194 = ssub.s32 16, 1
              loop: start=0, step=1, limit=1
              $region49: #{impala_cnn_block.1} parent=47 // loop_pre_header
                _
              $region50: #{impala_cnn_block.1} parent=47 // loop_header
                %s196 = sphi 0, %s200
                %p197 = scmp.ge.s32.totalorder %s196, 1
                %s201 = sphi %s186, %s186
                %s202 = sphi %s184, %s184
              $region51: #{impala_cnn_block.1} parent=47 // loop_header_branch
                %199 = sbr.rel (%p197) target = $region55
              $region52: #{impala_cnn_block.1} parent=47 // loop_body
                %v203 = vld [vmem:[%s201] sm:%s194]
                %204 = vst [vmem:[%s202] sm:%s194] %v203
                %v205 = vld [vmem:[%s201 + $0x8] sm:%s194]
                %206 = vst [vmem:[%s202 + $0x4] sm:%s194] %v205
                %v207 = vld [vmem:[%s201 + $0x10] sm:%s194]
                %208 = vst [vmem:[%s202 + $0x8] sm:%s194] %v207
                %v209 = vld [vmem:[%s201 + $0x18] sm:%s194]
                %210 = vst [vmem:[%s202 + $0xc] sm:%s194] %v209
              $region53: #{impala_cnn_block.1} parent=47 // loop_footer
                %s200 = sadd.s32 1, %s196
              $region54: #{impala_cnn_block.1} parent=47 // loop_footer_branch
                %195 = sbr.rel target = $region50
              $region55: #{impala_cnn_block.1} parent=47 // loop_exit
                _
            $region48: #{impala_cnn_block.1} parent=39 // pred_fallthru
              _
          $region40: #{impala_cnn_block.1} parent=35 // pred_fallthru
            _
          %239 = vnop
        $region36: #{impala_cnn_block.1} parent=31 // pred_fallthru
          _
      $region32: #{impala_cnn_block.1} parent=5 // pred_fallthru
        _
      %p240 = scmp.le.s32.totalorder 1, %s11
      %p241 = scmp.lt.s32.totalorder %s11, 3
      %p242 = pnand %p240, %p241
      %p243 = pneg %p242
      // Predicated region
      $region74: #{impala_cnn_block.1} parent=5 // pred_check
        _
      $region75: #{impala_cnn_block.1} parent=5 // pred_check_branch
        %245 = sbr.rel (%p242) target = $region77
      $region76: #{impala_cnn_block.1} parent=5 // pred_region
        %s246 = ssub.s32 %s11, 1
        %s247 = sand.u32 %s24, 1
        %s248 = sand.u32 %s24, 1
        %s249 = smul.addr %s248, 16
        %s250 = scalar_lea.vmem [#allocation2], %s249
        // Predicated region
        $region78: #{impala_cnn_block.1} parent=76 // pred_check
          %p251 = pneg %p37
        $region79: #{impala_cnn_block.1} parent=76 // pred_check_branch
          %253 = sbr.rel (%p251) target = $region81
        $region80: #{impala_cnn_block.1} parent=76 // pred_region
          _
        $region81: #{impala_cnn_block.1} parent=76 // pred_fallthru
          _
        %s254 = sand.u32 %s24, 1
        %s255 = sand.u32 %s24, 1
        %s256 = smul.addr %s255, 16
        %s257 = scalar_lea.vmem [#allocation2], %s256
        %p258 = pneg %p37
        %p259 = pneg %p34
        %p260 = pneg %p58
        %p261 = pneg %p55
        %p262 = pneg %p79
        %p263 = pneg %p76
        %p264 = pneg %p100
        %p265 = pneg %p97
        %p266 = pneg %p121
        %p267 = pneg %p118
        %p268 = pneg %p147
        %p269 = pneg %p144
        %p270 = scmp.lt.s32.totalorder %s16, 1
        %s271 = scalar_select %p270, %s16, 1
        %s272 = smul.addr %s271, 8
        %s273 = scalar_lea.vmem %s5, %s272
        %p274 = scmp.lt.s32.totalorder %s16, 1
        %s275 = scalar_select %p274, %s16, 1
        %s276 = smul.addr %s275, 8
        %s277 = scalar_lea.vmem %s5, %s276
        %v279 = vld [vmem:[%s250] sm:$0xf]
        %v280 = vld [vmem:[%s250 + $0x4] sm:$0xf]
        %v281 = vld [vmem:[%s250 + $0x8] sm:$0xf]
        %v282 = vld [vmem:[%s250 + $0xc] sm:$0xf]
        %v283 = vld [vmem:[%s3] sm:$0xff]
        %v284 = vld [vmem:[%s4] sm:$0xff]
        %v285 = vld [vmem:[%s4 + $0x8] sm:$0x1]
        %vm286 = vcmp.gt.f32.partialorder %v284, 0.0
        %vm287 = vcmp.gt.f32.partialorder %v285, 0.0
        %289 = vrot.lane.b32.xlu0 %v282, 9
        %v290 = vpop.permute.xlu0 %289
        %vm292 = vcmask 72704
        %v293 = vsel %vm292, 0.0, %v290
        %v294 = vsel %vm286, 1, 0
        %v295 = vlaneseq
        %v296 = vshrl.u32 %v295, 7
        %v297 = vsub.s32 0, %v296
        %v298 = vrot.slane %v294, %v297
        %vm299 = vcmp.eq.s32.totalorder %v298, 1
        %v300 = vsel %vm299, %v293, 0.0
        %v301 = vpack.c.bf16 %v300, %v300
        %v302 = vld [vmem:[%s1] sm:$0xf]
        %304 = vrot.lane.b32.xlu0 %v281, 8
        %v305 = vpop.permute.xlu0 %304
        %vm307 = vcmask 64512
        %v308 = vsel %vm307, 0.0, %v305
        %v309 = vlaneseq
        %v310 = vshrl.u32 %v309, 7
        %v311 = vsub.s32 1, %v310
        %v312 = vrot.slane %v294, %v311
        %vm313 = vcmp.eq.s32.totalorder %v312, 1
        %v314 = vsel %vm313, %v308, 0.0
        %v315 = vpack.c.bf16 %v314, %v314
        %v316 = vld [vmem:[%s1 + $0x4] sm:$0xf]
        %vm317 = vcmask 31744
        %v319 = vsel %vm317, %v316, 0
        %vm321 = vcmask 1041408
        %v323 = vsel %vm321, %v315, 0
        %325 = vmatprep.subr.bf16.mxu0 0
        %326 = vmatpush1.bf16.msra.mxu0 0
        %327 = vmatprep.subr.bf16.mxu0 0
        %328 = vmatpush1.bf16.msra.mxu0 0
        %329 = vmatprep.subr.bf16.mxu0 0
        %330 = vmatpush1.bf16.msra.mxu0 0
        %331 = vmatprep.subr.bf16.mxu0 0
        %332 = vmatpush1.bf16.msra.mxu0 0
        %333 = vmatprep.subr.bf16.mxu0 0
        %334 = vmatpush1.bf16.msra.mxu0 0
        %335 = vmatprep.subr.bf16.mxu0 0
        %336 = vmatpush1.bf16.msra.mxu0 0
        %337 = vmatprep.subr.bf16.mxu0 0
        %338 = vmatpush1.bf16.msra.mxu0 0
        %339 = vmatprep.subr.bf16.mxu0 0
        %340 = vmatpush1.bf16.msra.mxu0 %v323
        %341 = vmatprep.subr.bf16.mxu0 0
        %342 = vmatpush2.bf16.msra.mxu0 0
        %343 = vmatprep.subr.bf16.mxu0 0
        %344 = vmatpush2.bf16.msra.mxu0 0
        %345 = vmatprep.subr.bf16.mxu0 0
        %346 = vmatpush2.bf16.msra.mxu0 0
        %347 = vmatprep.subr.bf16.mxu0 0
        %348 = vmatpush2.bf16.msra.mxu0 0
        %349 = vmatprep.subr.bf16.mxu0 0
        %350 = vmatpush2.bf16.msra.mxu0 0
        %351 = vmatprep.subr.bf16.mxu0 0
        %352 = vmatpush2.bf16.msra.mxu0 0
        %353 = vmatprep.subr.bf16.mxu0 0
        %354 = vmatpush2.bf16.msra.mxu0 0
        %355 = vmatprep.subr.bf16.mxu0 0
        %356 = vmatpush2.bf16.msra.mxu0 0
        %357 = vmatprep.mubr.bf16.mxu0 0
        %358 = vmatmul.mubr.bf16.gmra.mxu0 %v319
        %v359 = vpop.f32.mrf.mxu0
        %v360 = vadd.f32 0.0, %v359
        %v361 = vpop.f32.mrf.mxu0
        %v362 = vpop.f32.mrf.mxu0
        %v363 = vpop.f32.mrf.mxu0
        %364 = vdwg.mxu0
        %v366 = vsel %vm317, %v302, 0
        %v369 = vsel %vm321, %v301, 0
        %371 = vmatprep.subr.bf16.mxu0 0
        %372 = vmatpush1.bf16.msra.mxu0 0
        %373 = vmatprep.subr.bf16.mxu0 0
        %374 = vmatpush1.bf16.msra.mxu0 0
        %375 = vmatprep.subr.bf16.mxu0 0
        %376 = vmatpush1.bf16.msra.mxu0 0
        %377 = vmatprep.subr.bf16.mxu0 0
        %378 = vmatpush1.bf16.msra.mxu0 0
        %379 = vmatprep.subr.bf16.mxu0 0
        %380 = vmatpush1.bf16.msra.mxu0 0
        %381 = vmatprep.subr.bf16.mxu0 0
        %382 = vmatpush1.bf16.msra.mxu0 0
        %383 = vmatprep.subr.bf16.mxu0 0
        %384 = vmatpush1.bf16.msra.mxu0 0
        %385 = vmatprep.subr.bf16.mxu0 0
        %386 = vmatpush1.bf16.msra.mxu0 %v369
        %387 = vmatprep.subr.bf16.mxu0 0
        %388 = vmatpush2.bf16.msra.mxu0 0
        %389 = vmatprep.subr.bf16.mxu0 0
        %390 = vmatpush2.bf16.msra.mxu0 0
        %391 = vmatprep.subr.bf16.mxu0 0
        %392 = vmatpush2.bf16.msra.mxu0 0
        %393 = vmatprep.subr.bf16.mxu0 0
        %394 = vmatpush2.bf16.msra.mxu0 0
        %395 = vmatprep.subr.bf16.mxu0 0
        %396 = vmatpush2.bf16.msra.mxu0 0
        %397 = vmatprep.subr.bf16.mxu0 0
        %398 = vmatpush2.bf16.msra.mxu0 0
        %399 = vmatprep.subr.bf16.mxu0 0
        %400 = vmatpush2.bf16.msra.mxu0 0
        %401 = vmatprep.subr.bf16.mxu0 0
        %402 = vmatpush2.bf16.msra.mxu0 0
        %403 = vmatprep.mubr.bf16.mxu0 0
        %404 = vmatmul.mubr.bf16.gmra.mxu0 %v366
        %v405 = vpop.f32.mrf.mxu0
        %v406 = vadd.f32 %v360, %v405
        %v407 = vpop.f32.mrf.mxu0
        %v408 = vpop.f32.mrf.mxu0
        %v409 = vpop.f32.mrf.mxu0
        %410 = vdwg.mxu0
        %411 = vrot.lane.b32.xlu0 %v282, 8
        %v412 = vpop.permute.xlu0 %411
        %v414 = vsel %vm307, 0.0, %v412
        %v415 = vsel %vm313, %v414, 0.0
        %v416 = vpack.c.bf16 %v415, %v415
        %v417 = vld [vmem:[%s1 + $0x8] sm:$0xf]
        %v419 = vsel %vm317, %v417, 0
        %v422 = vsel %vm321, %v416, 0
        %424 = vmatprep.subr.bf16.mxu0 0
        %425 = vmatpush1.bf16.msra.mxu0 0
        %426 = vmatprep.subr.bf16.mxu0 0
        %427 = vmatpush1.bf16.msra.mxu0 0
        %428 = vmatprep.subr.bf16.mxu0 0
        %429 = vmatpush1.bf16.msra.mxu0 0
        %430 = vmatprep.subr.bf16.mxu0 0
        %431 = vmatpush1.bf16.msra.mxu0 0
        %432 = vmatprep.subr.bf16.mxu0 0
        %433 = vmatpush1.bf16.msra.mxu0 0
        %434 = vmatprep.subr.bf16.mxu0 0
        %435 = vmatpush1.bf16.msra.mxu0 0
        %436 = vmatprep.subr.bf16.mxu0 0
        %437 = vmatpush1.bf16.msra.mxu0 0
        %438 = vmatprep.subr.bf16.mxu0 0
        %439 = vmatpush1.bf16.msra.mxu0 %v422
        %440 = vmatprep.subr.bf16.mxu0 0
        %441 = vmatpush2.bf16.msra.mxu0 0
        %442 = vmatprep.subr.bf16.mxu0 0
        %443 = vmatpush2.bf16.msra.mxu0 0
        %444 = vmatprep.subr.bf16.mxu0 0
        %445 = vmatpush2.bf16.msra.mxu0 0
        %446 = vmatprep.subr.bf16.mxu0 0
        %447 = vmatpush2.bf16.msra.mxu0 0
        %448 = vmatprep.subr.bf16.mxu0 0
        %449 = vmatpush2.bf16.msra.mxu0 0
        %450 = vmatprep.subr.bf16.mxu0 0
        %451 = vmatpush2.bf16.msra.mxu0 0
        %452 = vmatprep.subr.bf16.mxu0 0
        %453 = vmatpush2.bf16.msra.mxu0 0
        %454 = vmatprep.subr.bf16.mxu0 0
        %455 = vmatpush2.bf16.msra.mxu0 0
        %456 = vmatprep.mubr.bf16.mxu0 0
        %457 = vmatmul.mubr.bf16.gmra.mxu0 %v419
        %v458 = vpop.f32.mrf.mxu0
        %v459 = vadd.f32 0.0, %v458
        %v460 = vpop.f32.mrf.mxu0
        %v461 = vpop.f32.mrf.mxu0
        %v462 = vpop.f32.mrf.mxu0
        %463 = vdwg.mxu0
        %v464 = vadd.f32 %v406, %v459
        %466 = vrot.lane.b32.xlu0 %v280, 1
        %v467 = vpop.permute.xlu0 %466
        %vm469 = vcmask 7168
        %v470 = vsel %vm469, 0.0, %v467
        %v471 = vlaneseq
        %v472 = vshrl.u32 %v471, 7
        %v473 = vsub.s32 3, %v472
        %v474 = vrot.slane %v294, %v473
        %vm475 = vcmp.eq.s32.totalorder %v474, 1
        %v476 = vsel %vm475, %v470, 0.0
        %v477 = vpack.c.bf16 %v476, %v476
        %v478 = vld [vmem:[%s1 + $0xc] sm:$0xf]
        %v480 = vsel %vm317, %v478, 0
        %v483 = vsel %vm321, %v477, 0
        %485 = vmatprep.subr.bf16.mxu0 0
        %486 = vmatpush1.bf16.msra.mxu0 0
        %487 = vmatprep.subr.bf16.mxu0 0
        %488 = vmatpush1.bf16.msra.mxu0 0
        %489 = vmatprep.subr.bf16.mxu0 0
        %490 = vmatpush1.bf16.msra.mxu0 0
        %491 = vmatprep.subr.bf16.mxu0 0
        %492 = vmatpush1.bf16.msra.mxu0 0
        %493 = vmatprep.subr.bf16.mxu0 0
        %494 = vmatpush1.bf16.msra.mxu0 0
        %495 = vmatprep.subr.bf16.mxu0 0
        %496 = vmatpush1.bf16.msra.mxu0 0
        %497 = vmatprep.subr.bf16.mxu0 0
        %498 = vmatpush1.bf16.msra.mxu0 0
        %499 = vmatprep.subr.bf16.mxu0 0
        %500 = vmatpush1.bf16.msra.mxu0 %v483
        %501 = vmatprep.subr.bf16.mxu0 0
        %502 = vmatpush2.bf16.msra.mxu0 0
        %503 = vmatprep.subr.bf16.mxu0 0
        %504 = vmatpush2.bf16.msra.mxu0 0
        %505 = vmatprep.subr.bf16.mxu0 0
        %506 = vmatpush2.bf16.msra.mxu0 0
        %507 = vmatprep.subr.bf16.mxu0 0
        %508 = vmatpush2.bf16.msra.mxu0 0
        %509 = vmatprep.subr.bf16.mxu0 0
        %510 = vmatpush2.bf16.msra.mxu0 0
        %511 = vmatprep.subr.bf16.mxu0 0
        %512 = vmatpush2.bf16.msra.mxu0 0
        %513 = vmatprep.subr.bf16.mxu0 0
        %514 = vmatpush2.bf16.msra.mxu0 0
        %515 = vmatprep.subr.bf16.mxu0 0
        %516 = vmatpush2.bf16.msra.mxu0 0
        %517 = vmatprep.mubr.bf16.mxu0 0
        %518 = vmatmul.mubr.bf16.gmra.mxu0 %v480
        %v519 = vpop.f32.mrf.mxu0
        %v520 = vadd.f32 0.0, %v519
        %v521 = vpop.f32.mrf.mxu0
        %v522 = vpop.f32.mrf.mxu0
        %v523 = vpop.f32.mrf.mxu0
        %524 = vdwg.mxu0
        %v525 = vadd.f32 %v464, %v520
        %v526 = vpack.c.bf16 %v279, %v279
        %v527 = vld [vmem:[%s1 + $0x10] sm:$0xf]
        %v529 = vsel %vm317, %v527, 0
        %v532 = vsel %vm321, %v526, 0
        %534 = vmatprep.subr.bf16.mxu0 0
        %535 = vmatpush1.bf16.msra.mxu0 0
        %536 = vmatprep.subr.bf16.mxu0 0
        %537 = vmatpush1.bf16.msra.mxu0 0
        %538 = vmatprep.subr.bf16.mxu0 0
        %539 = vmatpush1.bf16.msra.mxu0 0
        %540 = vmatprep.subr.bf16.mxu0 0
        %541 = vmatpush1.bf16.msra.mxu0 0
        %542 = vmatprep.subr.bf16.mxu0 0
        %543 = vmatpush1.bf16.msra.mxu0 0
        %544 = vmatprep.subr.bf16.mxu0 0
        %545 = vmatpush1.bf16.msra.mxu0 0
        %546 = vmatprep.subr.bf16.mxu0 0
        %547 = vmatpush1.bf16.msra.mxu0 0
        %548 = vmatprep.subr.bf16.mxu0 0
        %549 = vmatpush1.bf16.msra.mxu0 %v532
        %550 = vmatprep.subr.bf16.mxu0 0
        %551 = vmatpush2.bf16.msra.mxu0 0
        %552 = vmatprep.subr.bf16.mxu0 0
        %553 = vmatpush2.bf16.msra.mxu0 0
        %554 = vmatprep.subr.bf16.mxu0 0
        %555 = vmatpush2.bf16.msra.mxu0 0
        %556 = vmatprep.subr.bf16.mxu0 0
        %557 = vmatpush2.bf16.msra.mxu0 0
        %558 = vmatprep.subr.bf16.mxu0 0
        %559 = vmatpush2.bf16.msra.mxu0 0
        %560 = vmatprep.subr.bf16.mxu0 0
        %561 = vmatpush2.bf16.msra.mxu0 0
        %562 = vmatprep.subr.bf16.mxu0 0
        %563 = vmatpush2.bf16.msra.mxu0 0
        %564 = vmatprep.subr.bf16.mxu0 0
        %565 = vmatpush2.bf16.msra.mxu0 0
        %566 = vmatprep.mubr.bf16.mxu0 0
        %567 = vmatmul.mubr.bf16.gmra.mxu0 %v529
        %v568 = vpop.f32.mrf.mxu0
        %v569 = vadd.f32 0.0, %v568
        %v570 = vpop.f32.mrf.mxu0
        %v571 = vpop.f32.mrf.mxu0
        %v572 = vpop.f32.mrf.mxu0
        %573 = vdwg.mxu0
        %v574 = vadd.f32 %v525, %v569
        %v575 = vpack.c.bf16 %v280, %v280
        %v576 = vld [vmem:[%s1 + $0x14] sm:$0xf]
        %v578 = vsel %vm317, %v576, 0
        %v581 = vsel %vm321, %v575, 0
        %583 = vmatprep.subr.bf16.mxu0 0
        %584 = vmatpush1.bf16.msra.mxu0 0
        %585 = vmatprep.subr.bf16.mxu0 0
        %586 = vmatpush1.bf16.msra.mxu0 0
        %587 = vmatprep.subr.bf16.mxu0 0
        %588 = vmatpush1.bf16.msra.mxu0 0
        %589 = vmatprep.subr.bf16.mxu0 0
        %590 = vmatpush1.bf16.msra.mxu0 0
        %591 = vmatprep.subr.bf16.mxu0 0
        %592 = vmatpush1.bf16.msra.mxu0 0
        %593 = vmatprep.subr.bf16.mxu0 0
        %594 = vmatpush1.bf16.msra.mxu0 0
        %595 = vmatprep.subr.bf16.mxu0 0
        %596 = vmatpush1.bf16.msra.mxu0 0
        %597 = vmatprep.subr.bf16.mxu0 0
        %598 = vmatpush1.bf16.msra.mxu0 %v581
        %599 = vmatprep.subr.bf16.mxu0 0
        %600 = vmatpush2.bf16.msra.mxu0 0
        %601 = vmatprep.subr.bf16.mxu0 0
        %602 = vmatpush2.bf16.msra.mxu0 0
        %603 = vmatprep.subr.bf16.mxu0 0
        %604 = vmatpush2.bf16.msra.mxu0 0
        %605 = vmatprep.subr.bf16.mxu0 0
        %606 = vmatpush2.bf16.msra.mxu0 0
        %607 = vmatprep.subr.bf16.mxu0 0
        %608 = vmatpush2.bf16.msra.mxu0 0
        %609 = vmatprep.subr.bf16.mxu0 0
        %610 = vmatpush2.bf16.msra.mxu0 0
        %611 = vmatprep.subr.bf16.mxu0 0
        %612 = vmatpush2.bf16.msra.mxu0 0
        %613 = vmatprep.subr.bf16.mxu0 0
        %614 = vmatpush2.bf16.msra.mxu0 0
        %615 = vmatprep.mubr.bf16.mxu0 0
        %616 = vmatmul.mubr.bf16.gmra.mxu0 %v578
        %v617 = vpop.f32.mrf.mxu0
        %v618 = vadd.f32 0.0, %v617
        %v619 = vpop.f32.mrf.mxu0
        %v620 = vpop.f32.mrf.mxu0
        %v621 = vpop.f32.mrf.mxu0
        %622 = vdwg.mxu0
        %v623 = vadd.f32 %v574, %v618
        %624 = vrot.lane.b32.xlu0 %v282, 1
        %v625 = vpop.permute.xlu0 %624
        %v627 = vsel %vm469, 0.0, %v625
        %v628 = vsel %vm475, %v627, 0.0
        %v629 = vpack.c.bf16 %v628, %v628
        %v630 = vld [vmem:[%s1 + $0x18] sm:$0xf]
        %v632 = vsel %vm317, %v630, 0
        %v635 = vsel %vm321, %v629, 0
        %637 = vmatprep.subr.bf16.mxu0 0
        %638 = vmatpush1.bf16.msra.mxu0 0
        %639 = vmatprep.subr.bf16.mxu0 0
        %640 = vmatpush1.bf16.msra.mxu0 0
        %641 = vmatprep.subr.bf16.mxu0 0
        %642 = vmatpush1.bf16.msra.mxu0 0
        %643 = vmatprep.subr.bf16.mxu0 0
        %644 = vmatpush1.bf16.msra.mxu0 0
        %645 = vmatprep.subr.bf16.mxu0 0
        %646 = vmatpush1.bf16.msra.mxu0 0
        %647 = vmatprep.subr.bf16.mxu0 0
        %648 = vmatpush1.bf16.msra.mxu0 0
        %649 = vmatprep.subr.bf16.mxu0 0
        %650 = vmatpush1.bf16.msra.mxu0 0
        %651 = vmatprep.subr.bf16.mxu0 0
        %652 = vmatpush1.bf16.msra.mxu0 %v635
        %653 = vmatprep.subr.bf16.mxu0 0
        %654 = vmatpush2.bf16.msra.mxu0 0
        %655 = vmatprep.subr.bf16.mxu0 0
        %656 = vmatpush2.bf16.msra.mxu0 0
        %657 = vmatprep.subr.bf16.mxu0 0
        %658 = vmatpush2.bf16.msra.mxu0 0
        %659 = vmatprep.subr.bf16.mxu0 0
        %660 = vmatpush2.bf16.msra.mxu0 0
        %661 = vmatprep.subr.bf16.mxu0 0
        %662 = vmatpush2.bf16.msra.mxu0 0
        %663 = vmatprep.subr.bf16.mxu0 0
        %664 = vmatpush2.bf16.msra.mxu0 0
        %665 = vmatprep.subr.bf16.mxu0 0
        %666 = vmatpush2.bf16.msra.mxu0 0
        %667 = vmatprep.subr.bf16.mxu0 0
        %668 = vmatpush2.bf16.msra.mxu0 0
        %669 = vmatprep.mubr.bf16.mxu0 0
        %670 = vmatmul.mubr.bf16.gmra.mxu0 %v632
        %v671 = vpop.f32.mrf.mxu0
        %v672 = vadd.f32 0.0, %v671
        %v673 = vpop.f32.mrf.mxu0
        %v674 = vpop.f32.mrf.mxu0
        %v675 = vpop.f32.mrf.mxu0
        %676 = vdwg.mxu0
        %v677 = vadd.f32 %v623, %v672
        %v678 = vpack.c.bf16 %v281, %v281
        %v679 = vld [vmem:[%s1 + $0x1c] sm:$0xf]
        %v681 = vsel %vm317, %v679, 0
        %v684 = vsel %vm321, %v678, 0
        %686 = vmatprep.subr.bf16.mxu0 0
        %687 = vmatpush1.bf16.msra.mxu0 0
        %688 = vmatprep.subr.bf16.mxu0 0
        %689 = vmatpush1.bf16.msra.mxu0 0
        %690 = vmatprep.subr.bf16.mxu0 0
        %691 = vmatpush1.bf16.msra.mxu0 0
        %692 = vmatprep.subr.bf16.mxu0 0
        %693 = vmatpush1.bf16.msra.mxu0 0
        %694 = vmatprep.subr.bf16.mxu0 0
        %695 = vmatpush1.bf16.msra.mxu0 0
        %696 = vmatprep.subr.bf16.mxu0 0
        %697 = vmatpush1.bf16.msra.mxu0 0
        %698 = vmatprep.subr.bf16.mxu0 0
        %699 = vmatpush1.bf16.msra.mxu0 0
        %700 = vmatprep.subr.bf16.mxu0 0
        %701 = vmatpush1.bf16.msra.mxu0 %v684
        %702 = vmatprep.subr.bf16.mxu0 0
        %703 = vmatpush2.bf16.msra.mxu0 0
        %704 = vmatprep.subr.bf16.mxu0 0
        %705 = vmatpush2.bf16.msra.mxu0 0
        %706 = vmatprep.subr.bf16.mxu0 0
        %707 = vmatpush2.bf16.msra.mxu0 0
        %708 = vmatprep.subr.bf16.mxu0 0
        %709 = vmatpush2.bf16.msra.mxu0 0
        %710 = vmatprep.subr.bf16.mxu0 0
        %711 = vmatpush2.bf16.msra.mxu0 0
        %712 = vmatprep.subr.bf16.mxu0 0
        %713 = vmatpush2.bf16.msra.mxu0 0
        %714 = vmatprep.subr.bf16.mxu0 0
        %715 = vmatpush2.bf16.msra.mxu0 0
        %716 = vmatprep.subr.bf16.mxu0 0
        %717 = vmatpush2.bf16.msra.mxu0 0
        %718 = vmatprep.mubr.bf16.mxu0 0
        %719 = vmatmul.mubr.bf16.gmra.mxu0 %v681
        %v720 = vpop.f32.mrf.mxu0
        %v721 = vadd.f32 0.0, %v720
        %v722 = vpop.f32.mrf.mxu0
        %v723 = vpop.f32.mrf.mxu0
        %v724 = vpop.f32.mrf.mxu0
        %725 = vdwg.mxu0
        %v726 = vadd.f32 %v677, %v721
        %v727 = vpack.c.bf16 %v282, %v282
        %v728 = vld [vmem:[%s1 + $0x20] sm:$0xf]
        %v730 = vsel %vm317, %v728, 0
        %v733 = vsel %vm321, %v727, 0
        %735 = vmatprep.subr.bf16.mxu0 0
        %736 = vmatpush1.bf16.msra.mxu0 0
        %737 = vmatprep.subr.bf16.mxu0 0
        %738 = vmatpush1.bf16.msra.mxu0 0
        %739 = vmatprep.subr.bf16.mxu0 0
        %740 = vmatpush1.bf16.msra.mxu0 0
        %741 = vmatprep.subr.bf16.mxu0 0
        %742 = vmatpush1.bf16.msra.mxu0 0
        %743 = vmatprep.subr.bf16.mxu0 0
        %744 = vmatpush1.bf16.msra.mxu0 0
        %745 = vmatprep.subr.bf16.mxu0 0
        %746 = vmatpush1.bf16.msra.mxu0 0
        %747 = vmatprep.subr.bf16.mxu0 0
        %748 = vmatpush1.bf16.msra.mxu0 0
        %749 = vmatprep.subr.bf16.mxu0 0
        %750 = vmatpush1.bf16.msra.mxu0 %v733
        %751 = vmatprep.subr.bf16.mxu0 0
        %752 = vmatpush2.bf16.msra.mxu0 0
        %753 = vmatprep.subr.bf16.mxu0 0
        %754 = vmatpush2.bf16.msra.mxu0 0
        %755 = vmatprep.subr.bf16.mxu0 0
        %756 = vmatpush2.bf16.msra.mxu0 0
        %757 = vmatprep.subr.bf16.mxu0 0
        %758 = vmatpush2.bf16.msra.mxu0 0
        %759 = vmatprep.subr.bf16.mxu0 0
        %760 = vmatpush2.bf16.msra.mxu0 0
        %761 = vmatprep.subr.bf16.mxu0 0
        %762 = vmatpush2.bf16.msra.mxu0 0
        %763 = vmatprep.subr.bf16.mxu0 0
        %764 = vmatpush2.bf16.msra.mxu0 0
        %765 = vmatprep.subr.bf16.mxu0 0
        %766 = vmatpush2.bf16.msra.mxu0 0
        %767 = vmatprep.mubr.bf16.mxu0 0
        %768 = vmatmul.mubr.bf16.gmra.mxu0 %v730
        %v769 = vpop.f32.mrf.mxu0
        %v770 = vadd.f32 0.0, %v769
        %v771 = vpop.f32.mrf.mxu0
        %v772 = vpop.f32.mrf.mxu0
        %v773 = vpop.f32.mrf.mxu0
        %774 = vdwg.mxu0
        %v775 = vadd.f32 %v726, %v770
        %777 = vset.pattern.permute.xlu0 0
        %778 = vperm.xlu0 %777, %v283
        %v779 = vpop.permute.xlu0 %778
        %v781 = vadd.f32 %v775, %v779
        %782 = vmatprep.subr.bf16.mxu0 0
        %783 = vmatpush1.bf16.msra.mxu0 0
        %784 = vmatprep.subr.bf16.mxu0 0
        %785 = vmatpush1.bf16.msra.mxu0 0
        %786 = vmatprep.subr.bf16.mxu0 0
        %787 = vmatpush1.bf16.msra.mxu0 0
        %788 = vmatprep.subr.bf16.mxu0 0
        %789 = vmatpush1.bf16.msra.mxu0 0
        %790 = vmatprep.subr.bf16.mxu0 0
        %791 = vmatpush1.bf16.msra.mxu0 0
        %792 = vmatprep.subr.bf16.mxu0 0
        %793 = vmatpush1.bf16.msra.mxu0 0
        %794 = vmatprep.subr.bf16.mxu0 0
        %795 = vmatpush1.bf16.msra.mxu0 0
        %796 = vmatprep.subr.bf16.mxu0 0
        %797 = vmatpush1.bf16.msra.mxu0 %v422
        %798 = vmatprep.subr.bf16.mxu0 0
        %799 = vmatpush2.bf16.msra.mxu0 0
        %800 = vmatprep.subr.bf16.mxu0 0
        %801 = vmatpush2.bf16.msra.mxu0 0
        %802 = vmatprep.subr.bf16.mxu0 0
        %803 = vmatpush2.bf16.msra.mxu0 0
        %804 = vmatprep.subr.bf16.mxu0 0
        %805 = vmatpush2.bf16.msra.mxu0 0
        %806 = vmatprep.subr.bf16.mxu0 0
        %807 = vmatpush2.bf16.msra.mxu0 0
        %808 = vmatprep.subr.bf16.mxu0 0
        %809 = vmatpush2.bf16.msra.mxu0 0
        %810 = vmatprep.subr.bf16.mxu0 0
        %811 = vmatpush2.bf16.msra.mxu0 0
        %812 = vmatprep.subr.bf16.mxu0 0
        %813 = vmatpush2.bf16.msra.mxu0 0
        %814 = vmatprep.mubr.bf16.mxu0 0
        %815 = vmatmul.mubr.bf16.gmra.mxu0 %v319
        %v816 = vpop.f32.mrf.mxu0
        %v817 = vadd.f32 0.0, %v816
        %v818 = vpop.f32.mrf.mxu0
        %v819 = vpop.f32.mrf.mxu0
        %v820 = vpop.f32.mrf.mxu0
        %821 = vdwg.mxu0
        %822 = vmatprep.subr.bf16.mxu0 0
        %823 = vmatpush1.bf16.msra.mxu0 0
        %824 = vmatprep.subr.bf16.mxu0 0
        %825 = vmatpush1.bf16.msra.mxu0 0
        %826 = vmatprep.subr.bf16.mxu0 0
        %827 = vmatpush1.bf16.msra.mxu0 0
        %828 = vmatprep.subr.bf16.mxu0 0
        %829 = vmatpush1.bf16.msra.mxu0 0
        %830 = vmatprep.subr.bf16.mxu0 0
        %831 = vmatpush1.bf16.msra.mxu0 0
        %832 = vmatprep.subr.bf16.mxu0 0
        %833 = vmatpush1.bf16.msra.mxu0 0
        %834 = vmatprep.subr.bf16.mxu0 0
        %835 = vmatpush1.bf16.msra.mxu0 0
        %836 = vmatprep.subr.bf16.mxu0 0
        %837 = vmatpush1.bf16.msra.mxu0 %v323
        %838 = vmatprep.subr.bf16.mxu0 0
        %839 = vmatpush2.bf16.msra.mxu0 0
        %840 = vmatprep.subr.bf16.mxu0 0
        %841 = vmatpush2.bf16.msra.mxu0 0
        %842 = vmatprep.subr.bf16.mxu0 0
        %843 = vmatpush2.bf16.msra.mxu0 0
        %844 = vmatprep.subr.bf16.mxu0 0
        %845 = vmatpush2.bf16.msra.mxu0 0
        %846 = vmatprep.subr.bf16.mxu0 0
        %847 = vmatpush2.bf16.msra.mxu0 0
        %848 = vmatprep.subr.bf16.mxu0 0
        %849 = vmatpush2.bf16.msra.mxu0 0
        %850 = vmatprep.subr.bf16.mxu0 0
        %851 = vmatpush2.bf16.msra.mxu0 0
        %852 = vmatprep.subr.bf16.mxu0 0
        %853 = vmatpush2.bf16.msra.mxu0 0
        %854 = vmatprep.mubr.bf16.mxu0 0
        %855 = vmatmul.mubr.bf16.gmra.mxu0 %v366
        %v856 = vpop.f32.mrf.mxu0
        %v857 = vadd.f32 %v817, %v856
        %v858 = vpop.f32.mrf.mxu0
        %v859 = vpop.f32.mrf.mxu0
        %v860 = vpop.f32.mrf.mxu0
        %861 = vdwg.mxu0
        %862 = vrot.lane.b32.xlu0 %v281, 7
        %v863 = vpop.permute.xlu0 %862
        %vm865 = vcmask 56320
        %v866 = vsel %vm865, 0.0, %v863
        %v867 = vlaneseq
        %v868 = vshrl.u32 %v867, 7
        %v869 = vsub.s32 2, %v868
        %v870 = vrot.slane %v294, %v869
        %vm871 = vcmp.eq.s32.totalorder %v870, 1
        %v872 = vsel %vm871, %v866, 0.0
        %v873 = vpack.c.bf16 %v872, %v872
        %v875 = vsel %vm321, %v873, 0
        %877 = vmatprep.subr.bf16.mxu0 0
        %878 = vmatpush1.bf16.msra.mxu0 0
        %879 = vmatprep.subr.bf16.mxu0 0
        %880 = vmatpush1.bf16.msra.mxu0 0
        %881 = vmatprep.subr.bf16.mxu0 0
        %882 = vmatpush1.bf16.msra.mxu0 0
        %883 = vmatprep.subr.bf16.mxu0 0
        %884 = vmatpush1.bf16.msra.mxu0 0
        %885 = vmatprep.subr.bf16.mxu0 0
        %886 = vmatpush1.bf16.msra.mxu0 0
        %887 = vmatprep.subr.bf16.mxu0 0
        %888 = vmatpush1.bf16.msra.mxu0 0
        %889 = vmatprep.subr.bf16.mxu0 0
        %890 = vmatpush1.bf16.msra.mxu0 0
        %891 = vmatprep.subr.bf16.mxu0 0
        %892 = vmatpush1.bf16.msra.mxu0 %v875
        %893 = vmatprep.subr.bf16.mxu0 0
        %894 = vmatpush2.bf16.msra.mxu0 0
        %895 = vmatprep.subr.bf16.mxu0 0
        %896 = vmatpush2.bf16.msra.mxu0 0
        %897 = vmatprep.subr.bf16.mxu0 0
        %898 = vmatpush2.bf16.msra.mxu0 0
        %899 = vmatprep.subr.bf16.mxu0 0
        %900 = vmatpush2.bf16.msra.mxu0 0
        %901 = vmatprep.subr.bf16.mxu0 0
        %902 = vmatpush2.bf16.msra.mxu0 0
        %903 = vmatprep.subr.bf16.mxu0 0
        %904 = vmatpush2.bf16.msra.mxu0 0
        %905 = vmatprep.subr.bf16.mxu0 0
        %906 = vmatpush2.bf16.msra.mxu0 0
        %907 = vmatprep.subr.bf16.mxu0 0
        %908 = vmatpush2.bf16.msra.mxu0 0
        %909 = vmatprep.mubr.bf16.mxu0 0
        %910 = vmatmul.mubr.bf16.gmra.mxu0 %v419
        %v911 = vpop.f32.mrf.mxu0
        %v912 = vadd.f32 0.0, %v911
        %v913 = vpop.f32.mrf.mxu0
        %v914 = vpop.f32.mrf.mxu0
        %v915 = vpop.f32.mrf.mxu0
        %916 = vdwg.mxu0
        %v917 = vadd.f32 %v857, %v912
        %918 = vmatprep.subr.bf16.mxu0 0
        %919 = vmatpush1.bf16.msra.mxu0 0
        %920 = vmatprep.subr.bf16.mxu0 0
        %921 = vmatpush1.bf16.msra.mxu0 0
        %922 = vmatprep.subr.bf16.mxu0 0
        %923 = vmatpush1.bf16.msra.mxu0 0
        %924 = vmatprep.subr.bf16.mxu0 0
        %925 = vmatpush1.bf16.msra.mxu0 0
        %926 = vmatprep.subr.bf16.mxu0 0
        %927 = vmatpush1.bf16.msra.mxu0 0
        %928 = vmatprep.subr.bf16.mxu0 0
        %929 = vmatpush1.bf16.msra.mxu0 0
        %930 = vmatprep.subr.bf16.mxu0 0
        %931 = vmatpush1.bf16.msra.mxu0 0
        %932 = vmatprep.subr.bf16.mxu0 0
        %933 = vmatpush1.bf16.msra.mxu0 %v532
        %934 = vmatprep.subr.bf16.mxu0 0
        %935 = vmatpush2.bf16.msra.mxu0 0
        %936 = vmatprep.subr.bf16.mxu0 0
        %937 = vmatpush2.bf16.msra.mxu0 0
        %938 = vmatprep.subr.bf16.mxu0 0
        %939 = vmatpush2.bf16.msra.mxu0 0
        %940 = vmatprep.subr.bf16.mxu0 0
        %941 = vmatpush2.bf16.msra.mxu0 0
        %942 = vmatprep.subr.bf16.mxu0 0
        %943 = vmatpush2.bf16.msra.mxu0 0
        %944 = vmatprep.subr.bf16.mxu0 0
        %945 = vmatpush2.bf16.msra.mxu0 0
        %946 = vmatprep.subr.bf16.mxu0 0
        %947 = vmatpush2.bf16.msra.mxu0 0
        %948 = vmatprep.subr.bf16.mxu0 0
        %949 = vmatpush2.bf16.msra.mxu0 0
        %950 = vmatprep.mubr.bf16.mxu0 0
        %951 = vmatmul.mubr.bf16.gmra.mxu0 %v480
        %v952 = vpop.f32.mrf.mxu0
        %v953 = vadd.f32 0.0, %v952
        %v954 = vpop.f32.mrf.mxu0
        %v955 = vpop.f32.mrf.mxu0
        %v956 = vpop.f32.mrf.mxu0
        %957 = vdwg.mxu0
        %v958 = vadd.f32 %v917, %v953
        %959 = vmatprep.subr.bf16.mxu0 0
        %960 = vmatpush1.bf16.msra.mxu0 0
        %961 = vmatprep.subr.bf16.mxu0 0
        %962 = vmatpush1.bf16.msra.mxu0 0
        %963 = vmatprep.subr.bf16.mxu0 0
        %964 = vmatpush1.bf16.msra.mxu0 0
        %965 = vmatprep.subr.bf16.mxu0 0
        %966 = vmatpush1.bf16.msra.mxu0 0
        %967 = vmatprep.subr.bf16.mxu0 0
        %968 = vmatpush1.bf16.msra.mxu0 0
        %969 = vmatprep.subr.bf16.mxu0 0
        %970 = vmatpush1.bf16.msra.mxu0 0
        %971 = vmatprep.subr.bf16.mxu0 0
        %972 = vmatpush1.bf16.msra.mxu0 0
        %973 = vmatprep.subr.bf16.mxu0 0
        %974 = vmatpush1.bf16.msra.mxu0 %v581
        %975 = vmatprep.subr.bf16.mxu0 0
        %976 = vmatpush2.bf16.msra.mxu0 0
        %977 = vmatprep.subr.bf16.mxu0 0
        %978 = vmatpush2.bf16.msra.mxu0 0
        %979 = vmatprep.subr.bf16.mxu0 0
        %980 = vmatpush2.bf16.msra.mxu0 0
        %981 = vmatprep.subr.bf16.mxu0 0
        %982 = vmatpush2.bf16.msra.mxu0 0
        %983 = vmatprep.subr.bf16.mxu0 0
        %984 = vmatpush2.bf16.msra.mxu0 0
        %985 = vmatprep.subr.bf16.mxu0 0
        %986 = vmatpush2.bf16.msra.mxu0 0
        %987 = vmatprep.subr.bf16.mxu0 0
        %988 = vmatpush2.bf16.msra.mxu0 0
        %989 = vmatprep.subr.bf16.mxu0 0
        %990 = vmatpush2.bf16.msra.mxu0 0
        %991 = vmatprep.mubr.bf16.mxu0 0
        %992 = vmatmul.mubr.bf16.gmra.mxu0 %v529
        %v993 = vpop.f32.mrf.mxu0
        %v994 = vadd.f32 0.0, %v993
        %v995 = vpop.f32.mrf.mxu0
        %v996 = vpop.f32.mrf.mxu0
        %v997 = vpop.f32.mrf.mxu0
        %998 = vdwg.mxu0
        %v999 = vadd.f32 %v958, %v994
        %1001 = vrot.lane.b32.xlu0 %v279, 127
        %v1002 = vpop.permute.xlu0 %1001
        %vm1004 = vcmask 1039360
        %v1005 = vsel %vm1004, %v1002, 0.0
        %v1006 = vlaneseq
        %v1007 = vshrl.u32 %v1006, 7
        %v1008 = vsub.s32 5, %v1007
        %v1009 = vrot.slane %v294, %v1008
        %vm1010 = vcmp.eq.s32.totalorder %v1009, 1
        %v1011 = vsel %vm1010, %v1005, 0.0
        %v1012 = vpack.c.bf16 %v1011, %v1011
        %v1014 = vsel %vm321, %v1012, 0
        %1016 = vmatprep.subr.bf16.mxu0 0
        %1017 = vmatpush1.bf16.msra.mxu0 0
        %1018 = vmatprep.subr.bf16.mxu0 0
        %1019 = vmatpush1.bf16.msra.mxu0 0
        %1020 = vmatprep.subr.bf16.mxu0 0
        %1021 = vmatpush1.bf16.msra.mxu0 0
        %1022 = vmatprep.subr.bf16.mxu0 0
        %1023 = vmatpush1.bf16.msra.mxu0 0
        %1024 = vmatprep.subr.bf16.mxu0 0
        %1025 = vmatpush1.bf16.msra.mxu0 0
        %1026 = vmatprep.subr.bf16.mxu0 0
        %1027 = vmatpush1.bf16.msra.mxu0 0
        %1028 = vmatprep.subr.bf16.mxu0 0
        %1029 = vmatpush1.bf16.msra.mxu0 0
        %1030 = vmatprep.subr.bf16.mxu0 0
        %1031 = vmatpush1.bf16.msra.mxu0 %v1014
        %1032 = vmatprep.subr.bf16.mxu0 0
        %1033 = vmatpush2.bf16.msra.mxu0 0
        %1034 = vmatprep.subr.bf16.mxu0 0
        %1035 = vmatpush2.bf16.msra.mxu0 0
        %1036 = vmatprep.subr.bf16.mxu0 0
        %1037 = vmatpush2.bf16.msra.mxu0 0
        %1038 = vmatprep.subr.bf16.mxu0 0
        %1039 = vmatpush2.bf16.msra.mxu0 0
        %1040 = vmatprep.subr.bf16.mxu0 0
        %1041 = vmatpush2.bf16.msra.mxu0 0
        %1042 = vmatprep.subr.bf16.mxu0 0
        %1043 = vmatpush2.bf16.msra.mxu0 0
        %1044 = vmatprep.subr.bf16.mxu0 0
        %1045 = vmatpush2.bf16.msra.mxu0 0
        %1046 = vmatprep.subr.bf16.mxu0 0
        %1047 = vmatpush2.bf16.msra.mxu0 0
        %1048 = vmatprep.mubr.bf16.mxu0 0
        %1049 = vmatmul.mubr.bf16.gmra.mxu0 %v578
        %v1050 = vpop.f32.mrf.mxu0
        %v1051 = vadd.f32 0.0, %v1050
        %v1052 = vpop.f32.mrf.mxu0
        %v1053 = vpop.f32.mrf.mxu0
        %v1054 = vpop.f32.mrf.mxu0
        %1055 = vdwg.mxu0
        %v1056 = vadd.f32 %v999, %v1051
        %1057 = vmatprep.subr.bf16.mxu0 0
        %1058 = vmatpush1.bf16.msra.mxu0 0
        %1059 = vmatprep.subr.bf16.mxu0 0
        %1060 = vmatpush1.bf16.msra.mxu0 0
        %1061 = vmatprep.subr.bf16.mxu0 0
        %1062 = vmatpush1.bf16.msra.mxu0 0
        %1063 = vmatprep.subr.bf16.mxu0 0
        %1064 = vmatpush1.bf16.msra.mxu0 0
        %1065 = vmatprep.subr.bf16.mxu0 0
        %1066 = vmatpush1.bf16.msra.mxu0 0
        %1067 = vmatprep.subr.bf16.mxu0 0
        %1068 = vmatpush1.bf16.msra.mxu0 0
        %1069 = vmatprep.subr.bf16.mxu0 0
        %1070 = vmatpush1.bf16.msra.mxu0 0
        %1071 = vmatprep.subr.bf16.mxu0 0
        %1072 = vmatpush1.bf16.msra.mxu0 %v684
        %1073 = vmatprep.subr.bf16.mxu0 0
        %1074 = vmatpush2.bf16.msra.mxu0 0
        %1075 = vmatprep.subr.bf16.mxu0 0
        %1076 = vmatpush2.bf16.msra.mxu0 0
        %1077 = vmatprep.subr.bf16.mxu0 0
        %1078 = vmatpush2.bf16.msra.mxu0 0
        %1079 = vmatprep.subr.bf16.mxu0 0
        %1080 = vmatpush2.bf16.msra.mxu0 0
        %1081 = vmatprep.subr.bf16.mxu0 0
        %1082 = vmatpush2.bf16.msra.mxu0 0
        %1083 = vmatprep.subr.bf16.mxu0 0
        %1084 = vmatpush2.bf16.msra.mxu0 0
        %1085 = vmatprep.subr.bf16.mxu0 0
        %1086 = vmatpush2.bf16.msra.mxu0 0
        %1087 = vmatprep.subr.bf16.mxu0 0
        %1088 = vmatpush2.bf16.msra.mxu0 0
        %1089 = vmatprep.mubr.bf16.mxu0 0
        %1090 = vmatmul.mubr.bf16.gmra.mxu0 %v632
        %v1091 = vpop.f32.mrf.mxu0
        %v1092 = vadd.f32 0.0, %v1091
        %v1093 = vpop.f32.mrf.mxu0
        %v1094 = vpop.f32.mrf.mxu0
        %v1095 = vpop.f32.mrf.mxu0
        %1096 = vdwg.mxu0
        %v1097 = vadd.f32 %v1056, %v1092
        %1098 = vmatprep.subr.bf16.mxu0 0
        %1099 = vmatpush1.bf16.msra.mxu0 0
        %1100 = vmatprep.subr.bf16.mxu0 0
        %1101 = vmatpush1.bf16.msra.mxu0 0
        %1102 = vmatprep.subr.bf16.mxu0 0
        %1103 = vmatpush1.bf16.msra.mxu0 0
        %1104 = vmatprep.subr.bf16.mxu0 0
        %1105 = vmatpush1.bf16.msra.mxu0 0
        %1106 = vmatprep.subr.bf16.mxu0 0
        %1107 = vmatpush1.bf16.msra.mxu0 0
        %1108 = vmatprep.subr.bf16.mxu0 0
        %1109 = vmatpush1.bf16.msra.mxu0 0
        %1110 = vmatprep.subr.bf16.mxu0 0
        %1111 = vmatpush1.bf16.msra.mxu0 0
        %1112 = vmatprep.subr.bf16.mxu0 0
        %1113 = vmatpush1.bf16.msra.mxu0 %v733
        %1114 = vmatprep.subr.bf16.mxu0 0
        %1115 = vmatpush2.bf16.msra.mxu0 0
        %1116 = vmatprep.subr.bf16.mxu0 0
        %1117 = vmatpush2.bf16.msra.mxu0 0
        %1118 = vmatprep.subr.bf16.mxu0 0
        %1119 = vmatpush2.bf16.msra.mxu0 0
        %1120 = vmatprep.subr.bf16.mxu0 0
        %1121 = vmatpush2.bf16.msra.mxu0 0
        %1122 = vmatprep.subr.bf16.mxu0 0
        %1123 = vmatpush2.bf16.msra.mxu0 0
        %1124 = vmatprep.subr.bf16.mxu0 0
        %1125 = vmatpush2.bf16.msra.mxu0 0
        %1126 = vmatprep.subr.bf16.mxu0 0
        %1127 = vmatpush2.bf16.msra.mxu0 0
        %1128 = vmatprep.subr.bf16.mxu0 0
        %1129 = vmatpush2.bf16.msra.mxu0 0
        %1130 = vmatprep.mubr.bf16.mxu0 0
        %1131 = vmatmul.mubr.bf16.gmra.mxu0 %v681
        %v1132 = vpop.f32.mrf.mxu0
        %v1133 = vadd.f32 0.0, %v1132
        %v1134 = vpop.f32.mrf.mxu0
        %v1135 = vpop.f32.mrf.mxu0
        %v1136 = vpop.f32.mrf.mxu0
        %1137 = vdwg.mxu0
        %v1138 = vadd.f32 %v1097, %v1133
        %1139 = vrot.lane.b32.xlu0 %v281, 127
        %v1140 = vpop.permute.xlu0 %1139
        %v1142 = vsel %vm1004, %v1140, 0.0
        %v1143 = vsel %vm1010, %v1142, 0.0
        %v1144 = vpack.c.bf16 %v1143, %v1143
        %v1146 = vsel %vm321, %v1144, 0
        %1148 = vmatprep.subr.bf16.mxu0 0
        %1149 = vmatpush1.bf16.msra.mxu0 0
        %1150 = vmatprep.subr.bf16.mxu0 0
        %1151 = vmatpush1.bf16.msra.mxu0 0
        %1152 = vmatprep.subr.bf16.mxu0 0
        %1153 = vmatpush1.bf16.msra.mxu0 0
        %1154 = vmatprep.subr.bf16.mxu0 0
        %1155 = vmatpush1.bf16.msra.mxu0 0
        %1156 = vmatprep.subr.bf16.mxu0 0
        %1157 = vmatpush1.bf16.msra.mxu0 0
        %1158 = vmatprep.subr.bf16.mxu0 0
        %1159 = vmatpush1.bf16.msra.mxu0 0
        %1160 = vmatprep.subr.bf16.mxu0 0
        %1161 = vmatpush1.bf16.msra.mxu0 0
        %1162 = vmatprep.subr.bf16.mxu0 0
        %1163 = vmatpush1.bf16.msra.mxu0 %v1146
        %1164 = vmatprep.subr.bf16.mxu0 0
        %1165 = vmatpush2.bf16.msra.mxu0 0
        %1166 = vmatprep.subr.bf16.mxu0 0
        %1167 = vmatpush2.bf16.msra.mxu0 0
        %1168 = vmatprep.subr.bf16.mxu0 0
        %1169 = vmatpush2.bf16.msra.mxu0 0
        %1170 = vmatprep.subr.bf16.mxu0 0
        %1171 = vmatpush2.bf16.msra.mxu0 0
        %1172 = vmatprep.subr.bf16.mxu0 0
        %1173 = vmatpush2.bf16.msra.mxu0 0
        %1174 = vmatprep.subr.bf16.mxu0 0
        %1175 = vmatpush2.bf16.msra.mxu0 0
        %1176 = vmatprep.subr.bf16.mxu0 0
        %1177 = vmatpush2.bf16.msra.mxu0 0
        %1178 = vmatprep.subr.bf16.mxu0 0
        %1179 = vmatpush2.bf16.msra.mxu0 0
        %1180 = vmatprep.mubr.bf16.mxu0 0
        %1181 = vmatmul.mubr.bf16.gmra.mxu0 %v730
        %v1182 = vpop.f32.mrf.mxu0
        %v1183 = vadd.f32 0.0, %v1182
        %v1184 = vpop.f32.mrf.mxu0
        %v1185 = vpop.f32.mrf.mxu0
        %v1186 = vpop.f32.mrf.mxu0
        %1187 = vdwg.mxu0
        %v1188 = vadd.f32 %v1138, %v1183
        %v1189 = vadd.f32 %v1188, %v779
        %1190 = vmatprep.subr.bf16.mxu0 0
        %1191 = vmatpush1.bf16.msra.mxu0 0
        %1192 = vmatprep.subr.bf16.mxu0 0
        %1193 = vmatpush1.bf16.msra.mxu0 0
        %1194 = vmatprep.subr.bf16.mxu0 0
        %1195 = vmatpush1.bf16.msra.mxu0 0
        %1196 = vmatprep.subr.bf16.mxu0 0
        %1197 = vmatpush1.bf16.msra.mxu0 0
        %1198 = vmatprep.subr.bf16.mxu0 0
        %1199 = vmatpush1.bf16.msra.mxu0 0
        %1200 = vmatprep.subr.bf16.mxu0 0
        %1201 = vmatpush1.bf16.msra.mxu0 0
        %1202 = vmatprep.subr.bf16.mxu0 0
        %1203 = vmatpush1.bf16.msra.mxu0 0
        %1204 = vmatprep.subr.bf16.mxu0 0
        %1205 = vmatpush1.bf16.msra.mxu0 %v532
        %1206 = vmatprep.subr.bf16.mxu0 0
        %1207 = vmatpush2.bf16.msra.mxu0 0
        %1208 = vmatprep.subr.bf16.mxu0 0
        %1209 = vmatpush2.bf16.msra.mxu0 0
        %1210 = vmatprep.subr.bf16.mxu0 0
        %1211 = vmatpush2.bf16.msra.mxu0 0
        %1212 = vmatprep.subr.bf16.mxu0 0
        %1213 = vmatpush2.bf16.msra.mxu0 0
        %1214 = vmatprep.subr.bf16.mxu0 0
        %1215 = vmatpush2.bf16.msra.mxu0 0
        %1216 = vmatprep.subr.bf16.mxu0 0
        %1217 = vmatpush2.bf16.msra.mxu0 0
        %1218 = vmatprep.subr.bf16.mxu0 0
        %1219 = vmatpush2.bf16.msra.mxu0 0
        %1220 = vmatprep.subr.bf16.mxu0 0
        %1221 = vmatpush2.bf16.msra.mxu0 0
        %1222 = vmatprep.mubr.bf16.mxu0 0
        %1223 = vmatmul.mubr.bf16.gmra.mxu0 %v319
        %v1224 = vpop.f32.mrf.mxu0
        %v1225 = vadd.f32 0.0, %v1224
        %v1226 = vpop.f32.mrf.mxu0
        %v1227 = vpop.f32.mrf.mxu0
        %v1228 = vpop.f32.mrf.mxu0
        %1229 = vdwg.mxu0
        %1230 = vmatprep.subr.bf16.mxu0 0
        %1231 = vmatpush1.bf16.msra.mxu0 0
        %1232 = vmatprep.subr.bf16.mxu0 0
        %1233 = vmatpush1.bf16.msra.mxu0 0
        %1234 = vmatprep.subr.bf16.mxu0 0
        %1235 = vmatpush1.bf16.msra.mxu0 0
        %1236 = vmatprep.subr.bf16.mxu0 0
        %1237 = vmatpush1.bf16.msra.mxu0 0
        %1238 = vmatprep.subr.bf16.mxu0 0
        %1239 = vmatpush1.bf16.msra.mxu0 0
        %1240 = vmatprep.subr.bf16.mxu0 0
        %1241 = vmatpush1.bf16.msra.mxu0 0
        %1242 = vmatprep.subr.bf16.mxu0 0
        %1243 = vmatpush1.bf16.msra.mxu0 0
        %1244 = vmatprep.subr.bf16.mxu0 0
        %1245 = vmatpush1.bf16.msra.mxu0 %v483
        %1246 = vmatprep.subr.bf16.mxu0 0
        %1247 = vmatpush2.bf16.msra.mxu0 0
        %1248 = vmatprep.subr.bf16.mxu0 0
        %1249 = vmatpush2.bf16.msra.mxu0 0
        %1250 = vmatprep.subr.bf16.mxu0 0
        %1251 = vmatpush2.bf16.msra.mxu0 0
        %1252 = vmatprep.subr.bf16.mxu0 0
        %1253 = vmatpush2.bf16.msra.mxu0 0
        %1254 = vmatprep.subr.bf16.mxu0 0
        %1255 = vmatpush2.bf16.msra.mxu0 0
        %1256 = vmatprep.subr.bf16.mxu0 0
        %1257 = vmatpush2.bf16.msra.mxu0 0
        %1258 = vmatprep.subr.bf16.mxu0 0
        %1259 = vmatpush2.bf16.msra.mxu0 0
        %1260 = vmatprep.subr.bf16.mxu0 0
        %1261 = vmatpush2.bf16.msra.mxu0 0
        %1262 = vmatprep.mubr.bf16.mxu0 0
        %1263 = vmatmul.mubr.bf16.gmra.mxu0 %v366
        %v1264 = vpop.f32.mrf.mxu0
        %v1265 = vadd.f32 %v1225, %v1264
        %v1266 = vpop.f32.mrf.mxu0
        %v1267 = vpop.f32.mrf.mxu0
        %v1268 = vpop.f32.mrf.mxu0
        %1269 = vdwg.mxu0
        %1270 = vmatprep.subr.bf16.mxu0 0
        %1271 = vmatpush1.bf16.msra.mxu0 0
        %1272 = vmatprep.subr.bf16.mxu0 0
        %1273 = vmatpush1.bf16.msra.mxu0 0
        %1274 = vmatprep.subr.bf16.mxu0 0
        %1275 = vmatpush1.bf16.msra.mxu0 0
        %1276 = vmatprep.subr.bf16.mxu0 0
        %1277 = vmatpush1.bf16.msra.mxu0 0
        %1278 = vmatprep.subr.bf16.mxu0 0
        %1279 = vmatpush1.bf16.msra.mxu0 0
        %1280 = vmatprep.subr.bf16.mxu0 0
        %1281 = vmatpush1.bf16.msra.mxu0 0
        %1282 = vmatprep.subr.bf16.mxu0 0
        %1283 = vmatpush1.bf16.msra.mxu0 0
        %1284 = vmatprep.subr.bf16.mxu0 0
        %1285 = vmatpush1.bf16.msra.mxu0 %v581
        %1286 = vmatprep.subr.bf16.mxu0 0
        %1287 = vmatpush2.bf16.msra.mxu0 0
        %1288 = vmatprep.subr.bf16.mxu0 0
        %1289 = vmatpush2.bf16.msra.mxu0 0
        %1290 = vmatprep.subr.bf16.mxu0 0
        %1291 = vmatpush2.bf16.msra.mxu0 0
        %1292 = vmatprep.subr.bf16.mxu0 0
        %1293 = vmatpush2.bf16.msra.mxu0 0
        %1294 = vmatprep.subr.bf16.mxu0 0
        %1295 = vmatpush2.bf16.msra.mxu0 0
        %1296 = vmatprep.subr.bf16.mxu0 0
        %1297 = vmatpush2.bf16.msra.mxu0 0
        %1298 = vmatprep.subr.bf16.mxu0 0
        %1299 = vmatpush2.bf16.msra.mxu0 0
        %1300 = vmatprep.subr.bf16.mxu0 0
        %1301 = vmatpush2.bf16.msra.mxu0 0
        %1302 = vmatprep.mubr.bf16.mxu0 0
        %1303 = vmatmul.mubr.bf16.gmra.mxu0 %v419
        %v1304 = vpop.f32.mrf.mxu0
        %v1305 = vadd.f32 0.0, %v1304
        %v1306 = vpop.f32.mrf.mxu0
        %v1307 = vpop.f32.mrf.mxu0
        %v1308 = vpop.f32.mrf.mxu0
        %1309 = vdwg.mxu0
        %v1310 = vadd.f32 %v1265, %v1305
        %1311 = vmatprep.subr.bf16.mxu0 0
        %1312 = vmatpush1.bf16.msra.mxu0 0
        %1313 = vmatprep.subr.bf16.mxu0 0
        %1314 = vmatpush1.bf16.msra.mxu0 0
        %1315 = vmatprep.subr.bf16.mxu0 0
        %1316 = vmatpush1.bf16.msra.mxu0 0
        %1317 = vmatprep.subr.bf16.mxu0 0
        %1318 = vmatpush1.bf16.msra.mxu0 0
        %1319 = vmatprep.subr.bf16.mxu0 0
        %1320 = vmatpush1.bf16.msra.mxu0 0
        %1321 = vmatprep.subr.bf16.mxu0 0
        %1322 = vmatpush1.bf16.msra.mxu0 0
        %1323 = vmatprep.subr.bf16.mxu0 0
        %1324 = vmatpush1.bf16.msra.mxu0 0
        %1325 = vmatprep.subr.bf16.mxu0 0
        %1326 = vmatpush1.bf16.msra.mxu0 %v635
        %1327 = vmatprep.subr.bf16.mxu0 0
        %1328 = vmatpush2.bf16.msra.mxu0 0
        %1329 = vmatprep.subr.bf16.mxu0 0
        %1330 = vmatpush2.bf16.msra.mxu0 0
        %1331 = vmatprep.subr.bf16.mxu0 0
        %1332 = vmatpush2.bf16.msra.mxu0 0
        %1333 = vmatprep.subr.bf16.mxu0 0
        %1334 = vmatpush2.bf16.msra.mxu0 0
        %1335 = vmatprep.subr.bf16.mxu0 0
        %1336 = vmatpush2.bf16.msra.mxu0 0
        %1337 = vmatprep.subr.bf16.mxu0 0
        %1338 = vmatpush2.bf16.msra.mxu0 0
        %1339 = vmatprep.subr.bf16.mxu0 0
        %1340 = vmatpush2.bf16.msra.mxu0 0
        %1341 = vmatprep.subr.bf16.mxu0 0
        %1342 = vmatpush2.bf16.msra.mxu0 0
        %1343 = vmatprep.mubr.bf16.mxu0 0
        %1344 = vmatmul.mubr.bf16.gmra.mxu0 %v480
        %v1345 = vpop.f32.mrf.mxu0
        %v1346 = vadd.f32 0.0, %v1345
        %v1347 = vpop.f32.mrf.mxu0
        %v1348 = vpop.f32.mrf.mxu0
        %v1349 = vpop.f32.mrf.mxu0
        %1350 = vdwg.mxu0
        %v1351 = vadd.f32 %v1310, %v1346
        %1352 = vmatprep.subr.bf16.mxu0 0
        %1353 = vmatpush1.bf16.msra.mxu0 0
        %1354 = vmatprep.subr.bf16.mxu0 0
        %1355 = vmatpush1.bf16.msra.mxu0 0
        %1356 = vmatprep.subr.bf16.mxu0 0
        %1357 = vmatpush1.bf16.msra.mxu0 0
        %1358 = vmatprep.subr.bf16.mxu0 0
        %1359 = vmatpush1.bf16.msra.mxu0 0
        %1360 = vmatprep.subr.bf16.mxu0 0
        %1361 = vmatpush1.bf16.msra.mxu0 0
        %1362 = vmatprep.subr.bf16.mxu0 0
        %1363 = vmatpush1.bf16.msra.mxu0 0
        %1364 = vmatprep.subr.bf16.mxu0 0
        %1365 = vmatpush1.bf16.msra.mxu0 0
        %1366 = vmatprep.subr.bf16.mxu0 0
        %1367 = vmatpush1.bf16.msra.mxu0 %v684
        %1368 = vmatprep.subr.bf16.mxu0 0
        %1369 = vmatpush2.bf16.msra.mxu0 0
        %1370 = vmatprep.subr.bf16.mxu0 0
        %1371 = vmatpush2.bf16.msra.mxu0 0
        %1372 = vmatprep.subr.bf16.mxu0 0
        %1373 = vmatpush2.bf16.msra.mxu0 0
        %1374 = vmatprep.subr.bf16.mxu0 0
        %1375 = vmatpush2.bf16.msra.mxu0 0
        %1376 = vmatprep.subr.bf16.mxu0 0
        %1377 = vmatpush2.bf16.msra.mxu0 0
        %1378 = vmatprep.subr.bf16.mxu0 0
        %1379 = vmatpush2.bf16.msra.mxu0 0
        %1380 = vmatprep.subr.bf16.mxu0 0
        %1381 = vmatpush2.bf16.msra.mxu0 0
        %1382 = vmatprep.subr.bf16.mxu0 0
        %1383 = vmatpush2.bf16.msra.mxu0 0
        %1384 = vmatprep.mubr.bf16.mxu0 0
        %1385 = vmatmul.mubr.bf16.gmra.mxu0 %v529
        %v1386 = vpop.f32.mrf.mxu0
        %v1387 = vadd.f32 0.0, %v1386
        %v1388 = vpop.f32.mrf.mxu0
        %v1389 = vpop.f32.mrf.mxu0
        %v1390 = vpop.f32.mrf.mxu0
        %1391 = vdwg.mxu0
        %v1392 = vadd.f32 %v1351, %v1387
        %1393 = vmatprep.subr.bf16.mxu0 0
        %1394 = vmatpush1.bf16.msra.mxu0 0
        %1395 = vmatprep.subr.bf16.mxu0 0
        %1396 = vmatpush1.bf16.msra.mxu0 0
        %1397 = vmatprep.subr.bf16.mxu0 0
        %1398 = vmatpush1.bf16.msra.mxu0 0
        %1399 = vmatprep.subr.bf16.mxu0 0
        %1400 = vmatpush1.bf16.msra.mxu0 0
        %1401 = vmatprep.subr.bf16.mxu0 0
        %1402 = vmatpush1.bf16.msra.mxu0 0
        %1403 = vmatprep.subr.bf16.mxu0 0
        %1404 = vmatpush1.bf16.msra.mxu0 0
        %1405 = vmatprep.subr.bf16.mxu0 0
        %1406 = vmatpush1.bf16.msra.mxu0 0
        %1407 = vmatprep.subr.bf16.mxu0 0
        %1408 = vmatpush1.bf16.msra.mxu0 %v733
        %1409 = vmatprep.subr.bf16.mxu0 0
        %1410 = vmatpush2.bf16.msra.mxu0 0
        %1411 = vmatprep.subr.bf16.mxu0 0
        %1412 = vmatpush2.bf16.msra.mxu0 0
        %1413 = vmatprep.subr.bf16.mxu0 0
        %1414 = vmatpush2.bf16.msra.mxu0 0
        %1415 = vmatprep.subr.bf16.mxu0 0
        %1416 = vmatpush2.bf16.msra.mxu0 0
        %1417 = vmatprep.subr.bf16.mxu0 0
        %1418 = vmatpush2.bf16.msra.mxu0 0
        %1419 = vmatprep.subr.bf16.mxu0 0
        %1420 = vmatpush2.bf16.msra.mxu0 0
        %1421 = vmatprep.subr.bf16.mxu0 0
        %1422 = vmatpush2.bf16.msra.mxu0 0
        %1423 = vmatprep.subr.bf16.mxu0 0
        %1424 = vmatpush2.bf16.msra.mxu0 0
        %1425 = vmatprep.mubr.bf16.mxu0 0
        %1426 = vmatmul.mubr.bf16.gmra.mxu0 %v578
        %v1427 = vpop.f32.mrf.mxu0
        %v1428 = vadd.f32 0.0, %v1427
        %v1429 = vpop.f32.mrf.mxu0
        %v1430 = vpop.f32.mrf.mxu0
        %v1431 = vpop.f32.mrf.mxu0
        %1432 = vdwg.mxu0
        %v1433 = vadd.f32 %v1392, %v1428
        %1434 = vrot.lane.b32.xlu0 %v280, 121
        %v1435 = vpop.permute.xlu0 %1434
        %vm1437 = vcmask 990208
        %v1438 = vsel %vm1437, %v1435, 0.0
        %v1439 = vlaneseq
        %v1440 = vshrl.u32 %v1439, 7
        %v1441 = vsub.s32 6, %v1440
        %v1442 = vrot.slane %v294, %v1441
        %vm1443 = vcmp.eq.s32.totalorder %v1442, 1
        %v1444 = vsel %vm1443, %v1438, 0.0
        %v1445 = vpack.c.bf16 %v1444, %v1444
        %v1447 = vsel %vm321, %v1445, 0
        %1449 = vmatprep.subr.bf16.mxu0 0
        %1450 = vmatpush1.bf16.msra.mxu0 0
        %1451 = vmatprep.subr.bf16.mxu0 0
        %1452 = vmatpush1.bf16.msra.mxu0 0
        %1453 = vmatprep.subr.bf16.mxu0 0
        %1454 = vmatpush1.bf16.msra.mxu0 0
        %1455 = vmatprep.subr.bf16.mxu0 0
        %1456 = vmatpush1.bf16.msra.mxu0 0
        %1457 = vmatprep.subr.bf16.mxu0 0
        %1458 = vmatpush1.bf16.msra.mxu0 0
        %1459 = vmatprep.subr.bf16.mxu0 0
        %1460 = vmatpush1.bf16.msra.mxu0 0
        %1461 = vmatprep.subr.bf16.mxu0 0
        %1462 = vmatpush1.bf16.msra.mxu0 0
        %1463 = vmatprep.subr.bf16.mxu0 0
        %1464 = vmatpush1.bf16.msra.mxu0 %v1447
        %1465 = vmatprep.subr.bf16.mxu0 0
        %1466 = vmatpush2.bf16.msra.mxu0 0
        %1467 = vmatprep.subr.bf16.mxu0 0
        %1468 = vmatpush2.bf16.msra.mxu0 0
        %1469 = vmatprep.subr.bf16.mxu0 0
        %1470 = vmatpush2.bf16.msra.mxu0 0
        %1471 = vmatprep.subr.bf16.mxu0 0
        %1472 = vmatpush2.bf16.msra.mxu0 0
        %1473 = vmatprep.subr.bf16.mxu0 0
        %1474 = vmatpush2.bf16.msra.mxu0 0
        %1475 = vmatprep.subr.bf16.mxu0 0
        %1476 = vmatpush2.bf16.msra.mxu0 0
        %1477 = vmatprep.subr.bf16.mxu0 0
        %1478 = vmatpush2.bf16.msra.mxu0 0
        %1479 = vmatprep.subr.bf16.mxu0 0
        %1480 = vmatpush2.bf16.msra.mxu0 0
        %1481 = vmatprep.mubr.bf16.mxu0 0
        %1482 = vmatmul.mubr.bf16.gmra.mxu0 %v632
        %v1483 = vpop.f32.mrf.mxu0
        %v1484 = vadd.f32 0.0, %v1483
        %v1485 = vpop.f32.mrf.mxu0
        %v1486 = vpop.f32.mrf.mxu0
        %v1487 = vpop.f32.mrf.mxu0
        %1488 = vdwg.mxu0
        %v1489 = vadd.f32 %v1433, %v1484
        %1490 = vrot.lane.b32.xlu0 %v279, 120
        %v1491 = vpop.permute.xlu0 %1490
        %vm1493 = vcmask 982016
        %v1494 = vsel %vm1493, %v1491, 0.0
        %v1495 = vlaneseq
        %v1496 = vshrl.u32 %v1495, 7
        %v1497 = vsub.s32 7, %v1496
        %v1498 = vrot.slane %v294, %v1497
        %vm1499 = vcmp.eq.s32.totalorder %v1498, 1
        %v1500 = vsel %vm1499, %v1494, 0.0
        %v1501 = vpack.c.bf16 %v1500, %v1500
        %v1503 = vsel %vm321, %v1501, 0
        %1505 = vmatprep.subr.bf16.mxu0 0
        %1506 = vmatpush1.bf16.msra.mxu0 0
        %1507 = vmatprep.subr.bf16.mxu0 0
        %1508 = vmatpush1.bf16.msra.mxu0 0
        %1509 = vmatprep.subr.bf16.mxu0 0
        %1510 = vmatpush1.bf16.msra.mxu0 0
        %1511 = vmatprep.subr.bf16.mxu0 0
        %1512 = vmatpush1.bf16.msra.mxu0 0
        %1513 = vmatprep.subr.bf16.mxu0 0
        %1514 = vmatpush1.bf16.msra.mxu0 0
        %1515 = vmatprep.subr.bf16.mxu0 0
        %1516 = vmatpush1.bf16.msra.mxu0 0
        %1517 = vmatprep.subr.bf16.mxu0 0
        %1518 = vmatpush1.bf16.msra.mxu0 0
        %1519 = vmatprep.subr.bf16.mxu0 0
        %1520 = vmatpush1.bf16.msra.mxu0 %v1503
        %1521 = vmatprep.subr.bf16.mxu0 0
        %1522 = vmatpush2.bf16.msra.mxu0 0
        %1523 = vmatprep.subr.bf16.mxu0 0
        %1524 = vmatpush2.bf16.msra.mxu0 0
        %1525 = vmatprep.subr.bf16.mxu0 0
        %1526 = vmatpush2.bf16.msra.mxu0 0
        %1527 = vmatprep.subr.bf16.mxu0 0
        %1528 = vmatpush2.bf16.msra.mxu0 0
        %1529 = vmatprep.subr.bf16.mxu0 0
        %1530 = vmatpush2.bf16.msra.mxu0 0
        %1531 = vmatprep.subr.bf16.mxu0 0
        %1532 = vmatpush2.bf16.msra.mxu0 0
        %1533 = vmatprep.subr.bf16.mxu0 0
        %1534 = vmatpush2.bf16.msra.mxu0 0
        %1535 = vmatprep.subr.bf16.mxu0 0
        %1536 = vmatpush2.bf16.msra.mxu0 0
        %1537 = vmatprep.mubr.bf16.mxu0 0
        %1538 = vmatmul.mubr.bf16.gmra.mxu0 %v681
        %v1539 = vpop.f32.mrf.mxu0
        %v1540 = vadd.f32 0.0, %v1539
        %v1541 = vpop.f32.mrf.mxu0
        %v1542 = vpop.f32.mrf.mxu0
        %v1543 = vpop.f32.mrf.mxu0
        %1544 = vdwg.mxu0
        %v1545 = vadd.f32 %v1489, %v1540
        %1546 = vrot.lane.b32.xlu0 %v280, 120
        %v1547 = vpop.permute.xlu0 %1546
        %v1549 = vsel %vm1493, %v1547, 0.0
        %v1550 = vsel %vm1499, %v1549, 0.0
        %v1551 = vpack.c.bf16 %v1550, %v1550
        %v1553 = vsel %vm321, %v1551, 0
        %1555 = vmatprep.subr.bf16.mxu0 0
        %1556 = vmatpush1.bf16.msra.mxu0 0
        %1557 = vmatprep.subr.bf16.mxu0 0
        %1558 = vmatpush1.bf16.msra.mxu0 0
        %1559 = vmatprep.subr.bf16.mxu0 0
        %1560 = vmatpush1.bf16.msra.mxu0 0
        %1561 = vmatprep.subr.bf16.mxu0 0
        %1562 = vmatpush1.bf16.msra.mxu0 0
        %1563 = vmatprep.subr.bf16.mxu0 0
        %1564 = vmatpush1.bf16.msra.mxu0 0
        %1565 = vmatprep.subr.bf16.mxu0 0
        %1566 = vmatpush1.bf16.msra.mxu0 0
        %1567 = vmatprep.subr.bf16.mxu0 0
        %1568 = vmatpush1.bf16.msra.mxu0 0
        %1569 = vmatprep.subr.bf16.mxu0 0
        %1570 = vmatpush1.bf16.msra.mxu0 %v1553
        %1571 = vmatprep.subr.bf16.mxu0 0
        %1572 = vmatpush2.bf16.msra.mxu0 0
        %1573 = vmatprep.subr.bf16.mxu0 0
        %1574 = vmatpush2.bf16.msra.mxu0 0
        %1575 = vmatprep.subr.bf16.mxu0 0
        %1576 = vmatpush2.bf16.msra.mxu0 0
        %1577 = vmatprep.subr.bf16.mxu0 0
        %1578 = vmatpush2.bf16.msra.mxu0 0
        %1579 = vmatprep.subr.bf16.mxu0 0
        %1580 = vmatpush2.bf16.msra.mxu0 0
        %1581 = vmatprep.subr.bf16.mxu0 0
        %1582 = vmatpush2.bf16.msra.mxu0 0
        %1583 = vmatprep.subr.bf16.mxu0 0
        %1584 = vmatpush2.bf16.msra.mxu0 0
        %1585 = vmatprep.subr.bf16.mxu0 0
        %1586 = vmatpush2.bf16.msra.mxu0 0
        %1587 = vmatprep.mubr.bf16.mxu0 0
        %1588 = vmatmul.mubr.bf16.gmra.mxu0 %v730
        %v1589 = vpop.f32.mrf.mxu0
        %v1590 = vadd.f32 0.0, %v1589
        %v1591 = vpop.f32.mrf.mxu0
        %v1592 = vpop.f32.mrf.mxu0
        %v1593 = vpop.f32.mrf.mxu0
        %1594 = vdwg.mxu0
        %v1595 = vadd.f32 %v1545, %v1590
        %v1596 = vadd.f32 %v1595, %v779
        %1597 = vmatprep.subr.bf16.mxu0 0
        %1598 = vmatpush1.bf16.msra.mxu0 0
        %1599 = vmatprep.subr.bf16.mxu0 0
        %1600 = vmatpush1.bf16.msra.mxu0 0
        %1601 = vmatprep.subr.bf16.mxu0 0
        %1602 = vmatpush1.bf16.msra.mxu0 0
        %1603 = vmatprep.subr.bf16.mxu0 0
        %1604 = vmatpush1.bf16.msra.mxu0 0
        %1605 = vmatprep.subr.bf16.mxu0 0
        %1606 = vmatpush1.bf16.msra.mxu0 0
        %1607 = vmatprep.subr.bf16.mxu0 0
        %1608 = vmatpush1.bf16.msra.mxu0 0
        %1609 = vmatprep.subr.bf16.mxu0 0
        %1610 = vmatpush1.bf16.msra.mxu0 0
        %1611 = vmatprep.subr.bf16.mxu0 0
        %1612 = vmatpush1.bf16.msra.mxu0 %v581
        %1613 = vmatprep.subr.bf16.mxu0 0
        %1614 = vmatpush2.bf16.msra.mxu0 0
        %1615 = vmatprep.subr.bf16.mxu0 0
        %1616 = vmatpush2.bf16.msra.mxu0 0
        %1617 = vmatprep.subr.bf16.mxu0 0
        %1618 = vmatpush2.bf16.msra.mxu0 0
        %1619 = vmatprep.subr.bf16.mxu0 0
        %1620 = vmatpush2.bf16.msra.mxu0 0
        %1621 = vmatprep.subr.bf16.mxu0 0
        %1622 = vmatpush2.bf16.msra.mxu0 0
        %1623 = vmatprep.subr.bf16.mxu0 0
        %1624 = vmatpush2.bf16.msra.mxu0 0
        %1625 = vmatprep.subr.bf16.mxu0 0
        %1626 = vmatpush2.bf16.msra.mxu0 0
        %1627 = vmatprep.subr.bf16.mxu0 0
        %1628 = vmatpush2.bf16.msra.mxu0 0
        %1629 = vmatprep.mubr.bf16.mxu0 0
        %1630 = vmatmul.mubr.bf16.gmra.mxu0 %v319
        %v1631 = vpop.f32.mrf.mxu0
        %v1632 = vadd.f32 0.0, %v1631
        %v1633 = vpop.f32.mrf.mxu0
        %v1634 = vpop.f32.mrf.mxu0
        %v1635 = vpop.f32.mrf.mxu0
        %1636 = vdwg.mxu0
        %1637 = vmatprep.subr.bf16.mxu0 0
        %1638 = vmatpush1.bf16.msra.mxu0 0
        %1639 = vmatprep.subr.bf16.mxu0 0
        %1640 = vmatpush1.bf16.msra.mxu0 0
        %1641 = vmatprep.subr.bf16.mxu0 0
        %1642 = vmatpush1.bf16.msra.mxu0 0
        %1643 = vmatprep.subr.bf16.mxu0 0
        %1644 = vmatpush1.bf16.msra.mxu0 0
        %1645 = vmatprep.subr.bf16.mxu0 0
        %1646 = vmatpush1.bf16.msra.mxu0 0
        %1647 = vmatprep.subr.bf16.mxu0 0
        %1648 = vmatpush1.bf16.msra.mxu0 0
        %1649 = vmatprep.subr.bf16.mxu0 0
        %1650 = vmatpush1.bf16.msra.mxu0 0
        %1651 = vmatprep.subr.bf16.mxu0 0
        %1652 = vmatpush1.bf16.msra.mxu0 %v532
        %1653 = vmatprep.subr.bf16.mxu0 0
        %1654 = vmatpush2.bf16.msra.mxu0 0
        %1655 = vmatprep.subr.bf16.mxu0 0
        %1656 = vmatpush2.bf16.msra.mxu0 0
        %1657 = vmatprep.subr.bf16.mxu0 0
        %1658 = vmatpush2.bf16.msra.mxu0 0
        %1659 = vmatprep.subr.bf16.mxu0 0
        %1660 = vmatpush2.bf16.msra.mxu0 0
        %1661 = vmatprep.subr.bf16.mxu0 0
        %1662 = vmatpush2.bf16.msra.mxu0 0
        %1663 = vmatprep.subr.bf16.mxu0 0
        %1664 = vmatpush2.bf16.msra.mxu0 0
        %1665 = vmatprep.subr.bf16.mxu0 0
        %1666 = vmatpush2.bf16.msra.mxu0 0
        %1667 = vmatprep.subr.bf16.mxu0 0
        %1668 = vmatpush2.bf16.msra.mxu0 0
        %1669 = vmatprep.mubr.bf16.mxu0 0
        %1670 = vmatmul.mubr.bf16.gmra.mxu0 %v366
        %v1671 = vpop.f32.mrf.mxu0
        %v1672 = vadd.f32 %v1632, %v1671
        %v1673 = vpop.f32.mrf.mxu0
        %v1674 = vpop.f32.mrf.mxu0
        %v1675 = vpop.f32.mrf.mxu0
        %1676 = vdwg.mxu0
        %1677 = vmatprep.subr.bf16.mxu0 0
        %1678 = vmatpush1.bf16.msra.mxu0 0
        %1679 = vmatprep.subr.bf16.mxu0 0
        %1680 = vmatpush1.bf16.msra.mxu0 0
        %1681 = vmatprep.subr.bf16.mxu0 0
        %1682 = vmatpush1.bf16.msra.mxu0 0
        %1683 = vmatprep.subr.bf16.mxu0 0
        %1684 = vmatpush1.bf16.msra.mxu0 0
        %1685 = vmatprep.subr.bf16.mxu0 0
        %1686 = vmatpush1.bf16.msra.mxu0 0
        %1687 = vmatprep.subr.bf16.mxu0 0
        %1688 = vmatpush1.bf16.msra.mxu0 0
        %1689 = vmatprep.subr.bf16.mxu0 0
        %1690 = vmatpush1.bf16.msra.mxu0 0
        %1691 = vmatprep.subr.bf16.mxu0 0
        %1692 = vmatpush1.bf16.msra.mxu0 %v1014
        %1693 = vmatprep.subr.bf16.mxu0 0
        %1694 = vmatpush2.bf16.msra.mxu0 0
        %1695 = vmatprep.subr.bf16.mxu0 0
        %1696 = vmatpush2.bf16.msra.mxu0 0
        %1697 = vmatprep.subr.bf16.mxu0 0
        %1698 = vmatpush2.bf16.msra.mxu0 0
        %1699 = vmatprep.subr.bf16.mxu0 0
        %1700 = vmatpush2.bf16.msra.mxu0 0
        %1701 = vmatprep.subr.bf16.mxu0 0
        %1702 = vmatpush2.bf16.msra.mxu0 0
        %1703 = vmatprep.subr.bf16.mxu0 0
        %1704 = vmatpush2.bf16.msra.mxu0 0
        %1705 = vmatprep.subr.bf16.mxu0 0
        %1706 = vmatpush2.bf16.msra.mxu0 0
        %1707 = vmatprep.subr.bf16.mxu0 0
        %1708 = vmatpush2.bf16.msra.mxu0 0
        %1709 = vmatprep.mubr.bf16.mxu0 0
        %1710 = vmatmul.mubr.bf16.gmra.mxu0 %v419
        %v1711 = vpop.f32.mrf.mxu0
        %v1712 = vadd.f32 0.0, %v1711
        %v1713 = vpop.f32.mrf.mxu0
        %v1714 = vpop.f32.mrf.mxu0
        %v1715 = vpop.f32.mrf.mxu0
        %1716 = vdwg.mxu0
        %v1717 = vadd.f32 %v1672, %v1712
        %1718 = vmatprep.subr.bf16.mxu0 0
        %1719 = vmatpush1.bf16.msra.mxu0 0
        %1720 = vmatprep.subr.bf16.mxu0 0
        %1721 = vmatpush1.bf16.msra.mxu0 0
        %1722 = vmatprep.subr.bf16.mxu0 0
        %1723 = vmatpush1.bf16.msra.mxu0 0
        %1724 = vmatprep.subr.bf16.mxu0 0
        %1725 = vmatpush1.bf16.msra.mxu0 0
        %1726 = vmatprep.subr.bf16.mxu0 0
        %1727 = vmatpush1.bf16.msra.mxu0 0
        %1728 = vmatprep.subr.bf16.mxu0 0
        %1729 = vmatpush1.bf16.msra.mxu0 0
        %1730 = vmatprep.subr.bf16.mxu0 0
        %1731 = vmatpush1.bf16.msra.mxu0 0
        %1732 = vmatprep.subr.bf16.mxu0 0
        %1733 = vmatpush1.bf16.msra.mxu0 %v684
        %1734 = vmatprep.subr.bf16.mxu0 0
        %1735 = vmatpush2.bf16.msra.mxu0 0
        %1736 = vmatprep.subr.bf16.mxu0 0
        %1737 = vmatpush2.bf16.msra.mxu0 0
        %1738 = vmatprep.subr.bf16.mxu0 0
        %1739 = vmatpush2.bf16.msra.mxu0 0
        %1740 = vmatprep.subr.bf16.mxu0 0
        %1741 = vmatpush2.bf16.msra.mxu0 0
        %1742 = vmatprep.subr.bf16.mxu0 0
        %1743 = vmatpush2.bf16.msra.mxu0 0
        %1744 = vmatprep.subr.bf16.mxu0 0
        %1745 = vmatpush2.bf16.msra.mxu0 0
        %1746 = vmatprep.subr.bf16.mxu0 0
        %1747 = vmatpush2.bf16.msra.mxu0 0
        %1748 = vmatprep.subr.bf16.mxu0 0
        %1749 = vmatpush2.bf16.msra.mxu0 0
        %1750 = vmatprep.mubr.bf16.mxu0 0
        %1751 = vmatmul.mubr.bf16.gmra.mxu0 %v480
        %v1752 = vpop.f32.mrf.mxu0
        %v1753 = vadd.f32 0.0, %v1752
        %v1754 = vpop.f32.mrf.mxu0
        %v1755 = vpop.f32.mrf.mxu0
        %v1756 = vpop.f32.mrf.mxu0
        %1757 = vdwg.mxu0
        %v1758 = vadd.f32 %v1717, %v1753
        %1759 = vmatprep.subr.bf16.mxu0 0
        %1760 = vmatpush1.bf16.msra.mxu0 0
        %1761 = vmatprep.subr.bf16.mxu0 0
        %1762 = vmatpush1.bf16.msra.mxu0 0
        %1763 = vmatprep.subr.bf16.mxu0 0
        %1764 = vmatpush1.bf16.msra.mxu0 0
        %1765 = vmatprep.subr.bf16.mxu0 0
        %1766 = vmatpush1.bf16.msra.mxu0 0
        %1767 = vmatprep.subr.bf16.mxu0 0
        %1768 = vmatpush1.bf16.msra.mxu0 0
        %1769 = vmatprep.subr.bf16.mxu0 0
        %1770 = vmatpush1.bf16.msra.mxu0 0
        %1771 = vmatprep.subr.bf16.mxu0 0
        %1772 = vmatpush1.bf16.msra.mxu0 0
        %1773 = vmatprep.subr.bf16.mxu0 0
        %1774 = vmatpush1.bf16.msra.mxu0 %v733
        %1775 = vmatprep.subr.bf16.mxu0 0
        %1776 = vmatpush2.bf16.msra.mxu0 0
        %1777 = vmatprep.subr.bf16.mxu0 0
        %1778 = vmatpush2.bf16.msra.mxu0 0
        %1779 = vmatprep.subr.bf16.mxu0 0
        %1780 = vmatpush2.bf16.msra.mxu0 0
        %1781 = vmatprep.subr.bf16.mxu0 0
        %1782 = vmatpush2.bf16.msra.mxu0 0
        %1783 = vmatprep.subr.bf16.mxu0 0
        %1784 = vmatpush2.bf16.msra.mxu0 0
        %1785 = vmatprep.subr.bf16.mxu0 0
        %1786 = vmatpush2.bf16.msra.mxu0 0
        %1787 = vmatprep.subr.bf16.mxu0 0
        %1788 = vmatpush2.bf16.msra.mxu0 0
        %1789 = vmatprep.subr.bf16.mxu0 0
        %1790 = vmatpush2.bf16.msra.mxu0 0
        %1791 = vmatprep.mubr.bf16.mxu0 0
        %1792 = vmatmul.mubr.bf16.gmra.mxu0 %v529
        %v1793 = vpop.f32.mrf.mxu0
        %v1794 = vadd.f32 0.0, %v1793
        %v1795 = vpop.f32.mrf.mxu0
        %v1796 = vpop.f32.mrf.mxu0
        %v1797 = vpop.f32.mrf.mxu0
        %1798 = vdwg.mxu0
        %v1799 = vadd.f32 %v1758, %v1794
        %1800 = vmatprep.subr.bf16.mxu0 0
        %1801 = vmatpush1.bf16.msra.mxu0 0
        %1802 = vmatprep.subr.bf16.mxu0 0
        %1803 = vmatpush1.bf16.msra.mxu0 0
        %1804 = vmatprep.subr.bf16.mxu0 0
        %1805 = vmatpush1.bf16.msra.mxu0 0
        %1806 = vmatprep.subr.bf16.mxu0 0
        %1807 = vmatpush1.bf16.msra.mxu0 0
        %1808 = vmatprep.subr.bf16.mxu0 0
        %1809 = vmatpush1.bf16.msra.mxu0 0
        %1810 = vmatprep.subr.bf16.mxu0 0
        %1811 = vmatpush1.bf16.msra.mxu0 0
        %1812 = vmatprep.subr.bf16.mxu0 0
        %1813 = vmatpush1.bf16.msra.mxu0 0
        %1814 = vmatprep.subr.bf16.mxu0 0
        %1815 = vmatpush1.bf16.msra.mxu0 %v1146
        %1816 = vmatprep.subr.bf16.mxu0 0
        %1817 = vmatpush2.bf16.msra.mxu0 0
        %1818 = vmatprep.subr.bf16.mxu0 0
        %1819 = vmatpush2.bf16.msra.mxu0 0
        %1820 = vmatprep.subr.bf16.mxu0 0
        %1821 = vmatpush2.bf16.msra.mxu0 0
        %1822 = vmatprep.subr.bf16.mxu0 0
        %1823 = vmatpush2.bf16.msra.mxu0 0
        %1824 = vmatprep.subr.bf16.mxu0 0
        %1825 = vmatpush2.bf16.msra.mxu0 0
        %1826 = vmatprep.subr.bf16.mxu0 0
        %1827 = vmatpush2.bf16.msra.mxu0 0
        %1828 = vmatprep.subr.bf16.mxu0 0
        %1829 = vmatpush2.bf16.msra.mxu0 0
        %1830 = vmatprep.subr.bf16.mxu0 0
        %1831 = vmatpush2.bf16.msra.mxu0 0
        %1832 = vmatprep.mubr.bf16.mxu0 0
        %1833 = vmatmul.mubr.bf16.gmra.mxu0 %v578
        %v1834 = vpop.f32.mrf.mxu0
        %v1835 = vadd.f32 0.0, %v1834
        %v1836 = vpop.f32.mrf.mxu0
        %v1837 = vpop.f32.mrf.mxu0
        %v1838 = vpop.f32.mrf.mxu0
        %1839 = vdwg.mxu0
        %v1840 = vadd.f32 %v1799, %v1835
        %1841 = vmatprep.subr.bf16.mxu0 0
        %1842 = vmatpush1.bf16.msra.mxu0 0
        %1843 = vmatprep.subr.bf16.mxu0 0
        %1844 = vmatpush1.bf16.msra.mxu0 0
        %1845 = vmatprep.subr.bf16.mxu0 0
        %1846 = vmatpush1.bf16.msra.mxu0 0
        %1847 = vmatprep.subr.bf16.mxu0 0
        %1848 = vmatpush1.bf16.msra.mxu0 0
        %1849 = vmatprep.subr.bf16.mxu0 0
        %1850 = vmatpush1.bf16.msra.mxu0 0
        %1851 = vmatprep.subr.bf16.mxu0 0
        %1852 = vmatpush1.bf16.msra.mxu0 0
        %1853 = vmatprep.subr.bf16.mxu0 0
        %1854 = vmatpush1.bf16.msra.mxu0 0
        %1855 = vmatprep.subr.bf16.mxu0 0
        %1856 = vmatpush1.bf16.msra.mxu0 %v1503
        %1857 = vmatprep.subr.bf16.mxu0 0
        %1858 = vmatpush2.bf16.msra.mxu0 0
        %1859 = vmatprep.subr.bf16.mxu0 0
        %1860 = vmatpush2.bf16.msra.mxu0 0
        %1861 = vmatprep.subr.bf16.mxu0 0
        %1862 = vmatpush2.bf16.msra.mxu0 0
        %1863 = vmatprep.subr.bf16.mxu0 0
        %1864 = vmatpush2.bf16.msra.mxu0 0
        %1865 = vmatprep.subr.bf16.mxu0 0
        %1866 = vmatpush2.bf16.msra.mxu0 0
        %1867 = vmatprep.subr.bf16.mxu0 0
        %1868 = vmatpush2.bf16.msra.mxu0 0
        %1869 = vmatprep.subr.bf16.mxu0 0
        %1870 = vmatpush2.bf16.msra.mxu0 0
        %1871 = vmatprep.subr.bf16.mxu0 0
        %1872 = vmatpush2.bf16.msra.mxu0 0
        %1873 = vmatprep.mubr.bf16.mxu0 0
        %1874 = vmatmul.mubr.bf16.gmra.mxu0 %v632
        %v1875 = vpop.f32.mrf.mxu0
        %v1876 = vadd.f32 0.0, %v1875
        %v1877 = vpop.f32.mrf.mxu0
        %v1878 = vpop.f32.mrf.mxu0
        %v1879 = vpop.f32.mrf.mxu0
        %1880 = vdwg.mxu0
        %v1881 = vadd.f32 %v1840, %v1876
        %1882 = vmatprep.subr.bf16.mxu0 0
        %1883 = vmatpush1.bf16.msra.mxu0 0
        %1884 = vmatprep.subr.bf16.mxu0 0
        %1885 = vmatpush1.bf16.msra.mxu0 0
        %1886 = vmatprep.subr.bf16.mxu0 0
        %1887 = vmatpush1.bf16.msra.mxu0 0
        %1888 = vmatprep.subr.bf16.mxu0 0
        %1889 = vmatpush1.bf16.msra.mxu0 0
        %1890 = vmatprep.subr.bf16.mxu0 0
        %1891 = vmatpush1.bf16.msra.mxu0 0
        %1892 = vmatprep.subr.bf16.mxu0 0
        %1893 = vmatpush1.bf16.msra.mxu0 0
        %1894 = vmatprep.subr.bf16.mxu0 0
        %1895 = vmatpush1.bf16.msra.mxu0 0
        %1896 = vmatprep.subr.bf16.mxu0 0
        %1897 = vmatpush1.bf16.msra.mxu0 %v1553
        %1898 = vmatprep.subr.bf16.mxu0 0
        %1899 = vmatpush2.bf16.msra.mxu0 0
        %1900 = vmatprep.subr.bf16.mxu0 0
        %1901 = vmatpush2.bf16.msra.mxu0 0
        %1902 = vmatprep.subr.bf16.mxu0 0
        %1903 = vmatpush2.bf16.msra.mxu0 0
        %1904 = vmatprep.subr.bf16.mxu0 0
        %1905 = vmatpush2.bf16.msra.mxu0 0
        %1906 = vmatprep.subr.bf16.mxu0 0
        %1907 = vmatpush2.bf16.msra.mxu0 0
        %1908 = vmatprep.subr.bf16.mxu0 0
        %1909 = vmatpush2.bf16.msra.mxu0 0
        %1910 = vmatprep.subr.bf16.mxu0 0
        %1911 = vmatpush2.bf16.msra.mxu0 0
        %1912 = vmatprep.subr.bf16.mxu0 0
        %1913 = vmatpush2.bf16.msra.mxu0 0
        %1914 = vmatprep.mubr.bf16.mxu0 0
        %1915 = vmatmul.mubr.bf16.gmra.mxu0 %v681
        %v1916 = vpop.f32.mrf.mxu0
        %v1917 = vadd.f32 0.0, %v1916
        %v1918 = vpop.f32.mrf.mxu0
        %v1919 = vpop.f32.mrf.mxu0
        %v1920 = vpop.f32.mrf.mxu0
        %1921 = vdwg.mxu0
        %v1922 = vadd.f32 %v1881, %v1917
        %1923 = vrot.lane.b32.xlu0 %v279, 119
        %v1924 = vpop.permute.xlu0 %1923
        %vm1926 = vcmask 973824
        %v1927 = vsel %vm1926, %v1924, 0.0
        %v1928 = vsel %vm287, 1, 0
        %v1929 = vlaneseq
        %v1930 = vshrl.u32 %v1929, 7
        %v1931 = vsub.s32 0, %v1930
        %v1932 = vrot.slane %v1928, %v1931
        %vm1933 = vcmp.eq.s32.totalorder %v1932, 1
        %v1934 = vsel %vm1933, %v1927, 0.0
        %v1935 = vpack.c.bf16 %v1934, %v1934
        %v1937 = vsel %vm321, %v1935, 0
        %1939 = vmatprep.subr.bf16.mxu0 0
        %1940 = vmatpush1.bf16.msra.mxu0 0
        %1941 = vmatprep.subr.bf16.mxu0 0
        %1942 = vmatpush1.bf16.msra.mxu0 0
        %1943 = vmatprep.subr.bf16.mxu0 0
        %1944 = vmatpush1.bf16.msra.mxu0 0
        %1945 = vmatprep.subr.bf16.mxu0 0
        %1946 = vmatpush1.bf16.msra.mxu0 0
        %1947 = vmatprep.subr.bf16.mxu0 0
        %1948 = vmatpush1.bf16.msra.mxu0 0
        %1949 = vmatprep.subr.bf16.mxu0 0
        %1950 = vmatpush1.bf16.msra.mxu0 0
        %1951 = vmatprep.subr.bf16.mxu0 0
        %1952 = vmatpush1.bf16.msra.mxu0 0
        %1953 = vmatprep.subr.bf16.mxu0 0
        %1954 = vmatpush1.bf16.msra.mxu0 %v1937
        %1955 = vmatprep.subr.bf16.mxu0 0
        %1956 = vmatpush2.bf16.msra.mxu0 0
        %1957 = vmatprep.subr.bf16.mxu0 0
        %1958 = vmatpush2.bf16.msra.mxu0 0
        %1959 = vmatprep.subr.bf16.mxu0 0
        %1960 = vmatpush2.bf16.msra.mxu0 0
        %1961 = vmatprep.subr.bf16.mxu0 0
        %1962 = vmatpush2.bf16.msra.mxu0 0
        %1963 = vmatprep.subr.bf16.mxu0 0
        %1964 = vmatpush2.bf16.msra.mxu0 0
        %1965 = vmatprep.subr.bf16.mxu0 0
        %1966 = vmatpush2.bf16.msra.mxu0 0
        %1967 = vmatprep.subr.bf16.mxu0 0
        %1968 = vmatpush2.bf16.msra.mxu0 0
        %1969 = vmatprep.subr.bf16.mxu0 0
        %1970 = vmatpush2.bf16.msra.mxu0 0
        %1971 = vmatprep.mubr.bf16.mxu0 0
        %1972 = vmatmul.mubr.bf16.gmra.mxu0 %v730
        %v1973 = vpop.f32.mrf.mxu0
        %v1974 = vadd.f32 0.0, %v1973
        %v1975 = vpop.f32.mrf.mxu0
        %v1976 = vpop.f32.mrf.mxu0
        %v1977 = vpop.f32.mrf.mxu0
        %1978 = vdwg.mxu0
        %v1979 = vadd.f32 %v1922, %v1974
        %v1980 = vadd.f32 %v1979, %v779
        %v1981 = vmax.f32 %v781, %v1189
        %v1982 = vmax.f32 %v1596, %v1980
        %v1983 = vmax.f32 %v1981, %v1982
        %v1984 = vmax.f32 %v1189, %v1980
        %1986 = vrot.lane.b32.xlu0 %v1984, 1
        %v1987 = vpop.permute.xlu0 %1986
        %v1989 = vsel %vm469, 0.0, %v1987
        %v1990 = vsel %vm475, %v1989, -3.4028235e+38
        %1992 = vrot.lane.b32.xlu0 %v1982, 8
        %v1993 = vpop.permute.xlu0 %1992
        %v1995 = vsel %vm307, 0.0, %v1993
        %v1996 = vsel %vm313, %v1995, -3.4028235e+38
        %1998 = vrot.lane.b32.xlu0 %v1980, 9
        %v1999 = vpop.permute.xlu0 %1998
        %v2001 = vsel %vm292, 0.0, %v1999
        %v2002 = vsel %vm299, %v2001, -3.4028235e+38
        %v2003 = vmax.f32 %v1983, %v1990
        %v2004 = vmax.f32 %v1996, %v2002
        %v2005 = vmax.f32 %v2003, %v2004
        %v2006 = vmax.f32 %v2005, 0.0
        %2008 = vrot.lane.b32.xlu0 %v2006, 9
        %v2009 = vpop.permute.xlu0 %2008
        %v2011 = vsel %vm292, 0.0, %v2009
        %v2012 = vsel %vm299, %v2011, 0.0
        %v2013 = vpack.c.bf16 %v2012, %v2012
        %v2014 = vld [vmem:[%s2] sm:$0xf]
        %2015 = vrot.lane.b32.xlu0 %v2006, 8
        %v2016 = vpop.permute.xlu0 %2015
        %v2018 = vsel %vm307, 0.0, %v2016
        %v2019 = vsel %vm313, %v2018, 0.0
        %v2020 = vpack.c.bf16 %v2019, %v2019
        %v2021 = vld [vmem:[%s2 + $0x4] sm:$0xf]
        %v2023 = vsel %vm307, %v2021, 0
        %vm2025 = vcmask 1043456
        %v2027 = vsel %vm2025, %v2020, 0
        %2029 = vmatprep.subr.bf16.mxu0 0
        %2030 = vmatpush1.bf16.msra.mxu0 0
        %2031 = vmatprep.subr.bf16.mxu0 0
        %2032 = vmatpush1.bf16.msra.mxu0 0
        %2033 = vmatprep.subr.bf16.mxu0 0
        %2034 = vmatpush1.bf16.msra.mxu0 0
        %2035 = vmatprep.subr.bf16.mxu0 0
        %2036 = vmatpush1.bf16.msra.mxu0 0
        %2037 = vmatprep.subr.bf16.mxu0 0
        %2038 = vmatpush1.bf16.msra.mxu0 0
        %2039 = vmatprep.subr.bf16.mxu0 0
        %2040 = vmatpush1.bf16.msra.mxu0 0
        %2041 = vmatprep.subr.bf16.mxu0 0
        %2042 = vmatpush1.bf16.msra.mxu0 0
        %2043 = vmatprep.subr.bf16.mxu0 0
        %2044 = vmatpush1.bf16.msra.mxu0 %v2027
        %2045 = vmatprep.subr.bf16.mxu0 0
        %2046 = vmatpush2.bf16.msra.mxu0 0
        %2047 = vmatprep.subr.bf16.mxu0 0
        %2048 = vmatpush2.bf16.msra.mxu0 0
        %2049 = vmatprep.subr.bf16.mxu0 0
        %2050 = vmatpush2.bf16.msra.mxu0 0
        %2051 = vmatprep.subr.bf16.mxu0 0
        %2052 = vmatpush2.bf16.msra.mxu0 0
        %2053 = vmatprep.subr.bf16.mxu0 0
        %2054 = vmatpush2.bf16.msra.mxu0 0
        %2055 = vmatprep.subr.bf16.mxu0 0
        %2056 = vmatpush2.bf16.msra.mxu0 0
        %2057 = vmatprep.subr.bf16.mxu0 0
        %2058 = vmatpush2.bf16.msra.mxu0 0
        %2059 = vmatprep.subr.bf16.mxu0 0
        %2060 = vmatpush2.bf16.msra.mxu0 0
        %2061 = vmatprep.mubr.bf16.mxu0 0
        %2062 = vmatmul.mubr.bf16.gmra.mxu0 %v2023
        %v2063 = vpop.f32.mrf.mxu0
        %v2064 = vadd.f32 0.0, %v2063
        %v2065 = vpop.f32.mrf.mxu0
        %v2066 = vpop.f32.mrf.mxu0
        %v2067 = vpop.f32.mrf.mxu0
        %2068 = vdwg.mxu0
        %v2070 = vsel %vm307, %v2014, 0
        %v2073 = vsel %vm2025, %v2013, 0
        %2075 = vmatprep.subr.bf16.mxu0 0
        %2076 = vmatpush1.bf16.msra.mxu0 0
        %2077 = vmatprep.subr.bf16.mxu0 0
        %2078 = vmatpush1.bf16.msra.mxu0 0
        %2079 = vmatprep.subr.bf16.mxu0 0
        %2080 = vmatpush1.bf16.msra.mxu0 0
        %2081 = vmatprep.subr.bf16.mxu0 0
        %2082 = vmatpush1.bf16.msra.mxu0 0
        %2083 = vmatprep.subr.bf16.mxu0 0
        %2084 = vmatpush1.bf16.msra.mxu0 0
        %2085 = vmatprep.subr.bf16.mxu0 0
        %2086 = vmatpush1.bf16.msra.mxu0 0
        %2087 = vmatprep.subr.bf16.mxu0 0
        %2088 = vmatpush1.bf16.msra.mxu0 0
        %2089 = vmatprep.subr.bf16.mxu0 0
        %2090 = vmatpush1.bf16.msra.mxu0 %v2073
        %2091 = vmatprep.subr.bf16.mxu0 0
        %2092 = vmatpush2.bf16.msra.mxu0 0
        %2093 = vmatprep.subr.bf16.mxu0 0
        %2094 = vmatpush2.bf16.msra.mxu0 0
        %2095 = vmatprep.subr.bf16.mxu0 0
        %2096 = vmatpush2.bf16.msra.mxu0 0
        %2097 = vmatprep.subr.bf16.mxu0 0
        %2098 = vmatpush2.bf16.msra.mxu0 0
        %2099 = vmatprep.subr.bf16.mxu0 0
        %2100 = vmatpush2.bf16.msra.mxu0 0
        %2101 = vmatprep.subr.bf16.mxu0 0
        %2102 = vmatpush2.bf16.msra.mxu0 0
        %2103 = vmatprep.subr.bf16.mxu0 0
        %2104 = vmatpush2.bf16.msra.mxu0 0
        %2105 = vmatprep.subr.bf16.mxu0 0
        %2106 = vmatpush2.bf16.msra.mxu0 0
        %2107 = vmatprep.mubr.bf16.mxu0 0
        %2108 = vmatmul.mubr.bf16.gmra.mxu0 %v2070
        %v2109 = vpop.f32.mrf.mxu0
        %v2110 = vadd.f32 %v2064, %v2109
        %v2111 = vpop.f32.mrf.mxu0
        %v2112 = vpop.f32.mrf.mxu0
        %v2113 = vpop.f32.mrf.mxu0
        %2114 = vdwg.mxu0
        %2115 = vrot.lane.b32.xlu0 %v2006, 7
        %v2116 = vpop.permute.xlu0 %2115
        %v2118 = vsel %vm865, 0.0, %v2116
        %v2119 = vsel %vm871, %v2118, 0.0
        %v2120 = vpack.c.bf16 %v2119, %v2119
        %v2121 = vld [vmem:[%s2 + $0x8] sm:$0xf]
        %v2123 = vsel %vm307, %v2121, 0
        %v2126 = vsel %vm2025, %v2120, 0
        %2128 = vmatprep.subr.bf16.mxu0 0
        %2129 = vmatpush1.bf16.msra.mxu0 0
        %2130 = vmatprep.subr.bf16.mxu0 0
        %2131 = vmatpush1.bf16.msra.mxu0 0
        %2132 = vmatprep.subr.bf16.mxu0 0
        %2133 = vmatpush1.bf16.msra.mxu0 0
        %2134 = vmatprep.subr.bf16.mxu0 0
        %2135 = vmatpush1.bf16.msra.mxu0 0
        %2136 = vmatprep.subr.bf16.mxu0 0
        %2137 = vmatpush1.bf16.msra.mxu0 0
        %2138 = vmatprep.subr.bf16.mxu0 0
        %2139 = vmatpush1.bf16.msra.mxu0 0
        %2140 = vmatprep.subr.bf16.mxu0 0
        %2141 = vmatpush1.bf16.msra.mxu0 0
        %2142 = vmatprep.subr.bf16.mxu0 0
        %2143 = vmatpush1.bf16.msra.mxu0 %v2126
        %2144 = vmatprep.subr.bf16.mxu0 0
        %2145 = vmatpush2.bf16.msra.mxu0 0
        %2146 = vmatprep.subr.bf16.mxu0 0
        %2147 = vmatpush2.bf16.msra.mxu0 0
        %2148 = vmatprep.subr.bf16.mxu0 0
        %2149 = vmatpush2.bf16.msra.mxu0 0
        %2150 = vmatprep.subr.bf16.mxu0 0
        %2151 = vmatpush2.bf16.msra.mxu0 0
        %2152 = vmatprep.subr.bf16.mxu0 0
        %2153 = vmatpush2.bf16.msra.mxu0 0
        %2154 = vmatprep.subr.bf16.mxu0 0
        %2155 = vmatpush2.bf16.msra.mxu0 0
        %2156 = vmatprep.subr.bf16.mxu0 0
        %2157 = vmatpush2.bf16.msra.mxu0 0
        %2158 = vmatprep.subr.bf16.mxu0 0
        %2159 = vmatpush2.bf16.msra.mxu0 0
        %2160 = vmatprep.mubr.bf16.mxu0 0
        %2161 = vmatmul.mubr.bf16.gmra.mxu0 %v2123
        %v2162 = vpop.f32.mrf.mxu0
        %v2163 = vadd.f32 0.0, %v2162
        %v2164 = vpop.f32.mrf.mxu0
        %v2165 = vpop.f32.mrf.mxu0
        %v2166 = vpop.f32.mrf.mxu0
        %2167 = vdwg.mxu0
        %v2168 = vadd.f32 %v2110, %v2163
        %2169 = vrot.lane.b32.xlu0 %v2006, 1
        %v2170 = vpop.permute.xlu0 %2169
        %v2172 = vsel %vm469, 0.0, %v2170
        %v2173 = vsel %vm475, %v2172, 0.0
        %v2174 = vpack.c.bf16 %v2173, %v2173
        %v2175 = vld [vmem:[%s2 + $0xc] sm:$0xf]
        %v2177 = vsel %vm307, %v2175, 0
        %v2180 = vsel %vm2025, %v2174, 0
        %2182 = vmatprep.subr.bf16.mxu0 0
        %2183 = vmatpush1.bf16.msra.mxu0 0
        %2184 = vmatprep.subr.bf16.mxu0 0
        %2185 = vmatpush1.bf16.msra.mxu0 0
        %2186 = vmatprep.subr.bf16.mxu0 0
        %2187 = vmatpush1.bf16.msra.mxu0 0
        %2188 = vmatprep.subr.bf16.mxu0 0
        %2189 = vmatpush1.bf16.msra.mxu0 0
        %2190 = vmatprep.subr.bf16.mxu0 0
        %2191 = vmatpush1.bf16.msra.mxu0 0
        %2192 = vmatprep.subr.bf16.mxu0 0
        %2193 = vmatpush1.bf16.msra.mxu0 0
        %2194 = vmatprep.subr.bf16.mxu0 0
        %2195 = vmatpush1.bf16.msra.mxu0 0
        %2196 = vmatprep.subr.bf16.mxu0 0
        %2197 = vmatpush1.bf16.msra.mxu0 %v2180
        %2198 = vmatprep.subr.bf16.mxu0 0
        %2199 = vmatpush2.bf16.msra.mxu0 0
        %2200 = vmatprep.subr.bf16.mxu0 0
        %2201 = vmatpush2.bf16.msra.mxu0 0
        %2202 = vmatprep.subr.bf16.mxu0 0
        %2203 = vmatpush2.bf16.msra.mxu0 0
        %2204 = vmatprep.subr.bf16.mxu0 0
        %2205 = vmatpush2.bf16.msra.mxu0 0
        %2206 = vmatprep.subr.bf16.mxu0 0
        %2207 = vmatpush2.bf16.msra.mxu0 0
        %2208 = vmatprep.subr.bf16.mxu0 0
        %2209 = vmatpush2.bf16.msra.mxu0 0
        %2210 = vmatprep.subr.bf16.mxu0 0
        %2211 = vmatpush2.bf16.msra.mxu0 0
        %2212 = vmatprep.subr.bf16.mxu0 0
        %2213 = vmatpush2.bf16.msra.mxu0 0
        %2214 = vmatprep.mubr.bf16.mxu0 0
        %2215 = vmatmul.mubr.bf16.gmra.mxu0 %v2177
        %v2216 = vpop.f32.mrf.mxu0
        %v2217 = vadd.f32 0.0, %v2216
        %v2218 = vpop.f32.mrf.mxu0
        %v2219 = vpop.f32.mrf.mxu0
        %v2220 = vpop.f32.mrf.mxu0
        %2221 = vdwg.mxu0
        %v2222 = vadd.f32 %v2168, %v2217
        %v2223 = vpack.c.bf16 %v2006, %v2006
        %v2224 = vld [vmem:[%s2 + $0x10] sm:$0xf]
        %v2226 = vsel %vm307, %v2224, 0
        %v2229 = vsel %vm2025, %v2223, 0
        %2231 = vmatprep.subr.bf16.mxu0 0
        %2232 = vmatpush1.bf16.msra.mxu0 0
        %2233 = vmatprep.subr.bf16.mxu0 0
        %2234 = vmatpush1.bf16.msra.mxu0 0
        %2235 = vmatprep.subr.bf16.mxu0 0
        %2236 = vmatpush1.bf16.msra.mxu0 0
        %2237 = vmatprep.subr.bf16.mxu0 0
        %2238 = vmatpush1.bf16.msra.mxu0 0
        %2239 = vmatprep.subr.bf16.mxu0 0
        %2240 = vmatpush1.bf16.msra.mxu0 0
        %2241 = vmatprep.subr.bf16.mxu0 0
        %2242 = vmatpush1.bf16.msra.mxu0 0
        %2243 = vmatprep.subr.bf16.mxu0 0
        %2244 = vmatpush1.bf16.msra.mxu0 0
        %2245 = vmatprep.subr.bf16.mxu0 0
        %2246 = vmatpush1.bf16.msra.mxu0 %v2229
        %2247 = vmatprep.subr.bf16.mxu0 0
        %2248 = vmatpush2.bf16.msra.mxu0 0
        %2249 = vmatprep.subr.bf16.mxu0 0
        %2250 = vmatpush2.bf16.msra.mxu0 0
        %2251 = vmatprep.subr.bf16.mxu0 0
        %2252 = vmatpush2.bf16.msra.mxu0 0
        %2253 = vmatprep.subr.bf16.mxu0 0
        %2254 = vmatpush2.bf16.msra.mxu0 0
        %2255 = vmatprep.subr.bf16.mxu0 0
        %2256 = vmatpush2.bf16.msra.mxu0 0
        %2257 = vmatprep.subr.bf16.mxu0 0
        %2258 = vmatpush2.bf16.msra.mxu0 0
        %2259 = vmatprep.subr.bf16.mxu0 0
        %2260 = vmatpush2.bf16.msra.mxu0 0
        %2261 = vmatprep.subr.bf16.mxu0 0
        %2262 = vmatpush2.bf16.msra.mxu0 0
        %2263 = vmatprep.mubr.bf16.mxu0 0
        %2264 = vmatmul.mubr.bf16.gmra.mxu0 %v2226
        %v2265 = vpop.f32.mrf.mxu0
        %v2266 = vadd.f32 0.0, %v2265
        %v2267 = vpop.f32.mrf.mxu0
        %v2268 = vpop.f32.mrf.mxu0
        %v2269 = vpop.f32.mrf.mxu0
        %2270 = vdwg.mxu0
        %v2271 = vadd.f32 %v2222, %v2266
        %2272 = vrot.lane.b32.xlu0 %v2006, 127
        %v2273 = vpop.permute.xlu0 %2272
        %v2275 = vsel %vm1004, %v2273, 0.0
        %v2276 = vsel %vm1010, %v2275, 0.0
        %v2277 = vpack.c.bf16 %v2276, %v2276
        %v2278 = vld [vmem:[%s2 + $0x14] sm:$0xf]
        %v2280 = vsel %vm307, %v2278, 0
        %v2283 = vsel %vm2025, %v2277, 0
        %2285 = vmatprep.subr.bf16.mxu0 0
        %2286 = vmatpush1.bf16.msra.mxu0 0
        %2287 = vmatprep.subr.bf16.mxu0 0
        %2288 = vmatpush1.bf16.msra.mxu0 0
        %2289 = vmatprep.subr.bf16.mxu0 0
        %2290 = vmatpush1.bf16.msra.mxu0 0
        %2291 = vmatprep.subr.bf16.mxu0 0
        %2292 = vmatpush1.bf16.msra.mxu0 0
        %2293 = vmatprep.subr.bf16.mxu0 0
        %2294 = vmatpush1.bf16.msra.mxu0 0
        %2295 = vmatprep.subr.bf16.mxu0 0
        %2296 = vmatpush1.bf16.msra.mxu0 0
        %2297 = vmatprep.subr.bf16.mxu0 0
        %2298 = vmatpush1.bf16.msra.mxu0 0
        %2299 = vmatprep.subr.bf16.mxu0 0
        %2300 = vmatpush1.bf16.msra.mxu0 %v2283
        %2301 = vmatprep.subr.bf16.mxu0 0
        %2302 = vmatpush2.bf16.msra.mxu0 0
        %2303 = vmatprep.subr.bf16.mxu0 0
        %2304 = vmatpush2.bf16.msra.mxu0 0
        %2305 = vmatprep.subr.bf16.mxu0 0
        %2306 = vmatpush2.bf16.msra.mxu0 0
        %2307 = vmatprep.subr.bf16.mxu0 0
        %2308 = vmatpush2.bf16.msra.mxu0 0
        %2309 = vmatprep.subr.bf16.mxu0 0
        %2310 = vmatpush2.bf16.msra.mxu0 0
        %2311 = vmatprep.subr.bf16.mxu0 0
        %2312 = vmatpush2.bf16.msra.mxu0 0
        %2313 = vmatprep.subr.bf16.mxu0 0
        %2314 = vmatpush2.bf16.msra.mxu0 0
        %2315 = vmatprep.subr.bf16.mxu0 0
        %2316 = vmatpush2.bf16.msra.mxu0 0
        %2317 = vmatprep.mubr.bf16.mxu0 0
        %2318 = vmatmul.mubr.bf16.gmra.mxu0 %v2280
        %v2319 = vpop.f32.mrf.mxu0
        %v2320 = vadd.f32 0.0, %v2319
        %v2321 = vpop.f32.mrf.mxu0
        %v2322 = vpop.f32.mrf.mxu0
        %v2323 = vpop.f32.mrf.mxu0
        %2324 = vdwg.mxu0
        %v2325 = vadd.f32 %v2271, %v2320
        %2326 = vrot.lane.b32.xlu0 %v2006, 121
        %v2327 = vpop.permute.xlu0 %2326
        %v2329 = vsel %vm1437, %v2327, 0.0
        %v2330 = vsel %vm1443, %v2329, 0.0
        %v2331 = vpack.c.bf16 %v2330, %v2330
        %v2332 = vld [vmem:[%s2 + $0x18] sm:$0xf]
        %v2334 = vsel %vm307, %v2332, 0
        %v2337 = vsel %vm2025, %v2331, 0
        %2339 = vmatprep.subr.bf16.mxu0 0
        %2340 = vmatpush1.bf16.msra.mxu0 0
        %2341 = vmatprep.subr.bf16.mxu0 0
        %2342 = vmatpush1.bf16.msra.mxu0 0
        %2343 = vmatprep.subr.bf16.mxu0 0
        %2344 = vmatpush1.bf16.msra.mxu0 0
        %2345 = vmatprep.subr.bf16.mxu0 0
        %2346 = vmatpush1.bf16.msra.mxu0 0
        %2347 = vmatprep.subr.bf16.mxu0 0
        %2348 = vmatpush1.bf16.msra.mxu0 0
        %2349 = vmatprep.subr.bf16.mxu0 0
        %2350 = vmatpush1.bf16.msra.mxu0 0
        %2351 = vmatprep.subr.bf16.mxu0 0
        %2352 = vmatpush1.bf16.msra.mxu0 0
        %2353 = vmatprep.subr.bf16.mxu0 0
        %2354 = vmatpush1.bf16.msra.mxu0 %v2337
        %2355 = vmatprep.subr.bf16.mxu0 0
        %2356 = vmatpush2.bf16.msra.mxu0 0
        %2357 = vmatprep.subr.bf16.mxu0 0
        %2358 = vmatpush2.bf16.msra.mxu0 0
        %2359 = vmatprep.subr.bf16.mxu0 0
        %2360 = vmatpush2.bf16.msra.mxu0 0
        %2361 = vmatprep.subr.bf16.mxu0 0
        %2362 = vmatpush2.bf16.msra.mxu0 0
        %2363 = vmatprep.subr.bf16.mxu0 0
        %2364 = vmatpush2.bf16.msra.mxu0 0
        %2365 = vmatprep.subr.bf16.mxu0 0
        %2366 = vmatpush2.bf16.msra.mxu0 0
        %2367 = vmatprep.subr.bf16.mxu0 0
        %2368 = vmatpush2.bf16.msra.mxu0 0
        %2369 = vmatprep.subr.bf16.mxu0 0
        %2370 = vmatpush2.bf16.msra.mxu0 0
        %2371 = vmatprep.mubr.bf16.mxu0 0
        %2372 = vmatmul.mubr.bf16.gmra.mxu0 %v2334
        %v2373 = vpop.f32.mrf.mxu0
        %v2374 = vadd.f32 0.0, %v2373
        %v2375 = vpop.f32.mrf.mxu0
        %v2376 = vpop.f32.mrf.mxu0
        %v2377 = vpop.f32.mrf.mxu0
        %2378 = vdwg.mxu0
        %v2379 = vadd.f32 %v2325, %v2374
        %2380 = vrot.lane.b32.xlu0 %v2006, 120
        %v2381 = vpop.permute.xlu0 %2380
        %v2383 = vsel %vm1493, %v2381, 0.0
        %v2384 = vsel %vm1499, %v2383, 0.0
        %v2385 = vpack.c.bf16 %v2384, %v2384
        %v2386 = vld [vmem:[%s2 + $0x1c] sm:$0xf]
        %v2388 = vsel %vm307, %v2386, 0
        %v2391 = vsel %vm2025, %v2385, 0
        %2393 = vmatprep.subr.bf16.mxu0 0
        %2394 = vmatpush1.bf16.msra.mxu0 0
        %2395 = vmatprep.subr.bf16.mxu0 0
        %2396 = vmatpush1.bf16.msra.mxu0 0
        %2397 = vmatprep.subr.bf16.mxu0 0
        %2398 = vmatpush1.bf16.msra.mxu0 0
        %2399 = vmatprep.subr.bf16.mxu0 0
        %2400 = vmatpush1.bf16.msra.mxu0 0
        %2401 = vmatprep.subr.bf16.mxu0 0
        %2402 = vmatpush1.bf16.msra.mxu0 0
        %2403 = vmatprep.subr.bf16.mxu0 0
        %2404 = vmatpush1.bf16.msra.mxu0 0
        %2405 = vmatprep.subr.bf16.mxu0 0
        %2406 = vmatpush1.bf16.msra.mxu0 0
        %2407 = vmatprep.subr.bf16.mxu0 0
        %2408 = vmatpush1.bf16.msra.mxu0 %v2391
        %2409 = vmatprep.subr.bf16.mxu0 0
        %2410 = vmatpush2.bf16.msra.mxu0 0
        %2411 = vmatprep.subr.bf16.mxu0 0
        %2412 = vmatpush2.bf16.msra.mxu0 0
        %2413 = vmatprep.subr.bf16.mxu0 0
        %2414 = vmatpush2.bf16.msra.mxu0 0
        %2415 = vmatprep.subr.bf16.mxu0 0
        %2416 = vmatpush2.bf16.msra.mxu0 0
        %2417 = vmatprep.subr.bf16.mxu0 0
        %2418 = vmatpush2.bf16.msra.mxu0 0
        %2419 = vmatprep.subr.bf16.mxu0 0
        %2420 = vmatpush2.bf16.msra.mxu0 0
        %2421 = vmatprep.subr.bf16.mxu0 0
        %2422 = vmatpush2.bf16.msra.mxu0 0
        %2423 = vmatprep.subr.bf16.mxu0 0
        %2424 = vmatpush2.bf16.msra.mxu0 0
        %2425 = vmatprep.mubr.bf16.mxu0 0
        %2426 = vmatmul.mubr.bf16.gmra.mxu0 %v2388
        %v2427 = vpop.f32.mrf.mxu0
        %v2428 = vadd.f32 0.0, %v2427
        %v2429 = vpop.f32.mrf.mxu0
        %v2430 = vpop.f32.mrf.mxu0
        %v2431 = vpop.f32.mrf.mxu0
        %2432 = vdwg.mxu0
        %v2433 = vadd.f32 %v2379, %v2428
        %2434 = vrot.lane.b32.xlu0 %v2006, 119
        %v2435 = vpop.permute.xlu0 %2434
        %v2437 = vsel %vm1926, %v2435, 0.0
        %v2438 = vsel %vm1933, %v2437, 0.0
        %v2439 = vpack.c.bf16 %v2438, %v2438
        %v2440 = vld [vmem:[%s2 + $0x20] sm:$0xf]
        %v2442 = vsel %vm307, %v2440, 0
        %v2445 = vsel %vm2025, %v2439, 0
        %2447 = vmatprep.subr.bf16.mxu0 0
        %2448 = vmatpush1.bf16.msra.mxu0 0
        %2449 = vmatprep.subr.bf16.mxu0 0
        %2450 = vmatpush1.bf16.msra.mxu0 0
        %2451 = vmatprep.subr.bf16.mxu0 0
        %2452 = vmatpush1.bf16.msra.mxu0 0
        %2453 = vmatprep.subr.bf16.mxu0 0
        %2454 = vmatpush1.bf16.msra.mxu0 0
        %2455 = vmatprep.subr.bf16.mxu0 0
        %2456 = vmatpush1.bf16.msra.mxu0 0
        %2457 = vmatprep.subr.bf16.mxu0 0
        %2458 = vmatpush1.bf16.msra.mxu0 0
        %2459 = vmatprep.subr.bf16.mxu0 0
        %2460 = vmatpush1.bf16.msra.mxu0 0
        %2461 = vmatprep.subr.bf16.mxu0 0
        %2462 = vmatpush1.bf16.msra.mxu0 %v2445
        %2463 = vmatprep.subr.bf16.mxu0 0
        %2464 = vmatpush2.bf16.msra.mxu0 0
        %2465 = vmatprep.subr.bf16.mxu0 0
        %2466 = vmatpush2.bf16.msra.mxu0 0
        %2467 = vmatprep.subr.bf16.mxu0 0
        %2468 = vmatpush2.bf16.msra.mxu0 0
        %2469 = vmatprep.subr.bf16.mxu0 0
        %2470 = vmatpush2.bf16.msra.mxu0 0
        %2471 = vmatprep.subr.bf16.mxu0 0
        %2472 = vmatpush2.bf16.msra.mxu0 0
        %2473 = vmatprep.subr.bf16.mxu0 0
        %2474 = vmatpush2.bf16.msra.mxu0 0
        %2475 = vmatprep.subr.bf16.mxu0 0
        %2476 = vmatpush2.bf16.msra.mxu0 0
        %2477 = vmatprep.subr.bf16.mxu0 0
        %2478 = vmatpush2.bf16.msra.mxu0 0
        %2479 = vmatprep.mubr.bf16.mxu0 0
        %2480 = vmatmul.mubr.bf16.gmra.mxu0 %v2442
        %v2481 = vpop.f32.mrf.mxu0
        %v2482 = vadd.f32 0.0, %v2481
        %v2483 = vpop.f32.mrf.mxu0
        %v2484 = vpop.f32.mrf.mxu0
        %v2485 = vpop.f32.mrf.mxu0
        %2486 = vdwg.mxu0
        %v2487 = vadd.f32 %v2433, %v2482
        %2488 = vset.pattern.permute.xlu0 1
        %2489 = vperm.xlu0 %2488, %v283
        %v2490 = vpop.permute.xlu0 %2489
        %v2492 = vadd.f32 %v2487, %v2490
        %v2493 = vmax.f32 %v2492, 0.0
        %2495 = vrot.lane.b32.xlu0 %v2493, 9
        %v2496 = vpop.permute.xlu0 %2495
        %v2498 = vsel %vm292, 0.0, %v2496
        %v2499 = vsel %vm299, %v2498, 0.0
        %v2500 = vpack.c.bf16 %v2499, %v2499
        %v2501 = vld [vmem:[%s2 + $0x24] sm:$0xf]
        %2502 = vrot.lane.b32.xlu0 %v2493, 8
        %v2503 = vpop.permute.xlu0 %2502
        %v2505 = vsel %vm307, 0.0, %v2503
        %v2506 = vsel %vm313, %v2505, 0.0
        %v2507 = vpack.c.bf16 %v2506, %v2506
        %v2508 = vld [vmem:[%s2 + $0x28] sm:$0xf]
        %v2510 = vsel %vm307, %v2508, 0
        %v2513 = vsel %vm2025, %v2507, 0
        %2515 = vmatprep.subr.bf16.mxu0 0
        %2516 = vmatpush1.bf16.msra.mxu0 0
        %2517 = vmatprep.subr.bf16.mxu0 0
        %2518 = vmatpush1.bf16.msra.mxu0 0
        %2519 = vmatprep.subr.bf16.mxu0 0
        %2520 = vmatpush1.bf16.msra.mxu0 0
        %2521 = vmatprep.subr.bf16.mxu0 0
        %2522 = vmatpush1.bf16.msra.mxu0 0
        %2523 = vmatprep.subr.bf16.mxu0 0
        %2524 = vmatpush1.bf16.msra.mxu0 0
        %2525 = vmatprep.subr.bf16.mxu0 0
        %2526 = vmatpush1.bf16.msra.mxu0 0
        %2527 = vmatprep.subr.bf16.mxu0 0
        %2528 = vmatpush1.bf16.msra.mxu0 0
        %2529 = vmatprep.subr.bf16.mxu0 0
        %2530 = vmatpush1.bf16.msra.mxu0 %v2513
        %2531 = vmatprep.subr.bf16.mxu0 0
        %2532 = vmatpush2.bf16.msra.mxu0 0
        %2533 = vmatprep.subr.bf16.mxu0 0
        %2534 = vmatpush2.bf16.msra.mxu0 0
        %2535 = vmatprep.subr.bf16.mxu0 0
        %2536 = vmatpush2.bf16.msra.mxu0 0
        %2537 = vmatprep.subr.bf16.mxu0 0
        %2538 = vmatpush2.bf16.msra.mxu0 0
        %2539 = vmatprep.subr.bf16.mxu0 0
        %2540 = vmatpush2.bf16.msra.mxu0 0
        %2541 = vmatprep.subr.bf16.mxu0 0
        %2542 = vmatpush2.bf16.msra.mxu0 0
        %2543 = vmatprep.subr.bf16.mxu0 0
        %2544 = vmatpush2.bf16.msra.mxu0 0
        %2545 = vmatprep.subr.bf16.mxu0 0
        %2546 = vmatpush2.bf16.msra.mxu0 0
        %2547 = vmatprep.mubr.bf16.mxu0 0
        %2548 = vmatmul.mubr.bf16.gmra.mxu0 %v2510
        %v2549 = vpop.f32.mrf.mxu0
        %v2550 = vadd.f32 0.0, %v2549
        %v2551 = vpop.f32.mrf.mxu0
        %v2552 = vpop.f32.mrf.mxu0
        %v2553 = vpop.f32.mrf.mxu0
        %2554 = vdwg.mxu0
        %v2556 = vsel %vm307, %v2501, 0
        %v2559 = vsel %vm2025, %v2500, 0
        %2561 = vmatprep.subr.bf16.mxu0 0
        %2562 = vmatpush1.bf16.msra.mxu0 0
        %2563 = vmatprep.subr.bf16.mxu0 0
        %2564 = vmatpush1.bf16.msra.mxu0 0
        %2565 = vmatprep.subr.bf16.mxu0 0
        %2566 = vmatpush1.bf16.msra.mxu0 0
        %2567 = vmatprep.subr.bf16.mxu0 0
        %2568 = vmatpush1.bf16.msra.mxu0 0
        %2569 = vmatprep.subr.bf16.mxu0 0
        %2570 = vmatpush1.bf16.msra.mxu0 0
        %2571 = vmatprep.subr.bf16.mxu0 0
        %2572 = vmatpush1.bf16.msra.mxu0 0
        %2573 = vmatprep.subr.bf16.mxu0 0
        %2574 = vmatpush1.bf16.msra.mxu0 0
        %2575 = vmatprep.subr.bf16.mxu0 0
        %2576 = vmatpush1.bf16.msra.mxu0 %v2559
        %2577 = vmatprep.subr.bf16.mxu0 0
        %2578 = vmatpush2.bf16.msra.mxu0 0
        %2579 = vmatprep.subr.bf16.mxu0 0
        %2580 = vmatpush2.bf16.msra.mxu0 0
        %2581 = vmatprep.subr.bf16.mxu0 0
        %2582 = vmatpush2.bf16.msra.mxu0 0
        %2583 = vmatprep.subr.bf16.mxu0 0
        %2584 = vmatpush2.bf16.msra.mxu0 0
        %2585 = vmatprep.subr.bf16.mxu0 0
        %2586 = vmatpush2.bf16.msra.mxu0 0
        %2587 = vmatprep.subr.bf16.mxu0 0
        %2588 = vmatpush2.bf16.msra.mxu0 0
        %2589 = vmatprep.subr.bf16.mxu0 0
        %2590 = vmatpush2.bf16.msra.mxu0 0
        %2591 = vmatprep.subr.bf16.mxu0 0
        %2592 = vmatpush2.bf16.msra.mxu0 0
        %2593 = vmatprep.mubr.bf16.mxu0 0
        %2594 = vmatmul.mubr.bf16.gmra.mxu0 %v2556
        %v2595 = vpop.f32.mrf.mxu0
        %v2596 = vadd.f32 %v2550, %v2595
        %v2597 = vpop.f32.mrf.mxu0
        %v2598 = vpop.f32.mrf.mxu0
        %v2599 = vpop.f32.mrf.mxu0
        %2600 = vdwg.mxu0
        %2601 = vrot.lane.b32.xlu0 %v2493, 7
        %v2602 = vpop.permute.xlu0 %2601
        %v2604 = vsel %vm865, 0.0, %v2602
        %v2605 = vsel %vm871, %v2604, 0.0
        %v2606 = vpack.c.bf16 %v2605, %v2605
        %v2607 = vld [vmem:[%s2 + $0x2c] sm:$0xf]
        %v2609 = vsel %vm307, %v2607, 0
        %v2612 = vsel %vm2025, %v2606, 0
        %2614 = vmatprep.subr.bf16.mxu0 0
        %2615 = vmatpush1.bf16.msra.mxu0 0
        %2616 = vmatprep.subr.bf16.mxu0 0
        %2617 = vmatpush1.bf16.msra.mxu0 0
        %2618 = vmatprep.subr.bf16.mxu0 0
        %2619 = vmatpush1.bf16.msra.mxu0 0
        %2620 = vmatprep.subr.bf16.mxu0 0
        %2621 = vmatpush1.bf16.msra.mxu0 0
        %2622 = vmatprep.subr.bf16.mxu0 0
        %2623 = vmatpush1.bf16.msra.mxu0 0
        %2624 = vmatprep.subr.bf16.mxu0 0
        %2625 = vmatpush1.bf16.msra.mxu0 0
        %2626 = vmatprep.subr.bf16.mxu0 0
        %2627 = vmatpush1.bf16.msra.mxu0 0
        %2628 = vmatprep.subr.bf16.mxu0 0
        %2629 = vmatpush1.bf16.msra.mxu0 %v2612
        %2630 = vmatprep.subr.bf16.mxu0 0
        %2631 = vmatpush2.bf16.msra.mxu0 0
        %2632 = vmatprep.subr.bf16.mxu0 0
        %2633 = vmatpush2.bf16.msra.mxu0 0
        %2634 = vmatprep.subr.bf16.mxu0 0
        %2635 = vmatpush2.bf16.msra.mxu0 0
        %2636 = vmatprep.subr.bf16.mxu0 0
        %2637 = vmatpush2.bf16.msra.mxu0 0
        %2638 = vmatprep.subr.bf16.mxu0 0
        %2639 = vmatpush2.bf16.msra.mxu0 0
        %2640 = vmatprep.subr.bf16.mxu0 0
        %2641 = vmatpush2.bf16.msra.mxu0 0
        %2642 = vmatprep.subr.bf16.mxu0 0
        %2643 = vmatpush2.bf16.msra.mxu0 0
        %2644 = vmatprep.subr.bf16.mxu0 0
        %2645 = vmatpush2.bf16.msra.mxu0 0
        %2646 = vmatprep.mubr.bf16.mxu0 0
        %2647 = vmatmul.mubr.bf16.gmra.mxu0 %v2609
        %v2648 = vpop.f32.mrf.mxu0
        %v2649 = vadd.f32 0.0, %v2648
        %v2650 = vpop.f32.mrf.mxu0
        %v2651 = vpop.f32.mrf.mxu0
        %v2652 = vpop.f32.mrf.mxu0
        %2653 = vdwg.mxu0
        %v2654 = vadd.f32 %v2596, %v2649
        %2655 = vrot.lane.b32.xlu0 %v2493, 1
        %v2656 = vpop.permute.xlu0 %2655
        %v2658 = vsel %vm469, 0.0, %v2656
        %v2659 = vsel %vm475, %v2658, 0.0
        %v2660 = vpack.c.bf16 %v2659, %v2659
        %v2661 = vld [vmem:[%s2 + $0x30] sm:$0xf]
        %v2663 = vsel %vm307, %v2661, 0
        %v2666 = vsel %vm2025, %v2660, 0
        %2668 = vmatprep.subr.bf16.mxu0 0
        %2669 = vmatpush1.bf16.msra.mxu0 0
        %2670 = vmatprep.subr.bf16.mxu0 0
        %2671 = vmatpush1.bf16.msra.mxu0 0
        %2672 = vmatprep.subr.bf16.mxu0 0
        %2673 = vmatpush1.bf16.msra.mxu0 0
        %2674 = vmatprep.subr.bf16.mxu0 0
        %2675 = vmatpush1.bf16.msra.mxu0 0
        %2676 = vmatprep.subr.bf16.mxu0 0
        %2677 = vmatpush1.bf16.msra.mxu0 0
        %2678 = vmatprep.subr.bf16.mxu0 0
        %2679 = vmatpush1.bf16.msra.mxu0 0
        %2680 = vmatprep.subr.bf16.mxu0 0
        %2681 = vmatpush1.bf16.msra.mxu0 0
        %2682 = vmatprep.subr.bf16.mxu0 0
        %2683 = vmatpush1.bf16.msra.mxu0 %v2666
        %2684 = vmatprep.subr.bf16.mxu0 0
        %2685 = vmatpush2.bf16.msra.mxu0 0
        %2686 = vmatprep.subr.bf16.mxu0 0
        %2687 = vmatpush2.bf16.msra.mxu0 0
        %2688 = vmatprep.subr.bf16.mxu0 0
        %2689 = vmatpush2.bf16.msra.mxu0 0
        %2690 = vmatprep.subr.bf16.mxu0 0
        %2691 = vmatpush2.bf16.msra.mxu0 0
        %2692 = vmatprep.subr.bf16.mxu0 0
        %2693 = vmatpush2.bf16.msra.mxu0 0
        %2694 = vmatprep.subr.bf16.mxu0 0
        %2695 = vmatpush2.bf16.msra.mxu0 0
        %2696 = vmatprep.subr.bf16.mxu0 0
        %2697 = vmatpush2.bf16.msra.mxu0 0
        %2698 = vmatprep.subr.bf16.mxu0 0
        %2699 = vmatpush2.bf16.msra.mxu0 0
        %2700 = vmatprep.mubr.bf16.mxu0 0
        %2701 = vmatmul.mubr.bf16.gmra.mxu0 %v2663
        %v2702 = vpop.f32.mrf.mxu0
        %v2703 = vadd.f32 0.0, %v2702
        %v2704 = vpop.f32.mrf.mxu0
        %v2705 = vpop.f32.mrf.mxu0
        %v2706 = vpop.f32.mrf.mxu0
        %2707 = vdwg.mxu0
        %v2708 = vadd.f32 %v2654, %v2703
        %v2709 = vpack.c.bf16 %v2493, %v2493
        %v2710 = vld [vmem:[%s2 + $0x34] sm:$0xf]
        %v2712 = vsel %vm307, %v2710, 0
        %v2715 = vsel %vm2025, %v2709, 0
        %2717 = vmatprep.subr.bf16.mxu0 0
        %2718 = vmatpush1.bf16.msra.mxu0 0
        %2719 = vmatprep.subr.bf16.mxu0 0
        %2720 = vmatpush1.bf16.msra.mxu0 0
        %2721 = vmatprep.subr.bf16.mxu0 0
        %2722 = vmatpush1.bf16.msra.mxu0 0
        %2723 = vmatprep.subr.bf16.mxu0 0
        %2724 = vmatpush1.bf16.msra.mxu0 0
        %2725 = vmatprep.subr.bf16.mxu0 0
        %2726 = vmatpush1.bf16.msra.mxu0 0
        %2727 = vmatprep.subr.bf16.mxu0 0
        %2728 = vmatpush1.bf16.msra.mxu0 0
        %2729 = vmatprep.subr.bf16.mxu0 0
        %2730 = vmatpush1.bf16.msra.mxu0 0
        %2731 = vmatprep.subr.bf16.mxu0 0
        %2732 = vmatpush1.bf16.msra.mxu0 %v2715
        %2733 = vmatprep.subr.bf16.mxu0 0
        %2734 = vmatpush2.bf16.msra.mxu0 0
        %2735 = vmatprep.subr.bf16.mxu0 0
        %2736 = vmatpush2.bf16.msra.mxu0 0
        %2737 = vmatprep.subr.bf16.mxu0 0
        %2738 = vmatpush2.bf16.msra.mxu0 0
        %2739 = vmatprep.subr.bf16.mxu0 0
        %2740 = vmatpush2.bf16.msra.mxu0 0
        %2741 = vmatprep.subr.bf16.mxu0 0
        %2742 = vmatpush2.bf16.msra.mxu0 0
        %2743 = vmatprep.subr.bf16.mxu0 0
        %2744 = vmatpush2.bf16.msra.mxu0 0
        %2745 = vmatprep.subr.bf16.mxu0 0
        %2746 = vmatpush2.bf16.msra.mxu0 0
        %2747 = vmatprep.subr.bf16.mxu0 0
        %2748 = vmatpush2.bf16.msra.mxu0 0
        %2749 = vmatprep.mubr.bf16.mxu0 0
        %2750 = vmatmul.mubr.bf16.gmra.mxu0 %v2712
        %v2751 = vpop.f32.mrf.mxu0
        %v2752 = vadd.f32 0.0, %v2751
        %v2753 = vpop.f32.mrf.mxu0
        %v2754 = vpop.f32.mrf.mxu0
        %v2755 = vpop.f32.mrf.mxu0
        %2756 = vdwg.mxu0
        %v2757 = vadd.f32 %v2708, %v2752
        %2758 = vrot.lane.b32.xlu0 %v2493, 127
        %v2759 = vpop.permute.xlu0 %2758
        %v2761 = vsel %vm1004, %v2759, 0.0
        %v2762 = vsel %vm1010, %v2761, 0.0
        %v2763 = vpack.c.bf16 %v2762, %v2762
        %v2764 = vld [vmem:[%s2 + $0x38] sm:$0xf]
        %v2766 = vsel %vm307, %v2764, 0
        %v2769 = vsel %vm2025, %v2763, 0
        %2771 = vmatprep.subr.bf16.mxu0 0
        %2772 = vmatpush1.bf16.msra.mxu0 0
        %2773 = vmatprep.subr.bf16.mxu0 0
        %2774 = vmatpush1.bf16.msra.mxu0 0
        %2775 = vmatprep.subr.bf16.mxu0 0
        %2776 = vmatpush1.bf16.msra.mxu0 0
        %2777 = vmatprep.subr.bf16.mxu0 0
        %2778 = vmatpush1.bf16.msra.mxu0 0
        %2779 = vmatprep.subr.bf16.mxu0 0
        %2780 = vmatpush1.bf16.msra.mxu0 0
        %2781 = vmatprep.subr.bf16.mxu0 0
        %2782 = vmatpush1.bf16.msra.mxu0 0
        %2783 = vmatprep.subr.bf16.mxu0 0
        %2784 = vmatpush1.bf16.msra.mxu0 0
        %2785 = vmatprep.subr.bf16.mxu0 0
        %2786 = vmatpush1.bf16.msra.mxu0 %v2769
        %2787 = vmatprep.subr.bf16.mxu0 0
        %2788 = vmatpush2.bf16.msra.mxu0 0
        %2789 = vmatprep.subr.bf16.mxu0 0
        %2790 = vmatpush2.bf16.msra.mxu0 0
        %2791 = vmatprep.subr.bf16.mxu0 0
        %2792 = vmatpush2.bf16.msra.mxu0 0
        %2793 = vmatprep.subr.bf16.mxu0 0
        %2794 = vmatpush2.bf16.msra.mxu0 0
        %2795 = vmatprep.subr.bf16.mxu0 0
        %2796 = vmatpush2.bf16.msra.mxu0 0
        %2797 = vmatprep.subr.bf16.mxu0 0
        %2798 = vmatpush2.bf16.msra.mxu0 0
        %2799 = vmatprep.subr.bf16.mxu0 0
        %2800 = vmatpush2.bf16.msra.mxu0 0
        %2801 = vmatprep.subr.bf16.mxu0 0
        %2802 = vmatpush2.bf16.msra.mxu0 0
        %2803 = vmatprep.mubr.bf16.mxu0 0
        %2804 = vmatmul.mubr.bf16.gmra.mxu0 %v2766
        %v2805 = vpop.f32.mrf.mxu0
        %v2806 = vadd.f32 0.0, %v2805
        %v2807 = vpop.f32.mrf.mxu0
        %v2808 = vpop.f32.mrf.mxu0
        %v2809 = vpop.f32.mrf.mxu0
        %2810 = vdwg.mxu0
        %v2811 = vadd.f32 %v2757, %v2806
        %2812 = vrot.lane.b32.xlu0 %v2493, 121
        %v2813 = vpop.permute.xlu0 %2812
        %v2815 = vsel %vm1437, %v2813, 0.0
        %v2816 = vsel %vm1443, %v2815, 0.0
        %v2817 = vpack.c.bf16 %v2816, %v2816
        %v2818 = vld [vmem:[%s2 + $0x3c] sm:$0xf]
        %v2820 = vsel %vm307, %v2818, 0
        %v2823 = vsel %vm2025, %v2817, 0
        %2825 = vmatprep.subr.bf16.mxu0 0
        %2826 = vmatpush1.bf16.msra.mxu0 0
        %2827 = vmatprep.subr.bf16.mxu0 0
        %2828 = vmatpush1.bf16.msra.mxu0 0
        %2829 = vmatprep.subr.bf16.mxu0 0
        %2830 = vmatpush1.bf16.msra.mxu0 0
        %2831 = vmatprep.subr.bf16.mxu0 0
        %2832 = vmatpush1.bf16.msra.mxu0 0
        %2833 = vmatprep.subr.bf16.mxu0 0
        %2834 = vmatpush1.bf16.msra.mxu0 0
        %2835 = vmatprep.subr.bf16.mxu0 0
        %2836 = vmatpush1.bf16.msra.mxu0 0
        %2837 = vmatprep.subr.bf16.mxu0 0
        %2838 = vmatpush1.bf16.msra.mxu0 0
        %2839 = vmatprep.subr.bf16.mxu0 0
        %2840 = vmatpush1.bf16.msra.mxu0 %v2823
        %2841 = vmatprep.subr.bf16.mxu0 0
        %2842 = vmatpush2.bf16.msra.mxu0 0
        %2843 = vmatprep.subr.bf16.mxu0 0
        %2844 = vmatpush2.bf16.msra.mxu0 0
        %2845 = vmatprep.subr.bf16.mxu0 0
        %2846 = vmatpush2.bf16.msra.mxu0 0
        %2847 = vmatprep.subr.bf16.mxu0 0
        %2848 = vmatpush2.bf16.msra.mxu0 0
        %2849 = vmatprep.subr.bf16.mxu0 0
        %2850 = vmatpush2.bf16.msra.mxu0 0
        %2851 = vmatprep.subr.bf16.mxu0 0
        %2852 = vmatpush2.bf16.msra.mxu0 0
        %2853 = vmatprep.subr.bf16.mxu0 0
        %2854 = vmatpush2.bf16.msra.mxu0 0
        %2855 = vmatprep.subr.bf16.mxu0 0
        %2856 = vmatpush2.bf16.msra.mxu0 0
        %2857 = vmatprep.mubr.bf16.mxu0 0
        %2858 = vmatmul.mubr.bf16.gmra.mxu0 %v2820
        %v2859 = vpop.f32.mrf.mxu0
        %v2860 = vadd.f32 0.0, %v2859
        %v2861 = vpop.f32.mrf.mxu0
        %v2862 = vpop.f32.mrf.mxu0
        %v2863 = vpop.f32.mrf.mxu0
        %2864 = vdwg.mxu0
        %v2865 = vadd.f32 %v2811, %v2860
        %2866 = vrot.lane.b32.xlu0 %v2493, 120
        %v2867 = vpop.permute.xlu0 %2866
        %v2869 = vsel %vm1493, %v2867, 0.0
        %v2870 = vsel %vm1499, %v2869, 0.0
        %v2871 = vpack.c.bf16 %v2870, %v2870
        %v2872 = vld [vmem:[%s2 + $0x40] sm:$0xf]
        %v2874 = vsel %vm307, %v2872, 0
        %v2877 = vsel %vm2025, %v2871, 0
        %2879 = vmatprep.subr.bf16.mxu0 0
        %2880 = vmatpush1.bf16.msra.mxu0 0
        %2881 = vmatprep.subr.bf16.mxu0 0
        %2882 = vmatpush1.bf16.msra.mxu0 0
        %2883 = vmatprep.subr.bf16.mxu0 0
        %2884 = vmatpush1.bf16.msra.mxu0 0
        %2885 = vmatprep.subr.bf16.mxu0 0
        %2886 = vmatpush1.bf16.msra.mxu0 0
        %2887 = vmatprep.subr.bf16.mxu0 0
        %2888 = vmatpush1.bf16.msra.mxu0 0
        %2889 = vmatprep.subr.bf16.mxu0 0
        %2890 = vmatpush1.bf16.msra.mxu0 0
        %2891 = vmatprep.subr.bf16.mxu0 0
        %2892 = vmatpush1.bf16.msra.mxu0 0
        %2893 = vmatprep.subr.bf16.mxu0 0
        %2894 = vmatpush1.bf16.msra.mxu0 %v2877
        %2895 = vmatprep.subr.bf16.mxu0 0
        %2896 = vmatpush2.bf16.msra.mxu0 0
        %2897 = vmatprep.subr.bf16.mxu0 0
        %2898 = vmatpush2.bf16.msra.mxu0 0
        %2899 = vmatprep.subr.bf16.mxu0 0
        %2900 = vmatpush2.bf16.msra.mxu0 0
        %2901 = vmatprep.subr.bf16.mxu0 0
        %2902 = vmatpush2.bf16.msra.mxu0 0
        %2903 = vmatprep.subr.bf16.mxu0 0
        %2904 = vmatpush2.bf16.msra.mxu0 0
        %2905 = vmatprep.subr.bf16.mxu0 0
        %2906 = vmatpush2.bf16.msra.mxu0 0
        %2907 = vmatprep.subr.bf16.mxu0 0
        %2908 = vmatpush2.bf16.msra.mxu0 0
        %2909 = vmatprep.subr.bf16.mxu0 0
        %2910 = vmatpush2.bf16.msra.mxu0 0
        %2911 = vmatprep.mubr.bf16.mxu0 0
        %2912 = vmatmul.mubr.bf16.gmra.mxu0 %v2874
        %v2913 = vpop.f32.mrf.mxu0
        %v2914 = vadd.f32 0.0, %v2913
        %v2915 = vpop.f32.mrf.mxu0
        %v2916 = vpop.f32.mrf.mxu0
        %v2917 = vpop.f32.mrf.mxu0
        %2918 = vdwg.mxu0
        %v2919 = vadd.f32 %v2865, %v2914
        %2920 = vrot.lane.b32.xlu0 %v2493, 119
        %v2921 = vpop.permute.xlu0 %2920
        %v2923 = vsel %vm1926, %v2921, 0.0
        %v2924 = vsel %vm1933, %v2923, 0.0
        %v2925 = vpack.c.bf16 %v2924, %v2924
        %v2926 = vld [vmem:[%s2 + $0x44] sm:$0xf]
        %v2928 = vsel %vm307, %v2926, 0
        %v2931 = vsel %vm2025, %v2925, 0
        %2933 = vmatprep.subr.bf16.mxu0 0
        %2934 = vmatpush1.bf16.msra.mxu0 0
        %2935 = vmatprep.subr.bf16.mxu0 0
        %2936 = vmatpush1.bf16.msra.mxu0 0
        %2937 = vmatprep.subr.bf16.mxu0 0
        %2938 = vmatpush1.bf16.msra.mxu0 0
        %2939 = vmatprep.subr.bf16.mxu0 0
        %2940 = vmatpush1.bf16.msra.mxu0 0
        %2941 = vmatprep.subr.bf16.mxu0 0
        %2942 = vmatpush1.bf16.msra.mxu0 0
        %2943 = vmatprep.subr.bf16.mxu0 0
        %2944 = vmatpush1.bf16.msra.mxu0 0
        %2945 = vmatprep.subr.bf16.mxu0 0
        %2946 = vmatpush1.bf16.msra.mxu0 0
        %2947 = vmatprep.subr.bf16.mxu0 0
        %2948 = vmatpush1.bf16.msra.mxu0 %v2931
        %2949 = vmatprep.subr.bf16.mxu0 0
        %2950 = vmatpush2.bf16.msra.mxu0 0
        %2951 = vmatprep.subr.bf16.mxu0 0
        %2952 = vmatpush2.bf16.msra.mxu0 0
        %2953 = vmatprep.subr.bf16.mxu0 0
        %2954 = vmatpush2.bf16.msra.mxu0 0
        %2955 = vmatprep.subr.bf16.mxu0 0
        %2956 = vmatpush2.bf16.msra.mxu0 0
        %2957 = vmatprep.subr.bf16.mxu0 0
        %2958 = vmatpush2.bf16.msra.mxu0 0
        %2959 = vmatprep.subr.bf16.mxu0 0
        %2960 = vmatpush2.bf16.msra.mxu0 0
        %2961 = vmatprep.subr.bf16.mxu0 0
        %2962 = vmatpush2.bf16.msra.mxu0 0
        %2963 = vmatprep.subr.bf16.mxu0 0
        %2964 = vmatpush2.bf16.msra.mxu0 0
        %2965 = vmatprep.mubr.bf16.mxu0 0
        %2966 = vmatmul.mubr.bf16.gmra.mxu0 %v2928
        %v2967 = vpop.f32.mrf.mxu0
        %v2968 = vadd.f32 0.0, %v2967
        %v2969 = vpop.f32.mrf.mxu0
        %v2970 = vpop.f32.mrf.mxu0
        %v2971 = vpop.f32.mrf.mxu0
        %2972 = vdwg.mxu0
        %v2973 = vadd.f32 %v2919, %v2968
        %2974 = vset.pattern.permute.xlu0 2
        %2975 = vperm.xlu0 %2974, %v283
        %v2976 = vpop.permute.xlu0 %2975
        %v2978 = vadd.f32 %v2973, %v2976
        %v2979 = vadd.f32 %v2005, %v2978
        %v2980 = vmax.f32 %v2979, 0.0
        %2982 = vrot.lane.b32.xlu0 %v2980, 9
        %v2983 = vpop.permute.xlu0 %2982
        %v2985 = vsel %vm292, 0.0, %v2983
        %v2986 = vsel %vm299, %v2985, 0.0
        %v2987 = vpack.c.bf16 %v2986, %v2986
        %v2988 = vld [vmem:[%s2 + $0x48] sm:$0xf]
        %2989 = vrot.lane.b32.xlu0 %v2980, 8
        %v2990 = vpop.permute.xlu0 %2989
        %v2992 = vsel %vm307, 0.0, %v2990
        %v2993 = vsel %vm313, %v2992, 0.0
        %v2994 = vpack.c.bf16 %v2993, %v2993
        %v2995 = vld [vmem:[%s2 + $0x4c] sm:$0xf]
        %v2997 = vsel %vm307, %v2995, 0
        %v3000 = vsel %vm2025, %v2994, 0
        %3002 = vmatprep.subr.bf16.mxu0 0
        %3003 = vmatpush1.bf16.msra.mxu0 0
        %3004 = vmatprep.subr.bf16.mxu0 0
        %3005 = vmatpush1.bf16.msra.mxu0 0
        %3006 = vmatprep.subr.bf16.mxu0 0
        %3007 = vmatpush1.bf16.msra.mxu0 0
        %3008 = vmatprep.subr.bf16.mxu0 0
        %3009 = vmatpush1.bf16.msra.mxu0 0
        %3010 = vmatprep.subr.bf16.mxu0 0
        %3011 = vmatpush1.bf16.msra.mxu0 0
        %3012 = vmatprep.subr.bf16.mxu0 0
        %3013 = vmatpush1.bf16.msra.mxu0 0
        %3014 = vmatprep.subr.bf16.mxu0 0
        %3015 = vmatpush1.bf16.msra.mxu0 0
        %3016 = vmatprep.subr.bf16.mxu0 0
        %3017 = vmatpush1.bf16.msra.mxu0 %v3000
        %3018 = vmatprep.subr.bf16.mxu0 0
        %3019 = vmatpush2.bf16.msra.mxu0 0
        %3020 = vmatprep.subr.bf16.mxu0 0
        %3021 = vmatpush2.bf16.msra.mxu0 0
        %3022 = vmatprep.subr.bf16.mxu0 0
        %3023 = vmatpush2.bf16.msra.mxu0 0
        %3024 = vmatprep.subr.bf16.mxu0 0
        %3025 = vmatpush2.bf16.msra.mxu0 0
        %3026 = vmatprep.subr.bf16.mxu0 0
        %3027 = vmatpush2.bf16.msra.mxu0 0
        %3028 = vmatprep.subr.bf16.mxu0 0
        %3029 = vmatpush2.bf16.msra.mxu0 0
        %3030 = vmatprep.subr.bf16.mxu0 0
        %3031 = vmatpush2.bf16.msra.mxu0 0
        %3032 = vmatprep.subr.bf16.mxu0 0
        %3033 = vmatpush2.bf16.msra.mxu0 0
        %3034 = vmatprep.mubr.bf16.mxu0 0
        %3035 = vmatmul.mubr.bf16.gmra.mxu0 %v2997
        %v3036 = vpop.f32.mrf.mxu0
        %v3037 = vadd.f32 0.0, %v3036
        %v3038 = vpop.f32.mrf.mxu0
        %v3039 = vpop.f32.mrf.mxu0
        %v3040 = vpop.f32.mrf.mxu0
        %3041 = vdwg.mxu0
        %v3043 = vsel %vm307, %v2988, 0
        %v3046 = vsel %vm2025, %v2987, 0
        %3048 = vmatprep.subr.bf16.mxu0 0
        %3049 = vmatpush1.bf16.msra.mxu0 0
        %3050 = vmatprep.subr.bf16.mxu0 0
        %3051 = vmatpush1.bf16.msra.mxu0 0
        %3052 = vmatprep.subr.bf16.mxu0 0
        %3053 = vmatpush1.bf16.msra.mxu0 0
        %3054 = vmatprep.subr.bf16.mxu0 0
        %3055 = vmatpush1.bf16.msra.mxu0 0
        %3056 = vmatprep.subr.bf16.mxu0 0
        %3057 = vmatpush1.bf16.msra.mxu0 0
        %3058 = vmatprep.subr.bf16.mxu0 0
        %3059 = vmatpush1.bf16.msra.mxu0 0
        %3060 = vmatprep.subr.bf16.mxu0 0
        %3061 = vmatpush1.bf16.msra.mxu0 0
        %3062 = vmatprep.subr.bf16.mxu0 0
        %3063 = vmatpush1.bf16.msra.mxu0 %v3046
        %3064 = vmatprep.subr.bf16.mxu0 0
        %3065 = vmatpush2.bf16.msra.mxu0 0
        %3066 = vmatprep.subr.bf16.mxu0 0
        %3067 = vmatpush2.bf16.msra.mxu0 0
        %3068 = vmatprep.subr.bf16.mxu0 0
        %3069 = vmatpush2.bf16.msra.mxu0 0
        %3070 = vmatprep.subr.bf16.mxu0 0
        %3071 = vmatpush2.bf16.msra.mxu0 0
        %3072 = vmatprep.subr.bf16.mxu0 0
        %3073 = vmatpush2.bf16.msra.mxu0 0
        %3074 = vmatprep.subr.bf16.mxu0 0
        %3075 = vmatpush2.bf16.msra.mxu0 0
        %3076 = vmatprep.subr.bf16.mxu0 0
        %3077 = vmatpush2.bf16.msra.mxu0 0
        %3078 = vmatprep.subr.bf16.mxu0 0
        %3079 = vmatpush2.bf16.msra.mxu0 0
        %3080 = vmatprep.mubr.bf16.mxu0 0
        %3081 = vmatmul.mubr.bf16.gmra.mxu0 %v3043
        %v3082 = vpop.f32.mrf.mxu0
        %v3083 = vadd.f32 %v3037, %v3082
        %v3084 = vpop.f32.mrf.mxu0
        %v3085 = vpop.f32.mrf.mxu0
        %v3086 = vpop.f32.mrf.mxu0
        %3087 = vdwg.mxu0
        %3088 = vrot.lane.b32.xlu0 %v2980, 7
        %v3089 = vpop.permute.xlu0 %3088
        %v3091 = vsel %vm865, 0.0, %v3089
        %v3092 = vsel %vm871, %v3091, 0.0
        %v3093 = vpack.c.bf16 %v3092, %v3092
        %v3094 = vld [vmem:[%s2 + $0x50] sm:$0xf]
        %v3096 = vsel %vm307, %v3094, 0
        %v3099 = vsel %vm2025, %v3093, 0
        %3101 = vmatprep.subr.bf16.mxu0 0
        %3102 = vmatpush1.bf16.msra.mxu0 0
        %3103 = vmatprep.subr.bf16.mxu0 0
        %3104 = vmatpush1.bf16.msra.mxu0 0
        %3105 = vmatprep.subr.bf16.mxu0 0
        %3106 = vmatpush1.bf16.msra.mxu0 0
        %3107 = vmatprep.subr.bf16.mxu0 0
        %3108 = vmatpush1.bf16.msra.mxu0 0
        %3109 = vmatprep.subr.bf16.mxu0 0
        %3110 = vmatpush1.bf16.msra.mxu0 0
        %3111 = vmatprep.subr.bf16.mxu0 0
        %3112 = vmatpush1.bf16.msra.mxu0 0
        %3113 = vmatprep.subr.bf16.mxu0 0
        %3114 = vmatpush1.bf16.msra.mxu0 0
        %3115 = vmatprep.subr.bf16.mxu0 0
        %3116 = vmatpush1.bf16.msra.mxu0 %v3099
        %3117 = vmatprep.subr.bf16.mxu0 0
        %3118 = vmatpush2.bf16.msra.mxu0 0
        %3119 = vmatprep.subr.bf16.mxu0 0
        %3120 = vmatpush2.bf16.msra.mxu0 0
        %3121 = vmatprep.subr.bf16.mxu0 0
        %3122 = vmatpush2.bf16.msra.mxu0 0
        %3123 = vmatprep.subr.bf16.mxu0 0
        %3124 = vmatpush2.bf16.msra.mxu0 0
        %3125 = vmatprep.subr.bf16.mxu0 0
        %3126 = vmatpush2.bf16.msra.mxu0 0
        %3127 = vmatprep.subr.bf16.mxu0 0
        %3128 = vmatpush2.bf16.msra.mxu0 0
        %3129 = vmatprep.subr.bf16.mxu0 0
        %3130 = vmatpush2.bf16.msra.mxu0 0
        %3131 = vmatprep.subr.bf16.mxu0 0
        %3132 = vmatpush2.bf16.msra.mxu0 0
        %3133 = vmatprep.mubr.bf16.mxu0 0
        %3134 = vmatmul.mubr.bf16.gmra.mxu0 %v3096
        %v3135 = vpop.f32.mrf.mxu0
        %v3136 = vadd.f32 0.0, %v3135
        %v3137 = vpop.f32.mrf.mxu0
        %v3138 = vpop.f32.mrf.mxu0
        %v3139 = vpop.f32.mrf.mxu0
        %3140 = vdwg.mxu0
        %v3141 = vadd.f32 %v3083, %v3136
        %3142 = vrot.lane.b32.xlu0 %v2980, 1
        %v3143 = vpop.permute.xlu0 %3142
        %v3145 = vsel %vm469, 0.0, %v3143
        %v3146 = vsel %vm475, %v3145, 0.0
        %v3147 = vpack.c.bf16 %v3146, %v3146
        %v3148 = vld [vmem:[%s2 + $0x54] sm:$0xf]
        %v3150 = vsel %vm307, %v3148, 0
        %v3153 = vsel %vm2025, %v3147, 0
        %3155 = vmatprep.subr.bf16.mxu0 0
        %3156 = vmatpush1.bf16.msra.mxu0 0
        %3157 = vmatprep.subr.bf16.mxu0 0
        %3158 = vmatpush1.bf16.msra.mxu0 0
        %3159 = vmatprep.subr.bf16.mxu0 0
        %3160 = vmatpush1.bf16.msra.mxu0 0
        %3161 = vmatprep.subr.bf16.mxu0 0
        %3162 = vmatpush1.bf16.msra.mxu0 0
        %3163 = vmatprep.subr.bf16.mxu0 0
        %3164 = vmatpush1.bf16.msra.mxu0 0
        %3165 = vmatprep.subr.bf16.mxu0 0
        %3166 = vmatpush1.bf16.msra.mxu0 0
        %3167 = vmatprep.subr.bf16.mxu0 0
        %3168 = vmatpush1.bf16.msra.mxu0 0
        %3169 = vmatprep.subr.bf16.mxu0 0
        %3170 = vmatpush1.bf16.msra.mxu0 %v3153
        %3171 = vmatprep.subr.bf16.mxu0 0
        %3172 = vmatpush2.bf16.msra.mxu0 0
        %3173 = vmatprep.subr.bf16.mxu0 0
        %3174 = vmatpush2.bf16.msra.mxu0 0
        %3175 = vmatprep.subr.bf16.mxu0 0
        %3176 = vmatpush2.bf16.msra.mxu0 0
        %3177 = vmatprep.subr.bf16.mxu0 0
        %3178 = vmatpush2.bf16.msra.mxu0 0
        %3179 = vmatprep.subr.bf16.mxu0 0
        %3180 = vmatpush2.bf16.msra.mxu0 0
        %3181 = vmatprep.subr.bf16.mxu0 0
        %3182 = vmatpush2.bf16.msra.mxu0 0
        %3183 = vmatprep.subr.bf16.mxu0 0
        %3184 = vmatpush2.bf16.msra.mxu0 0
        %3185 = vmatprep.subr.bf16.mxu0 0
        %3186 = vmatpush2.bf16.msra.mxu0 0
        %3187 = vmatprep.mubr.bf16.mxu0 0
        %3188 = vmatmul.mubr.bf16.gmra.mxu0 %v3150
        %v3189 = vpop.f32.mrf.mxu0
        %v3190 = vadd.f32 0.0, %v3189
        %v3191 = vpop.f32.mrf.mxu0
        %v3192 = vpop.f32.mrf.mxu0
        %v3193 = vpop.f32.mrf.mxu0
        %3194 = vdwg.mxu0
        %v3195 = vadd.f32 %v3141, %v3190
        %v3196 = vpack.c.bf16 %v2980, %v2980
        %v3197 = vld [vmem:[%s2 + $0x58] sm:$0xf]
        %v3199 = vsel %vm307, %v3197, 0
        %v3202 = vsel %vm2025, %v3196, 0
        %3204 = vmatprep.subr.bf16.mxu0 0
        %3205 = vmatpush1.bf16.msra.mxu0 0
        %3206 = vmatprep.subr.bf16.mxu0 0
        %3207 = vmatpush1.bf16.msra.mxu0 0
        %3208 = vmatprep.subr.bf16.mxu0 0
        %3209 = vmatpush1.bf16.msra.mxu0 0
        %3210 = vmatprep.subr.bf16.mxu0 0
        %3211 = vmatpush1.bf16.msra.mxu0 0
        %3212 = vmatprep.subr.bf16.mxu0 0
        %3213 = vmatpush1.bf16.msra.mxu0 0
        %3214 = vmatprep.subr.bf16.mxu0 0
        %3215 = vmatpush1.bf16.msra.mxu0 0
        %3216 = vmatprep.subr.bf16.mxu0 0
        %3217 = vmatpush1.bf16.msra.mxu0 0
        %3218 = vmatprep.subr.bf16.mxu0 0
        %3219 = vmatpush1.bf16.msra.mxu0 %v3202
        %3220 = vmatprep.subr.bf16.mxu0 0
        %3221 = vmatpush2.bf16.msra.mxu0 0
        %3222 = vmatprep.subr.bf16.mxu0 0
        %3223 = vmatpush2.bf16.msra.mxu0 0
        %3224 = vmatprep.subr.bf16.mxu0 0
        %3225 = vmatpush2.bf16.msra.mxu0 0
        %3226 = vmatprep.subr.bf16.mxu0 0
        %3227 = vmatpush2.bf16.msra.mxu0 0
        %3228 = vmatprep.subr.bf16.mxu0 0
        %3229 = vmatpush2.bf16.msra.mxu0 0
        %3230 = vmatprep.subr.bf16.mxu0 0
        %3231 = vmatpush2.bf16.msra.mxu0 0
        %3232 = vmatprep.subr.bf16.mxu0 0
        %3233 = vmatpush2.bf16.msra.mxu0 0
        %3234 = vmatprep.subr.bf16.mxu0 0
        %3235 = vmatpush2.bf16.msra.mxu0 0
        %3236 = vmatprep.mubr.bf16.mxu0 0
        %3237 = vmatmul.mubr.bf16.gmra.mxu0 %v3199
        %v3238 = vpop.f32.mrf.mxu0
        %v3239 = vadd.f32 0.0, %v3238
        %v3240 = vpop.f32.mrf.mxu0
        %v3241 = vpop.f32.mrf.mxu0
        %v3242 = vpop.f32.mrf.mxu0
        %3243 = vdwg.mxu0
        %v3244 = vadd.f32 %v3195, %v3239
        %3245 = vrot.lane.b32.xlu0 %v2980, 127
        %v3246 = vpop.permute.xlu0 %3245
        %v3248 = vsel %vm1004, %v3246, 0.0
        %v3249 = vsel %vm1010, %v3248, 0.0
        %v3250 = vpack.c.bf16 %v3249, %v3249
        %v3251 = vld [vmem:[%s2 + $0x5c] sm:$0xf]
        %v3253 = vsel %vm307, %v3251, 0
        %v3256 = vsel %vm2025, %v3250, 0
        %3258 = vmatprep.subr.bf16.mxu0 0
        %3259 = vmatpush1.bf16.msra.mxu0 0
        %3260 = vmatprep.subr.bf16.mxu0 0
        %3261 = vmatpush1.bf16.msra.mxu0 0
        %3262 = vmatprep.subr.bf16.mxu0 0
        %3263 = vmatpush1.bf16.msra.mxu0 0
        %3264 = vmatprep.subr.bf16.mxu0 0
        %3265 = vmatpush1.bf16.msra.mxu0 0
        %3266 = vmatprep.subr.bf16.mxu0 0
        %3267 = vmatpush1.bf16.msra.mxu0 0
        %3268 = vmatprep.subr.bf16.mxu0 0
        %3269 = vmatpush1.bf16.msra.mxu0 0
        %3270 = vmatprep.subr.bf16.mxu0 0
        %3271 = vmatpush1.bf16.msra.mxu0 0
        %3272 = vmatprep.subr.bf16.mxu0 0
        %3273 = vmatpush1.bf16.msra.mxu0 %v3256
        %3274 = vmatprep.subr.bf16.mxu0 0
        %3275 = vmatpush2.bf16.msra.mxu0 0
        %3276 = vmatprep.subr.bf16.mxu0 0
        %3277 = vmatpush2.bf16.msra.mxu0 0
        %3278 = vmatprep.subr.bf16.mxu0 0
        %3279 = vmatpush2.bf16.msra.mxu0 0
        %3280 = vmatprep.subr.bf16.mxu0 0
        %3281 = vmatpush2.bf16.msra.mxu0 0
        %3282 = vmatprep.subr.bf16.mxu0 0
        %3283 = vmatpush2.bf16.msra.mxu0 0
        %3284 = vmatprep.subr.bf16.mxu0 0
        %3285 = vmatpush2.bf16.msra.mxu0 0
        %3286 = vmatprep.subr.bf16.mxu0 0
        %3287 = vmatpush2.bf16.msra.mxu0 0
        %3288 = vmatprep.subr.bf16.mxu0 0
        %3289 = vmatpush2.bf16.msra.mxu0 0
        %3290 = vmatprep.mubr.bf16.mxu0 0
        %3291 = vmatmul.mubr.bf16.gmra.mxu0 %v3253
        %v3292 = vpop.f32.mrf.mxu0
        %v3293 = vadd.f32 0.0, %v3292
        %v3294 = vpop.f32.mrf.mxu0
        %v3295 = vpop.f32.mrf.mxu0
        %v3296 = vpop.f32.mrf.mxu0
        %3297 = vdwg.mxu0
        %v3298 = vadd.f32 %v3244, %v3293
        %3299 = vrot.lane.b32.xlu0 %v2980, 121
        %v3300 = vpop.permute.xlu0 %3299
        %v3302 = vsel %vm1437, %v3300, 0.0
        %v3303 = vsel %vm1443, %v3302, 0.0
        %v3304 = vpack.c.bf16 %v3303, %v3303
        %v3305 = vld [vmem:[%s2 + $0x60] sm:$0xf]
        %v3307 = vsel %vm307, %v3305, 0
        %v3310 = vsel %vm2025, %v3304, 0
        %3312 = vmatprep.subr.bf16.mxu0 0
        %3313 = vmatpush1.bf16.msra.mxu0 0
        %3314 = vmatprep.subr.bf16.mxu0 0
        %3315 = vmatpush1.bf16.msra.mxu0 0
        %3316 = vmatprep.subr.bf16.mxu0 0
        %3317 = vmatpush1.bf16.msra.mxu0 0
        %3318 = vmatprep.subr.bf16.mxu0 0
        %3319 = vmatpush1.bf16.msra.mxu0 0
        %3320 = vmatprep.subr.bf16.mxu0 0
        %3321 = vmatpush1.bf16.msra.mxu0 0
        %3322 = vmatprep.subr.bf16.mxu0 0
        %3323 = vmatpush1.bf16.msra.mxu0 0
        %3324 = vmatprep.subr.bf16.mxu0 0
        %3325 = vmatpush1.bf16.msra.mxu0 0
        %3326 = vmatprep.subr.bf16.mxu0 0
        %3327 = vmatpush1.bf16.msra.mxu0 %v3310
        %3328 = vmatprep.subr.bf16.mxu0 0
        %3329 = vmatpush2.bf16.msra.mxu0 0
        %3330 = vmatprep.subr.bf16.mxu0 0
        %3331 = vmatpush2.bf16.msra.mxu0 0
        %3332 = vmatprep.subr.bf16.mxu0 0
        %3333 = vmatpush2.bf16.msra.mxu0 0
        %3334 = vmatprep.subr.bf16.mxu0 0
        %3335 = vmatpush2.bf16.msra.mxu0 0
        %3336 = vmatprep.subr.bf16.mxu0 0
        %3337 = vmatpush2.bf16.msra.mxu0 0
        %3338 = vmatprep.subr.bf16.mxu0 0
        %3339 = vmatpush2.bf16.msra.mxu0 0
        %3340 = vmatprep.subr.bf16.mxu0 0
        %3341 = vmatpush2.bf16.msra.mxu0 0
        %3342 = vmatprep.subr.bf16.mxu0 0
        %3343 = vmatpush2.bf16.msra.mxu0 0
        %3344 = vmatprep.mubr.bf16.mxu0 0
        %3345 = vmatmul.mubr.bf16.gmra.mxu0 %v3307
        %v3346 = vpop.f32.mrf.mxu0
        %v3347 = vadd.f32 0.0, %v3346
        %v3348 = vpop.f32.mrf.mxu0
        %v3349 = vpop.f32.mrf.mxu0
        %v3350 = vpop.f32.mrf.mxu0
        %3351 = vdwg.mxu0
        %v3352 = vadd.f32 %v3298, %v3347
        %3353 = vrot.lane.b32.xlu0 %v2980, 120
        %v3354 = vpop.permute.xlu0 %3353
        %v3356 = vsel %vm1493, %v3354, 0.0
        %v3357 = vsel %vm1499, %v3356, 0.0
        %v3358 = vpack.c.bf16 %v3357, %v3357
        %v3359 = vld [vmem:[%s2 + $0x64] sm:$0xf]
        %v3361 = vsel %vm307, %v3359, 0
        %v3364 = vsel %vm2025, %v3358, 0
        %3366 = vmatprep.subr.bf16.mxu0 0
        %3367 = vmatpush1.bf16.msra.mxu0 0
        %3368 = vmatprep.subr.bf16.mxu0 0
        %3369 = vmatpush1.bf16.msra.mxu0 0
        %3370 = vmatprep.subr.bf16.mxu0 0
        %3371 = vmatpush1.bf16.msra.mxu0 0
        %3372 = vmatprep.subr.bf16.mxu0 0
        %3373 = vmatpush1.bf16.msra.mxu0 0
        %3374 = vmatprep.subr.bf16.mxu0 0
        %3375 = vmatpush1.bf16.msra.mxu0 0
        %3376 = vmatprep.subr.bf16.mxu0 0
        %3377 = vmatpush1.bf16.msra.mxu0 0
        %3378 = vmatprep.subr.bf16.mxu0 0
        %3379 = vmatpush1.bf16.msra.mxu0 0
        %3380 = vmatprep.subr.bf16.mxu0 0
        %3381 = vmatpush1.bf16.msra.mxu0 %v3364
        %3382 = vmatprep.subr.bf16.mxu0 0
        %3383 = vmatpush2.bf16.msra.mxu0 0
        %3384 = vmatprep.subr.bf16.mxu0 0
        %3385 = vmatpush2.bf16.msra.mxu0 0
        %3386 = vmatprep.subr.bf16.mxu0 0
        %3387 = vmatpush2.bf16.msra.mxu0 0
        %3388 = vmatprep.subr.bf16.mxu0 0
        %3389 = vmatpush2.bf16.msra.mxu0 0
        %3390 = vmatprep.subr.bf16.mxu0 0
        %3391 = vmatpush2.bf16.msra.mxu0 0
        %3392 = vmatprep.subr.bf16.mxu0 0
        %3393 = vmatpush2.bf16.msra.mxu0 0
        %3394 = vmatprep.subr.bf16.mxu0 0
        %3395 = vmatpush2.bf16.msra.mxu0 0
        %3396 = vmatprep.subr.bf16.mxu0 0
        %3397 = vmatpush2.bf16.msra.mxu0 0
        %3398 = vmatprep.mubr.bf16.mxu0 0
        %3399 = vmatmul.mubr.bf16.gmra.mxu0 %v3361
        %v3400 = vpop.f32.mrf.mxu0
        %v3401 = vadd.f32 0.0, %v3400
        %v3402 = vpop.f32.mrf.mxu0
        %v3403 = vpop.f32.mrf.mxu0
        %v3404 = vpop.f32.mrf.mxu0
        %3405 = vdwg.mxu0
        %v3406 = vadd.f32 %v3352, %v3401
        %3407 = vrot.lane.b32.xlu0 %v2980, 119
        %v3408 = vpop.permute.xlu0 %3407
        %v3410 = vsel %vm1926, %v3408, 0.0
        %v3411 = vsel %vm1933, %v3410, 0.0
        %v3412 = vpack.c.bf16 %v3411, %v3411
        %v3413 = vld [vmem:[%s2 + $0x68] sm:$0xf]
        %v3415 = vsel %vm307, %v3413, 0
        %v3418 = vsel %vm2025, %v3412, 0
        %3420 = vmatprep.subr.bf16.mxu0 0
        %3421 = vmatpush1.bf16.msra.mxu0 0
        %3422 = vmatprep.subr.bf16.mxu0 0
        %3423 = vmatpush1.bf16.msra.mxu0 0
        %3424 = vmatprep.subr.bf16.mxu0 0
        %3425 = vmatpush1.bf16.msra.mxu0 0
        %3426 = vmatprep.subr.bf16.mxu0 0
        %3427 = vmatpush1.bf16.msra.mxu0 0
        %3428 = vmatprep.subr.bf16.mxu0 0
        %3429 = vmatpush1.bf16.msra.mxu0 0
        %3430 = vmatprep.subr.bf16.mxu0 0
        %3431 = vmatpush1.bf16.msra.mxu0 0
        %3432 = vmatprep.subr.bf16.mxu0 0
        %3433 = vmatpush1.bf16.msra.mxu0 0
        %3434 = vmatprep.subr.bf16.mxu0 0
        %3435 = vmatpush1.bf16.msra.mxu0 %v3418
        %3436 = vmatprep.subr.bf16.mxu0 0
        %3437 = vmatpush2.bf16.msra.mxu0 0
        %3438 = vmatprep.subr.bf16.mxu0 0
        %3439 = vmatpush2.bf16.msra.mxu0 0
        %3440 = vmatprep.subr.bf16.mxu0 0
        %3441 = vmatpush2.bf16.msra.mxu0 0
        %3442 = vmatprep.subr.bf16.mxu0 0
        %3443 = vmatpush2.bf16.msra.mxu0 0
        %3444 = vmatprep.subr.bf16.mxu0 0
        %3445 = vmatpush2.bf16.msra.mxu0 0
        %3446 = vmatprep.subr.bf16.mxu0 0
        %3447 = vmatpush2.bf16.msra.mxu0 0
        %3448 = vmatprep.subr.bf16.mxu0 0
        %3449 = vmatpush2.bf16.msra.mxu0 0
        %3450 = vmatprep.subr.bf16.mxu0 0
        %3451 = vmatpush2.bf16.msra.mxu0 0
        %3452 = vmatprep.mubr.bf16.mxu0 0
        %3453 = vmatmul.mubr.bf16.gmra.mxu0 %v3415
        %v3454 = vpop.f32.mrf.mxu0
        %v3455 = vadd.f32 0.0, %v3454
        %v3456 = vpop.f32.mrf.mxu0
        %v3457 = vpop.f32.mrf.mxu0
        %v3458 = vpop.f32.mrf.mxu0
        %3459 = vdwg.mxu0
        %v3460 = vadd.f32 %v3406, %v3455
        %3461 = vset.pattern.permute.xlu0 3
        %3462 = vperm.xlu0 %3461, %v283
        %v3463 = vpop.permute.xlu0 %3462
        %v3465 = vadd.f32 %v3460, %v3463
        %v3466 = vmax.f32 %v3465, 0.0
        %3468 = vrot.lane.b32.xlu0 %v3466, 9
        %v3469 = vpop.permute.xlu0 %3468
        %v3471 = vsel %vm292, 0.0, %v3469
        %v3472 = vsel %vm299, %v3471, 0.0
        %v3473 = vpack.c.bf16 %v3472, %v3472
        %v3474 = vld [vmem:[%s2 + $0x6c] sm:$0xf]
        %3475 = vrot.lane.b32.xlu0 %v3466, 8
        %v3476 = vpop.permute.xlu0 %3475
        %v3478 = vsel %vm307, 0.0, %v3476
        %v3479 = vsel %vm313, %v3478, 0.0
        %v3480 = vpack.c.bf16 %v3479, %v3479
        %v3481 = vld [vmem:[%s2 + $0x70] sm:$0xf]
        %v3483 = vsel %vm307, %v3481, 0
        %v3486 = vsel %vm2025, %v3480, 0
        %3488 = vmatprep.subr.bf16.mxu0 0
        %3489 = vmatpush1.bf16.msra.mxu0 0
        %3490 = vmatprep.subr.bf16.mxu0 0
        %3491 = vmatpush1.bf16.msra.mxu0 0
        %3492 = vmatprep.subr.bf16.mxu0 0
        %3493 = vmatpush1.bf16.msra.mxu0 0
        %3494 = vmatprep.subr.bf16.mxu0 0
        %3495 = vmatpush1.bf16.msra.mxu0 0
        %3496 = vmatprep.subr.bf16.mxu0 0
        %3497 = vmatpush1.bf16.msra.mxu0 0
        %3498 = vmatprep.subr.bf16.mxu0 0
        %3499 = vmatpush1.bf16.msra.mxu0 0
        %3500 = vmatprep.subr.bf16.mxu0 0
        %3501 = vmatpush1.bf16.msra.mxu0 0
        %3502 = vmatprep.subr.bf16.mxu0 0
        %3503 = vmatpush1.bf16.msra.mxu0 %v3486
        %3504 = vmatprep.subr.bf16.mxu0 0
        %3505 = vmatpush2.bf16.msra.mxu0 0
        %3506 = vmatprep.subr.bf16.mxu0 0
        %3507 = vmatpush2.bf16.msra.mxu0 0
        %3508 = vmatprep.subr.bf16.mxu0 0
        %3509 = vmatpush2.bf16.msra.mxu0 0
        %3510 = vmatprep.subr.bf16.mxu0 0
        %3511 = vmatpush2.bf16.msra.mxu0 0
        %3512 = vmatprep.subr.bf16.mxu0 0
        %3513 = vmatpush2.bf16.msra.mxu0 0
        %3514 = vmatprep.subr.bf16.mxu0 0
        %3515 = vmatpush2.bf16.msra.mxu0 0
        %3516 = vmatprep.subr.bf16.mxu0 0
        %3517 = vmatpush2.bf16.msra.mxu0 0
        %3518 = vmatprep.subr.bf16.mxu0 0
        %3519 = vmatpush2.bf16.msra.mxu0 0
        %3520 = vmatprep.mubr.bf16.mxu0 0
        %3521 = vmatmul.mubr.bf16.gmra.mxu0 %v3483
        %v3522 = vpop.f32.mrf.mxu0
        %v3523 = vadd.f32 0.0, %v3522
        %v3524 = vpop.f32.mrf.mxu0
        %v3525 = vpop.f32.mrf.mxu0
        %v3526 = vpop.f32.mrf.mxu0
        %3527 = vdwg.mxu0
        %v3529 = vsel %vm307, %v3474, 0
        %v3532 = vsel %vm2025, %v3473, 0
        %3534 = vmatprep.subr.bf16.mxu0 0
        %3535 = vmatpush1.bf16.msra.mxu0 0
        %3536 = vmatprep.subr.bf16.mxu0 0
        %3537 = vmatpush1.bf16.msra.mxu0 0
        %3538 = vmatprep.subr.bf16.mxu0 0
        %3539 = vmatpush1.bf16.msra.mxu0 0
        %3540 = vmatprep.subr.bf16.mxu0 0
        %3541 = vmatpush1.bf16.msra.mxu0 0
        %3542 = vmatprep.subr.bf16.mxu0 0
        %3543 = vmatpush1.bf16.msra.mxu0 0
        %3544 = vmatprep.subr.bf16.mxu0 0
        %3545 = vmatpush1.bf16.msra.mxu0 0
        %3546 = vmatprep.subr.bf16.mxu0 0
        %3547 = vmatpush1.bf16.msra.mxu0 0
        %3548 = vmatprep.subr.bf16.mxu0 0
        %3549 = vmatpush1.bf16.msra.mxu0 %v3532
        %3550 = vmatprep.subr.bf16.mxu0 0
        %3551 = vmatpush2.bf16.msra.mxu0 0
        %3552 = vmatprep.subr.bf16.mxu0 0
        %3553 = vmatpush2.bf16.msra.mxu0 0
        %3554 = vmatprep.subr.bf16.mxu0 0
        %3555 = vmatpush2.bf16.msra.mxu0 0
        %3556 = vmatprep.subr.bf16.mxu0 0
        %3557 = vmatpush2.bf16.msra.mxu0 0
        %3558 = vmatprep.subr.bf16.mxu0 0
        %3559 = vmatpush2.bf16.msra.mxu0 0
        %3560 = vmatprep.subr.bf16.mxu0 0
        %3561 = vmatpush2.bf16.msra.mxu0 0
        %3562 = vmatprep.subr.bf16.mxu0 0
        %3563 = vmatpush2.bf16.msra.mxu0 0
        %3564 = vmatprep.subr.bf16.mxu0 0
        %3565 = vmatpush2.bf16.msra.mxu0 0
        %3566 = vmatprep.mubr.bf16.mxu0 0
        %3567 = vmatmul.mubr.bf16.gmra.mxu0 %v3529
        %v3568 = vpop.f32.mrf.mxu0
        %v3569 = vadd.f32 %v3523, %v3568
        %v3570 = vpop.f32.mrf.mxu0
        %v3571 = vpop.f32.mrf.mxu0
        %v3572 = vpop.f32.mrf.mxu0
        %3573 = vdwg.mxu0
        %3574 = vrot.lane.b32.xlu0 %v3466, 7
        %v3575 = vpop.permute.xlu0 %3574
        %v3577 = vsel %vm865, 0.0, %v3575
        %v3578 = vsel %vm871, %v3577, 0.0
        %v3579 = vpack.c.bf16 %v3578, %v3578
        %v3580 = vld [vmem:[%s2 + $0x74] sm:$0xf]
        %v3582 = vsel %vm307, %v3580, 0
        %v3585 = vsel %vm2025, %v3579, 0
        %3587 = vmatprep.subr.bf16.mxu0 0
        %3588 = vmatpush1.bf16.msra.mxu0 0
        %3589 = vmatprep.subr.bf16.mxu0 0
        %3590 = vmatpush1.bf16.msra.mxu0 0
        %3591 = vmatprep.subr.bf16.mxu0 0
        %3592 = vmatpush1.bf16.msra.mxu0 0
        %3593 = vmatprep.subr.bf16.mxu0 0
        %3594 = vmatpush1.bf16.msra.mxu0 0
        %3595 = vmatprep.subr.bf16.mxu0 0
        %3596 = vmatpush1.bf16.msra.mxu0 0
        %3597 = vmatprep.subr.bf16.mxu0 0
        %3598 = vmatpush1.bf16.msra.mxu0 0
        %3599 = vmatprep.subr.bf16.mxu0 0
        %3600 = vmatpush1.bf16.msra.mxu0 0
        %3601 = vmatprep.subr.bf16.mxu0 0
        %3602 = vmatpush1.bf16.msra.mxu0 %v3585
        %3603 = vmatprep.subr.bf16.mxu0 0
        %3604 = vmatpush2.bf16.msra.mxu0 0
        %3605 = vmatprep.subr.bf16.mxu0 0
        %3606 = vmatpush2.bf16.msra.mxu0 0
        %3607 = vmatprep.subr.bf16.mxu0 0
        %3608 = vmatpush2.bf16.msra.mxu0 0
        %3609 = vmatprep.subr.bf16.mxu0 0
        %3610 = vmatpush2.bf16.msra.mxu0 0
        %3611 = vmatprep.subr.bf16.mxu0 0
        %3612 = vmatpush2.bf16.msra.mxu0 0
        %3613 = vmatprep.subr.bf16.mxu0 0
        %3614 = vmatpush2.bf16.msra.mxu0 0
        %3615 = vmatprep.subr.bf16.mxu0 0
        %3616 = vmatpush2.bf16.msra.mxu0 0
        %3617 = vmatprep.subr.bf16.mxu0 0
        %3618 = vmatpush2.bf16.msra.mxu0 0
        %3619 = vmatprep.mubr.bf16.mxu0 0
        %3620 = vmatmul.mubr.bf16.gmra.mxu0 %v3582
        %v3621 = vpop.f32.mrf.mxu0
        %v3622 = vadd.f32 0.0, %v3621
        %v3623 = vpop.f32.mrf.mxu0
        %v3624 = vpop.f32.mrf.mxu0
        %v3625 = vpop.f32.mrf.mxu0
        %3626 = vdwg.mxu0
        %v3627 = vadd.f32 %v3569, %v3622
        %3628 = vrot.lane.b32.xlu0 %v3466, 1
        %v3629 = vpop.permute.xlu0 %3628
        %v3631 = vsel %vm469, 0.0, %v3629
        %v3632 = vsel %vm475, %v3631, 0.0
        %v3633 = vpack.c.bf16 %v3632, %v3632
        %v3634 = vld [vmem:[%s2 + $0x78] sm:$0xf]
        %v3636 = vsel %vm307, %v3634, 0
        %v3639 = vsel %vm2025, %v3633, 0
        %3641 = vmatprep.subr.bf16.mxu0 0
        %3642 = vmatpush1.bf16.msra.mxu0 0
        %3643 = vmatprep.subr.bf16.mxu0 0
        %3644 = vmatpush1.bf16.msra.mxu0 0
        %3645 = vmatprep.subr.bf16.mxu0 0
        %3646 = vmatpush1.bf16.msra.mxu0 0
        %3647 = vmatprep.subr.bf16.mxu0 0
        %3648 = vmatpush1.bf16.msra.mxu0 0
        %3649 = vmatprep.subr.bf16.mxu0 0
        %3650 = vmatpush1.bf16.msra.mxu0 0
        %3651 = vmatprep.subr.bf16.mxu0 0
        %3652 = vmatpush1.bf16.msra.mxu0 0
        %3653 = vmatprep.subr.bf16.mxu0 0
        %3654 = vmatpush1.bf16.msra.mxu0 0
        %3655 = vmatprep.subr.bf16.mxu0 0
        %3656 = vmatpush1.bf16.msra.mxu0 %v3639
        %3657 = vmatprep.subr.bf16.mxu0 0
        %3658 = vmatpush2.bf16.msra.mxu0 0
        %3659 = vmatprep.subr.bf16.mxu0 0
        %3660 = vmatpush2.bf16.msra.mxu0 0
        %3661 = vmatprep.subr.bf16.mxu0 0
        %3662 = vmatpush2.bf16.msra.mxu0 0
        %3663 = vmatprep.subr.bf16.mxu0 0
        %3664 = vmatpush2.bf16.msra.mxu0 0
        %3665 = vmatprep.subr.bf16.mxu0 0
        %3666 = vmatpush2.bf16.msra.mxu0 0
        %3667 = vmatprep.subr.bf16.mxu0 0
        %3668 = vmatpush2.bf16.msra.mxu0 0
        %3669 = vmatprep.subr.bf16.mxu0 0
        %3670 = vmatpush2.bf16.msra.mxu0 0
        %3671 = vmatprep.subr.bf16.mxu0 0
        %3672 = vmatpush2.bf16.msra.mxu0 0
        %3673 = vmatprep.mubr.bf16.mxu0 0
        %3674 = vmatmul.mubr.bf16.gmra.mxu0 %v3636
        %v3675 = vpop.f32.mrf.mxu0
        %v3676 = vadd.f32 0.0, %v3675
        %v3677 = vpop.f32.mrf.mxu0
        %v3678 = vpop.f32.mrf.mxu0
        %v3679 = vpop.f32.mrf.mxu0
        %3680 = vdwg.mxu0
        %v3681 = vadd.f32 %v3627, %v3676
        %v3682 = vpack.c.bf16 %v3466, %v3466
        %v3683 = vld [vmem:[%s2 + $0x7c] sm:$0xf]
        %v3685 = vsel %vm307, %v3683, 0
        %v3688 = vsel %vm2025, %v3682, 0
        %3690 = vmatprep.subr.bf16.mxu0 0
        %3691 = vmatpush1.bf16.msra.mxu0 0
        %3692 = vmatprep.subr.bf16.mxu0 0
        %3693 = vmatpush1.bf16.msra.mxu0 0
        %3694 = vmatprep.subr.bf16.mxu0 0
        %3695 = vmatpush1.bf16.msra.mxu0 0
        %3696 = vmatprep.subr.bf16.mxu0 0
        %3697 = vmatpush1.bf16.msra.mxu0 0
        %3698 = vmatprep.subr.bf16.mxu0 0
        %3699 = vmatpush1.bf16.msra.mxu0 0
        %3700 = vmatprep.subr.bf16.mxu0 0
        %3701 = vmatpush1.bf16.msra.mxu0 0
        %3702 = vmatprep.subr.bf16.mxu0 0
        %3703 = vmatpush1.bf16.msra.mxu0 0
        %3704 = vmatprep.subr.bf16.mxu0 0
        %3705 = vmatpush1.bf16.msra.mxu0 %v3688
        %3706 = vmatprep.subr.bf16.mxu0 0
        %3707 = vmatpush2.bf16.msra.mxu0 0
        %3708 = vmatprep.subr.bf16.mxu0 0
        %3709 = vmatpush2.bf16.msra.mxu0 0
        %3710 = vmatprep.subr.bf16.mxu0 0
        %3711 = vmatpush2.bf16.msra.mxu0 0
        %3712 = vmatprep.subr.bf16.mxu0 0
        %3713 = vmatpush2.bf16.msra.mxu0 0
        %3714 = vmatprep.subr.bf16.mxu0 0
        %3715 = vmatpush2.bf16.msra.mxu0 0
        %3716 = vmatprep.subr.bf16.mxu0 0
        %3717 = vmatpush2.bf16.msra.mxu0 0
        %3718 = vmatprep.subr.bf16.mxu0 0
        %3719 = vmatpush2.bf16.msra.mxu0 0
        %3720 = vmatprep.subr.bf16.mxu0 0
        %3721 = vmatpush2.bf16.msra.mxu0 0
        %3722 = vmatprep.mubr.bf16.mxu0 0
        %3723 = vmatmul.mubr.bf16.gmra.mxu0 %v3685
        %v3724 = vpop.f32.mrf.mxu0
        %v3725 = vadd.f32 0.0, %v3724
        %v3726 = vpop.f32.mrf.mxu0
        %v3727 = vpop.f32.mrf.mxu0
        %v3728 = vpop.f32.mrf.mxu0
        %3729 = vdwg.mxu0
        %v3730 = vadd.f32 %v3681, %v3725
        %3731 = vrot.lane.b32.xlu0 %v3466, 127
        %v3732 = vpop.permute.xlu0 %3731
        %v3734 = vsel %vm1004, %v3732, 0.0
        %v3735 = vsel %vm1010, %v3734, 0.0
        %v3736 = vpack.c.bf16 %v3735, %v3735
        %v3737 = vld [vmem:[%s2 + $0x80] sm:$0xf]
        %v3739 = vsel %vm307, %v3737, 0
        %v3742 = vsel %vm2025, %v3736, 0
        %3744 = vmatprep.subr.bf16.mxu0 0
        %3745 = vmatpush1.bf16.msra.mxu0 0
        %3746 = vmatprep.subr.bf16.mxu0 0
        %3747 = vmatpush1.bf16.msra.mxu0 0
        %3748 = vmatprep.subr.bf16.mxu0 0
        %3749 = vmatpush1.bf16.msra.mxu0 0
        %3750 = vmatprep.subr.bf16.mxu0 0
        %3751 = vmatpush1.bf16.msra.mxu0 0
        %3752 = vmatprep.subr.bf16.mxu0 0
        %3753 = vmatpush1.bf16.msra.mxu0 0
        %3754 = vmatprep.subr.bf16.mxu0 0
        %3755 = vmatpush1.bf16.msra.mxu0 0
        %3756 = vmatprep.subr.bf16.mxu0 0
        %3757 = vmatpush1.bf16.msra.mxu0 0
        %3758 = vmatprep.subr.bf16.mxu0 0
        %3759 = vmatpush1.bf16.msra.mxu0 %v3742
        %3760 = vmatprep.subr.bf16.mxu0 0
        %3761 = vmatpush2.bf16.msra.mxu0 0
        %3762 = vmatprep.subr.bf16.mxu0 0
        %3763 = vmatpush2.bf16.msra.mxu0 0
        %3764 = vmatprep.subr.bf16.mxu0 0
        %3765 = vmatpush2.bf16.msra.mxu0 0
        %3766 = vmatprep.subr.bf16.mxu0 0
        %3767 = vmatpush2.bf16.msra.mxu0 0
        %3768 = vmatprep.subr.bf16.mxu0 0
        %3769 = vmatpush2.bf16.msra.mxu0 0
        %3770 = vmatprep.subr.bf16.mxu0 0
        %3771 = vmatpush2.bf16.msra.mxu0 0
        %3772 = vmatprep.subr.bf16.mxu0 0
        %3773 = vmatpush2.bf16.msra.mxu0 0
        %3774 = vmatprep.subr.bf16.mxu0 0
        %3775 = vmatpush2.bf16.msra.mxu0 0
        %3776 = vmatprep.mubr.bf16.mxu0 0
        %3777 = vmatmul.mubr.bf16.gmra.mxu0 %v3739
        %v3778 = vpop.f32.mrf.mxu0
        %v3779 = vadd.f32 0.0, %v3778
        %v3780 = vpop.f32.mrf.mxu0
        %v3781 = vpop.f32.mrf.mxu0
        %v3782 = vpop.f32.mrf.mxu0
        %3783 = vdwg.mxu0
        %v3784 = vadd.f32 %v3730, %v3779
        %3785 = vrot.lane.b32.xlu0 %v3466, 121
        %v3786 = vpop.permute.xlu0 %3785
        %v3788 = vsel %vm1437, %v3786, 0.0
        %v3789 = vsel %vm1443, %v3788, 0.0
        %v3790 = vpack.c.bf16 %v3789, %v3789
        %v3791 = vld [vmem:[%s2 + $0x84] sm:$0xf]
        %v3793 = vsel %vm307, %v3791, 0
        %v3796 = vsel %vm2025, %v3790, 0
        %3798 = vmatprep.subr.bf16.mxu0 0
        %3799 = vmatpush1.bf16.msra.mxu0 0
        %3800 = vmatprep.subr.bf16.mxu0 0
        %3801 = vmatpush1.bf16.msra.mxu0 0
        %3802 = vmatprep.subr.bf16.mxu0 0
        %3803 = vmatpush1.bf16.msra.mxu0 0
        %3804 = vmatprep.subr.bf16.mxu0 0
        %3805 = vmatpush1.bf16.msra.mxu0 0
        %3806 = vmatprep.subr.bf16.mxu0 0
        %3807 = vmatpush1.bf16.msra.mxu0 0
        %3808 = vmatprep.subr.bf16.mxu0 0
        %3809 = vmatpush1.bf16.msra.mxu0 0
        %3810 = vmatprep.subr.bf16.mxu0 0
        %3811 = vmatpush1.bf16.msra.mxu0 0
        %3812 = vmatprep.subr.bf16.mxu0 0
        %3813 = vmatpush1.bf16.msra.mxu0 %v3796
        %3814 = vmatprep.subr.bf16.mxu0 0
        %3815 = vmatpush2.bf16.msra.mxu0 0
        %3816 = vmatprep.subr.bf16.mxu0 0
        %3817 = vmatpush2.bf16.msra.mxu0 0
        %3818 = vmatprep.subr.bf16.mxu0 0
        %3819 = vmatpush2.bf16.msra.mxu0 0
        %3820 = vmatprep.subr.bf16.mxu0 0
        %3821 = vmatpush2.bf16.msra.mxu0 0
        %3822 = vmatprep.subr.bf16.mxu0 0
        %3823 = vmatpush2.bf16.msra.mxu0 0
        %3824 = vmatprep.subr.bf16.mxu0 0
        %3825 = vmatpush2.bf16.msra.mxu0 0
        %3826 = vmatprep.subr.bf16.mxu0 0
        %3827 = vmatpush2.bf16.msra.mxu0 0
        %3828 = vmatprep.subr.bf16.mxu0 0
        %3829 = vmatpush2.bf16.msra.mxu0 0
        %3830 = vmatprep.mubr.bf16.mxu0 0
        %3831 = vmatmul.mubr.bf16.gmra.mxu0 %v3793
        %v3832 = vpop.f32.mrf.mxu0
        %v3833 = vadd.f32 0.0, %v3832
        %v3834 = vpop.f32.mrf.mxu0
        %v3835 = vpop.f32.mrf.mxu0
        %v3836 = vpop.f32.mrf.mxu0
        %3837 = vdwg.mxu0
        %v3838 = vadd.f32 %v3784, %v3833
        %3839 = vrot.lane.b32.xlu0 %v3466, 120
        %v3840 = vpop.permute.xlu0 %3839
        %v3842 = vsel %vm1493, %v3840, 0.0
        %v3843 = vsel %vm1499, %v3842, 0.0
        %v3844 = vpack.c.bf16 %v3843, %v3843
        %v3845 = vld [vmem:[%s2 + $0x88] sm:$0xf]
        %v3847 = vsel %vm307, %v3845, 0
        %v3850 = vsel %vm2025, %v3844, 0
        %3852 = vmatprep.subr.bf16.mxu0 0
        %3853 = vmatpush1.bf16.msra.mxu0 0
        %3854 = vmatprep.subr.bf16.mxu0 0
        %3855 = vmatpush1.bf16.msra.mxu0 0
        %3856 = vmatprep.subr.bf16.mxu0 0
        %3857 = vmatpush1.bf16.msra.mxu0 0
        %3858 = vmatprep.subr.bf16.mxu0 0
        %3859 = vmatpush1.bf16.msra.mxu0 0
        %3860 = vmatprep.subr.bf16.mxu0 0
        %3861 = vmatpush1.bf16.msra.mxu0 0
        %3862 = vmatprep.subr.bf16.mxu0 0
        %3863 = vmatpush1.bf16.msra.mxu0 0
        %3864 = vmatprep.subr.bf16.mxu0 0
        %3865 = vmatpush1.bf16.msra.mxu0 0
        %3866 = vmatprep.subr.bf16.mxu0 0
        %3867 = vmatpush1.bf16.msra.mxu0 %v3850
        %3868 = vmatprep.subr.bf16.mxu0 0
        %3869 = vmatpush2.bf16.msra.mxu0 0
        %3870 = vmatprep.subr.bf16.mxu0 0
        %3871 = vmatpush2.bf16.msra.mxu0 0
        %3872 = vmatprep.subr.bf16.mxu0 0
        %3873 = vmatpush2.bf16.msra.mxu0 0
        %3874 = vmatprep.subr.bf16.mxu0 0
        %3875 = vmatpush2.bf16.msra.mxu0 0
        %3876 = vmatprep.subr.bf16.mxu0 0
        %3877 = vmatpush2.bf16.msra.mxu0 0
        %3878 = vmatprep.subr.bf16.mxu0 0
        %3879 = vmatpush2.bf16.msra.mxu0 0
        %3880 = vmatprep.subr.bf16.mxu0 0
        %3881 = vmatpush2.bf16.msra.mxu0 0
        %3882 = vmatprep.subr.bf16.mxu0 0
        %3883 = vmatpush2.bf16.msra.mxu0 0
        %3884 = vmatprep.mubr.bf16.mxu0 0
        %3885 = vmatmul.mubr.bf16.gmra.mxu0 %v3847
        %v3886 = vpop.f32.mrf.mxu0
        %v3887 = vadd.f32 0.0, %v3886
        %v3888 = vpop.f32.mrf.mxu0
        %v3889 = vpop.f32.mrf.mxu0
        %v3890 = vpop.f32.mrf.mxu0
        %3891 = vdwg.mxu0
        %v3892 = vadd.f32 %v3838, %v3887
        %3893 = vrot.lane.b32.xlu0 %v3466, 119
        %v3894 = vpop.permute.xlu0 %3893
        %v3896 = vsel %vm1926, %v3894, 0.0
        %v3897 = vsel %vm1933, %v3896, 0.0
        %v3898 = vpack.c.bf16 %v3897, %v3897
        %v3899 = vld [vmem:[%s2 + $0x8c] sm:$0xf]
        %v3901 = vsel %vm307, %v3899, 0
        %v3904 = vsel %vm2025, %v3898, 0
        %3906 = vmatprep.subr.bf16.mxu0 0
        %3907 = vmatpush1.bf16.msra.mxu0 0
        %3908 = vmatprep.subr.bf16.mxu0 0
        %3909 = vmatpush1.bf16.msra.mxu0 0
        %3910 = vmatprep.subr.bf16.mxu0 0
        %3911 = vmatpush1.bf16.msra.mxu0 0
        %3912 = vmatprep.subr.bf16.mxu0 0
        %3913 = vmatpush1.bf16.msra.mxu0 0
        %3914 = vmatprep.subr.bf16.mxu0 0
        %3915 = vmatpush1.bf16.msra.mxu0 0
        %3916 = vmatprep.subr.bf16.mxu0 0
        %3917 = vmatpush1.bf16.msra.mxu0 0
        %3918 = vmatprep.subr.bf16.mxu0 0
        %3919 = vmatpush1.bf16.msra.mxu0 0
        %3920 = vmatprep.subr.bf16.mxu0 0
        %3921 = vmatpush1.bf16.msra.mxu0 %v3904
        %3922 = vmatprep.subr.bf16.mxu0 0
        %3923 = vmatpush2.bf16.msra.mxu0 0
        %3924 = vmatprep.subr.bf16.mxu0 0
        %3925 = vmatpush2.bf16.msra.mxu0 0
        %3926 = vmatprep.subr.bf16.mxu0 0
        %3927 = vmatpush2.bf16.msra.mxu0 0
        %3928 = vmatprep.subr.bf16.mxu0 0
        %3929 = vmatpush2.bf16.msra.mxu0 0
        %3930 = vmatprep.subr.bf16.mxu0 0
        %3931 = vmatpush2.bf16.msra.mxu0 0
        %3932 = vmatprep.subr.bf16.mxu0 0
        %3933 = vmatpush2.bf16.msra.mxu0 0
        %3934 = vmatprep.subr.bf16.mxu0 0
        %3935 = vmatpush2.bf16.msra.mxu0 0
        %3936 = vmatprep.subr.bf16.mxu0 0
        %3937 = vmatpush2.bf16.msra.mxu0 0
        %3938 = vmatprep.mubr.bf16.mxu0 0
        %3939 = vmatmul.mubr.bf16.gmra.mxu0 %v3901
        %v3940 = vpop.f32.mrf.mxu0
        %v3941 = vadd.f32 0.0, %v3940
        %v3942 = vpop.f32.mrf.mxu0
        %v3943 = vpop.f32.mrf.mxu0
        %v3944 = vpop.f32.mrf.mxu0
        %3945 = vdwg.mxu0
        %v3946 = vadd.f32 %v3892, %v3941
        %3947 = vset.pattern.permute.xlu0 4
        %3948 = vperm.xlu0 %3947, %v283
        %v3949 = vpop.permute.xlu0 %3948
        %v3951 = vadd.f32 %v3946, %v3949
        %v3952 = vadd.f32 %v2979, %v3951
        %3953 = vst [vmem:[%s277] sm:$0xff] %v3952
        %p3954 = scmp.lt.s32.totalorder %s16, 1
        %s3955 = scalar_select %p3954, %s16, 1
        %s3956 = smul.addr %s3955, 8
        %s3957 = scalar_lea.vmem %s5, %s3956
        // Predicated region
        $region82: #{impala_cnn_block.1} parent=76 // pred_check
          %p3958 = pneg %p144
        $region83: #{impala_cnn_block.1} parent=76 // pred_check_branch
          %3960 = sbr.rel (%p3958) target = $region85
        $region84: #{impala_cnn_block.1} parent=76 // pred_region
          _
        $region85: #{impala_cnn_block.1} parent=76 // pred_fallthru
          _
      $region77: #{impala_cnn_block.1} parent=5 // pred_fallthru
        _
      %p3961 = scmp.le.s32.totalorder 2, %s11
      // Predicated region
      $region86: #{impala_cnn_block.1} parent=5 // pred_check
        %p3962 = pneg %p3961
      $region87: #{impala_cnn_block.1} parent=5 // pred_check_branch
        %3964 = sbr.rel (%p3962) target = $region89
      $region88: #{impala_cnn_block.1} parent=5 // pred_region
        %s3965 = ssub.s32 %s11, 2
        // Predicated region
        $region90: #{impala_cnn_block.1} parent=88 // pred_check
          %p3966 = pneg %p150
        $region91: #{impala_cnn_block.1} parent=88 // pred_check_branch
          %3968 = sbr.rel (%p3966) target = $region93
        $region92: #{impala_cnn_block.1} parent=88 // pred_region
          %p3969 = scmp.lt.s32.totalorder %s17, 1
          %s3970 = scalar_select %p3969, %s17, 1
          %s3971 = smul.addr %s3970, 8
          %s3972 = scalar_lea.vmem %s5, %s3971
        $region93: #{impala_cnn_block.1} parent=88 // pred_fallthru
          _
      $region89: #{impala_cnn_block.1} parent=5 // pred_fallthru
        _
    $region6: #{impala_cnn_block.1} parent=1 // loop_footer
      %s15 = sadd.s32 1, %s11
    $region7: #{impala_cnn_block.1} parent=1 // loop_footer_branch
      %10 = sbr.rel target = $region3
    $region8: #{impala_cnn_block.1} parent=1 // loop_exit
      _

</llo_original>
